<compile_context>
chip_gen: v7x
topology: tpu7x:2x2x1
jax: 0.10.0
libtpu: 0.0.40
codegen_flags: <defaults>
</compile_context>

<pallas_src>
import jax
import jax.numpy as jnp
from jax.experimental import pallas as pl
from jax.experimental.pallas import tpu as pltpu  # noqa: F401  (TPU backend)

LANES = 128      # conv output channels padded to one full lane width
CONV1_OC = 6
CONV2_OC = 16


# ----------------------------------------------------------------------------
# Pallas kernels
# ----------------------------------------------------------------------------
def _conv_relu_pool_kernel(cols_ref, w_ref, b_ref, o_ref):
    """o = maxpool2x2(relu(im2col-GEMM + bias)) for one conv layer.

    cols_ref: (4, M, K) - four pool-window-corner im2col matrices.
    w_ref:    (K, N)    - conv weight matrix, output channels padded to N=128.
    b_ref:    (1, N)    - bias, padded to N=128.
    o_ref:    (M, N)    - pooled activations, rows ordered (b, h, w), lane-dense.
    """
    w = w_ref[...]
    b = b_ref[...]
    out = None
    for q in range(4):  # static unroll over the 4 pool-window corners
        acc = jnp.dot(cols_ref[q], w, preferred_element_type=jnp.float32) + b
        acc = jnp.maximum(acc, 0.0)                       # ReLU
        out = acc if out is None else jnp.maximum(out, acc)   # 2x2 max-pool
    o_ref[...] = out.astype(o_ref.dtype)


def _fc_chain_kernel(x_ref, w1_ref, b1_ref, w2_ref, b2_ref,
                     w3_ref, b3_ref, w4_ref, b4_ref, o_ref):
    """Fused fc1(relu) -> fc2(relu) -> fc3(relu) -> fc4 in one kernel body."""
    def lin(h, w_r, b_r, relu):
        y = jnp.dot(h, w_r[...], preferred_element_type=jnp.float32) + b_r[...]
        return jnp.maximum(y, 0.0) if relu else y

    h = lin(x_ref[...], w1_ref, b1_ref, True)
    h = lin(h, w2_ref, b2_ref, True)
    h = lin(h, w3_ref, b3_ref, True)
    o_ref[...] = lin(h, w4_ref, b4_ref, False).astype(o_ref.dtype)


# ----------------------------------------------------------------------------
# Pallas wrappers (single-block grid; all operands fit VMEM comfortably)
# ----------------------------------------------------------------------------
def conv_relu_pool(cols, wmat, bias):
    """cols: (4, M, K) f32, wmat: (K, N) f32, bias: (1, N) f32 -> (M, N) f32."""
    Q, M, K = cols.shape
    Kw, N = wmat.shape
    assert Q == 4 and K == Kw and bias.shape == (1, N)
    return pl.pallas_call(
        _conv_relu_pool_kernel,
        out_shape=jax.ShapeDtypeStruct((M, N), jnp.float32),
        grid=(1,),
        in_specs=[
            pl.BlockSpec((Q, M, K), lambda i: (0, 0, 0)),
            pl.BlockSpec((K, N), lambda i: (0, 0)),
            pl.BlockSpec((1, N), lambda i: (0, 0)),
        ],
        out_specs=pl.BlockSpec((M, N), lambda i: (0, 0)),
    )(cols, wmat, bias)


def fc_chain(x, w1, b1, w2, b2, w3, b3, w4, b4):
    """x: (B, 144) -> logits (B, 10). All four linears in one pallas_call."""
    B = x.shape[0]
    n_out = w4.shape[1]
    args = (x, w1, b1, w2, b2, w3, b3, w4, b4)
    return pl.pallas_call(
        _fc_chain_kernel,
        out_shape=jax.ShapeDtypeStruct((B, n_out), jnp.float32),
        grid=(1,),
        in_specs=[pl.BlockSpec(a.shape, lambda i: (0, 0)) for a in args],
        out_specs=pl.BlockSpec((B, n_out), lambda i: (0, 0)),
    )(*args)


# ----------------------------------------------------------------------------
# XLA glue: quadrant im2col (NHWC), matching the fused conv+pool kernel
# ----------------------------------------------------------------------------
def _im2col_quadrants(x, kh, kw):
    """x: (B, H, W, C) NHWC -> ((4, B*OHP*OWP, kh*kw*C), OHP, OWP).

    Column order is (ki, kj, c) and matches the prepared conv weight matrix.
    Quadrant q = 2*dh + dw holds the patches for conv output positions
    (2*i + dh, 2*j + dw); the max over the 4 quadrants equals MaxPool2d(2, 2)
    with floor semantics (a trailing odd conv row/col is simply never gathered).
    """
    B, H, W, C = x.shape
    OH, OW = H - kh + 1, W - kw + 1
    OHP, OWP = OH // 2, OW // 2
    taps = [x[:, ki:ki + OH, kj:kj + OW, :] for ki in range(kh) for kj in range(kw)]
    p = jnp.stack(taps, axis=3).reshape(B, OH, OW, kh * kw * C)  # (B,OH,OW,K)
    quads = [
        p[:, dh:2 * OHP:2, dw:2 * OWP:2, :].reshape(B * OHP * OWP, kh * kw * C)
        for dh in range(2) for dw in range(2)
    ]
    return jnp.stack(quads, axis=0), OHP, OWP


# ----------------------------------------------------------------------------
# Deterministic parameter init (PyTorch-style uniform(-1/sqrt(fan_in), +))
# ----------------------------------------------------------------------------
def init_params(key):
    def u(k, shape, fan_in):
        bound = 1.0 / float(fan_in) ** 0.5
        return jax.random.uniform(k, shape, jnp.float32, -bound, bound)

    ks = jax.random.split(key, 12)
    return {
        "conv1_w": u(ks[0], (CONV1_OC, 3, 7, 7), 3 * 7 * 7),
        "conv1_b": u(ks[1], (CONV1_OC,), 3 * 7 * 7),
        "conv2_w": u(ks[2], (CONV2_OC, CONV1_OC, 7, 7), CONV1_OC * 7 * 7),
        "conv2_b": u(ks[3], (CONV2_OC,), CONV1_OC * 7 * 7),
        "fc1_w": u(ks[4], (120, CONV2_OC * 3 * 3), CONV2_OC * 3 * 3),
        "fc1_b": u(ks[5], (120,), CONV2_OC * 3 * 3),
        "fc2_w": u(ks[6], (84, 120), 120),
        "fc2_b": u(ks[7], (84,), 120),
        "fc3_w": u(ks[8], (32, 84), 84),
        "fc3_b": u(ks[9], (32,), 84),
        "fc4_w": u(ks[10], (10, 32), 32),
        "fc4_b": u(ks[11], (10,), 32),
    }


def prepare_params(params):
    """One-time (outside jit) conversion to kernel-ready layouts.

    * Conv weights  (OC,IC,KH,KW) -> (KH*KW*IC, LANES) matmul matrices whose
      row order (ki, kj, c) matches _im2col_quadrants; OC zero-padded to 128.
    * fc1 weight columns are permuted from PyTorch's NCHW (c,h,w) flatten order
      to our NHWC (h,w,c) flatten order, so no activation transpose is needed.
    * fc weights stored pre-transposed as (in, out); biases as (1, out).
    """
    def conv_prep(w, b):
        oc, ic, kh, kw = w.shape
        wm = jnp.transpose(w, (2, 3, 1, 0)).reshape(kh * kw * ic, oc)
        wm = jnp.pad(wm, ((0, 0), (0, LANES - oc)))
        bv = jnp.pad(b, (0, LANES - oc)).reshape(1, LANES)
        return wm.astype(jnp.float32), bv.astype(jnp.float32)

    c1w, c1b = conv_prep(params["conv1_w"], params["conv1_b"])
    c2w, c2b = conv_prep(params["conv2_w"], params["conv2_b"])

    # fc1: columns indexed (c, h, w) in PyTorch -> reorder to (h, w, c).
    fc1_w = (params["fc1_w"].reshape(120, CONV2_OC, 3, 3)
             .transpose(2, 3, 1, 0).reshape(CONV2_OC * 3 * 3, 120))

    return {
        "conv1_w": c1w, "conv1_b": c1b,
        "conv2_w": c2w, "conv2_b": c2b,
        "fc1_w": fc1_w, "fc1_b": params["fc1_b"].reshape(1, -1),
        "fc2_w": params["fc2_w"].T, "fc2_b": params["fc2_b"].reshape(1, -1),
        "fc3_w": params["fc3_w"].T, "fc3_b": params["fc3_b"].reshape(1, -1),
        "fc4_w": params["fc4_w"].T, "fc4_b": params["fc4_b"].reshape(1, -1),
    }


# ----------------------------------------------------------------------------
# Forward pass (semantics identical to MyNet4.forward)
# ----------------------------------------------------------------------------
def mynet4_forward(p, x):
    """x: (B, 3, 32, 32) NCHW (PyTorch layout) -> logits (B, 10)."""
    B = x.shape[0]
    x = jnp.transpose(x, (0, 2, 3, 1))                      # NHWC, once

    # conv1 (7x7 valid) + ReLU + 2x2 max-pool, fused in one kernel.
    cols, ohp, owp = _im2col_quadrants(x, 7, 7)             # (4, B*13*13, 147)
    y = conv_relu_pool(cols, p["conv1_w"], p["conv1_b"])    # (B*13*13, 128)
    x = y.reshape(B, ohp, owp, LANES)[..., :CONV1_OC]       # (B, 13, 13, 6)

    # conv2 (7x7 valid) + ReLU + 2x2 max-pool, fused in one kernel.
    cols, ohp, owp = _im2col_quadrants(x, 7, 7)             # (4, B*3*3, 294)
    y = conv_relu_pool(cols, p["conv2_w"], p["conv2_b"])    # (B*3*3, 128)
    x = y.reshape(B, ohp, owp, LANES)[..., :CONV2_OC]       # (B, 3, 3, 16)
    x = x.reshape(B, CONV2_OC * 3 * 3)                      # (B, 144), (h,w,c) order

    # fc1..fc4 fused (fc1 weight columns were pre-permuted so the (h,w,c)
    # flatten above matches PyTorch's NCHW .view(-1, 144) exactly).
    return fc_chain(x, p["fc1_w"], p["fc1_b"], p["fc2_w"], p["fc2_b"],
                    p["fc3_w"], p["fc3_b"], p["fc4_w"], p["fc4_b"])


if __name__ == "__main__":
    key = jax.random.PRNGKey(0)
    pkey, xkey = jax.random.split(key)
    params = prepare_params(init_params(pkey))   # layout prep hoisted out of jit
    # Input spatial size must be 32x32 for the 16*3*3 flatten to hold.
    x = jax.random.normal(xkey, (2, 3, 32, 32), dtype=jnp.float32)

    out = jax.jit(mynet4_forward)(params, x)
    out = jax.block_until_ready(out)
    assert out.shape == (2, 10), out.shape
    print("KERNEL_OK")
</pallas_src>

<mosaic_0001>
module attributes {stable_mosaic.version = 11 : i64} {
  func.func @_conv_relu_pool_kernel(%arg0: i32, %arg1: memref<4x338x147xf32, #tpu.memory_space<vmem>>, %arg2: memref<147x128xf32, #tpu.memory_space<vmem>>, %arg3: memref<1x128xf32, #tpu.memory_space<vmem>>, %arg4: memref<338x128xf32, #tpu.memory_space<vmem>>) attributes {dimension_semantics = [#tpu.dimension_semantics<arbitrary>], iteration_bounds = array<i64: 1>, scalar_prefetch = 0 : i64, scratch_operands = 0 : i64, tpu.core_type = #tpu.core_type<tc>, window_params = [{pipeline_mode = #tpu.pipeline_mode<synchronous>, transform_indices = @transform_0, window_bounds = array<i64: 4, 338, 147>}, {pipeline_mode = #tpu.pipeline_mode<synchronous>, transform_indices = @transform_1, window_bounds = array<i64: 147, 128>}, {pipeline_mode = #tpu.pipeline_mode<synchronous>, transform_indices = @transform_2, window_bounds = array<i64: 1, 128>}, {pipeline_mode = #tpu.pipeline_mode<synchronous>, transform_indices = @transform_3, window_bounds = array<i64: 338, 128>}]} {
    %c0 = arith.constant 0 : index
    %c0_0 = arith.constant 0 : index
    %0 = vector.load %arg2[%c0, %c0_0] : memref<147x128xf32, #tpu.memory_space<vmem>>, vector<147x128xf32>
    %c0_1 = arith.constant 0 : index
    %c0_2 = arith.constant 0 : index
    %1 = vector.load %arg3[%c0_1, %c0_2] : memref<1x128xf32, #tpu.memory_space<vmem>>, vector<1x128xf32>
    %c0_3 = arith.constant 0 : index
    %c0_4 = arith.constant 0 : index
    %c0_5 = arith.constant 0 : index
    %2 = vector.load %arg1[%c0_3, %c0_4, %c0_5] : memref<4x338x147xf32, #tpu.memory_space<vmem>>, vector<1x338x147xf32>
    %3 = vector.shape_cast %2 : vector<1x338x147xf32> to vector<338x147xf32>
    %cst = arith.constant dense<0.000000e+00> : vector<338x128xf32>
    %4 = tpu.matmul %3, %0, %cst {dimension_numbers = #tpu.dot_dimension_numbers<[1], [0], [0], [1], [0, 0, 1, 1], [], []>} : vector<338x147xf32>, vector<147x128xf32>, vector<338x128xf32> -> vector<338x128xf32>
    %5 = vector.broadcast %1 : vector<1x128xf32> to vector<338x128xf32>
    %6 = arith.addf %4, %5 : vector<338x128xf32>
    %cst_6 = arith.constant 0.000000e+00 : f32
    %7 = vector.broadcast %cst_6 : f32 to vector<338x128xf32>
    %8 = arith.maximumf %6, %7 : vector<338x128xf32>
    %c1 = arith.constant 1 : index
    %c0_7 = arith.constant 0 : index
    %c0_8 = arith.constant 0 : index
    %9 = vector.load %arg1[%c1, %c0_7, %c0_8] : memref<4x338x147xf32, #tpu.memory_space<vmem>>, vector<1x338x147xf32>
    %10 = vector.shape_cast %9 : vector<1x338x147xf32> to vector<338x147xf32>
    %cst_9 = arith.constant dense<0.000000e+00> : vector<338x128xf32>
    %11 = tpu.matmul %10, %0, %cst_9 {dimension_numbers = #tpu.dot_dimension_numbers<[1], [0], [0], [1], [0, 0, 1, 1], [], []>} : vector<338x147xf32>, vector<147x128xf32>, vector<338x128xf32> -> vector<338x128xf32>
    %12 = vector.broadcast %1 : vector<1x128xf32> to vector<338x128xf32>
    %13 = arith.addf %11, %12 : vector<338x128xf32>
    %cst_10 = arith.constant 0.000000e+00 : f32
    %14 = vector.broadcast %cst_10 : f32 to vector<338x128xf32>
    %15 = arith.maximumf %13, %14 : vector<338x128xf32>
    %16 = arith.maximumf %8, %15 : vector<338x128xf32>
    %c2 = arith.constant 2 : index
    %c0_11 = arith.constant 0 : index
    %c0_12 = arith.constant 0 : index
    %17 = vector.load %arg1[%c2, %c0_11, %c0_12] : memref<4x338x147xf32, #tpu.memory_space<vmem>>, vector<1x338x147xf32>
    %18 = vector.shape_cast %17 : vector<1x338x147xf32> to vector<338x147xf32>
    %cst_13 = arith.constant dense<0.000000e+00> : vector<338x128xf32>
    %19 = tpu.matmul %18, %0, %cst_13 {dimension_numbers = #tpu.dot_dimension_numbers<[1], [0], [0], [1], [0, 0, 1, 1], [], []>} : vector<338x147xf32>, vector<147x128xf32>, vector<338x128xf32> -> vector<338x128xf32>
    %20 = vector.broadcast %1 : vector<1x128xf32> to vector<338x128xf32>
    %21 = arith.addf %19, %20 : vector<338x128xf32>
    %cst_14 = arith.constant 0.000000e+00 : f32
    %22 = vector.broadcast %cst_14 : f32 to vector<338x128xf32>
    %23 = arith.maximumf %21, %22 : vector<338x128xf32>
    %24 = arith.maximumf %16, %23 : vector<338x128xf32>
    %c3 = arith.constant 3 : index
    %c0_15 = arith.constant 0 : index
    %c0_16 = arith.constant 0 : index
    %25 = vector.load %arg1[%c3, %c0_15, %c0_16] : memref<4x338x147xf32, #tpu.memory_space<vmem>>, vector<1x338x147xf32>
    %26 = vector.shape_cast %25 : vector<1x338x147xf32> to vector<338x147xf32>
    %cst_17 = arith.constant dense<0.000000e+00> : vector<338x128xf32>
    %27 = tpu.matmul %26, %0, %cst_17 {dimension_numbers = #tpu.dot_dimension_numbers<[1], [0], [0], [1], [0, 0, 1, 1], [], []>} : vector<338x147xf32>, vector<147x128xf32>, vector<338x128xf32> -> vector<338x128xf32>
    %28 = vector.broadcast %1 : vector<1x128xf32> to vector<338x128xf32>
    %29 = arith.addf %27, %28 : vector<338x128xf32>
    %cst_18 = arith.constant 0.000000e+00 : f32
    %30 = vector.broadcast %cst_18 : f32 to vector<338x128xf32>
    %31 = arith.maximumf %29, %30 : vector<338x128xf32>
    %32 = arith.maximumf %24, %31 : vector<338x128xf32>
    %c0_19 = arith.constant 0 : index
    %c0_20 = arith.constant 0 : index
    %33 = vector.load %arg4[%c0_19, %c0_20] : memref<338x128xf32, #tpu.memory_space<vmem>>, vector<338x128xf32>
    tpu.vector_store %arg4[%c0_19, %c0_20], %32 {strides = array<i32>} : memref<338x128xf32, #tpu.memory_space<vmem>>, vector<338x128xf32>,
    return
  }
  func.func @transform_0(%arg0: i32) -> (i32, i32, i32) {
    %c0_i32 = arith.constant 0 : i32
    %c0_i32_0 = arith.constant 0 : i32
    %c0_i32_1 = arith.constant 0 : i32
    %c0_i32_2 = arith.constant 0 : i32
    return %c0_i32, %c0_i32_0, %c0_i32_1 : i32, i32, i32
  }
  func.func @transform_1(%arg0: i32) -> (i32, i32) {
    %c0_i32 = arith.constant 0 : i32
    %c0_i32_0 = arith.constant 0 : i32
    %c0_i32_1 = arith.constant 0 : i32
    return %c0_i32, %c0_i32_0 : i32, i32
  }
  func.func @transform_2(%arg0: i32) -> (i32, i32) {
    %c0_i32 = arith.constant 0 : i32
    %c0_i32_0 = arith.constant 0 : i32
    %c0_i32_1 = arith.constant 0 : i32
    return %c0_i32, %c0_i32_0 : i32, i32
  }
  func.func @transform_3(%arg0: i32) -> (i32, i32) {
    %c0_i32 = arith.constant 0 : i32
    %c0_i32_0 = arith.constant 0 : i32
    %c0_i32_1 = arith.constant 0 : i32
    return %c0_i32, %c0_i32_0 : i32, i32
  }
}

module attributes {stable_mosaic.version = 11 : i64} {
  func.func @_conv_relu_pool_kernel(%arg0: i32, %arg1: memref<4x18x294xf32, #tpu.memory_space<vmem>>, %arg2: memref<294x128xf32, #tpu.memory_space<vmem>>, %arg3: memref<1x128xf32, #tpu.memory_space<vmem>>, %arg4: memref<18x128xf32, #tpu.memory_space<vmem>>) attributes {dimension_semantics = [#tpu.dimension_semantics<arbitrary>], iteration_bounds = array<i64: 1>, scalar_prefetch = 0 : i64, scratch_operands = 0 : i64, tpu.core_type = #tpu.core_type<tc>, window_params = [{pipeline_mode = #tpu.pipeline_mode<synchronous>, transform_indices = @transform_0, window_bounds = array<i64: 4, 18, 294>}, {pipeline_mode = #tpu.pipeline_mode<synchronous>, transform_indices = @transform_1, window_bounds = array<i64: 294, 128>}, {pipeline_mode = #tpu.pipeline_mode<synchronous>, transform_indices = @transform_2, window_bounds = array<i64: 1, 128>}, {pipeline_mode = #tpu.pipeline_mode<synchronous>, transform_indices = @transform_3, window_bounds = array<i64: 18, 128>}]} {
    %c0 = arith.constant 0 : index
    %c0_0 = arith.constant 0 : index
    %0 = vector.load %arg2[%c0, %c0_0] : memref<294x128xf32, #tpu.memory_space<vmem>>, vector<294x128xf32>
    %c0_1 = arith.constant 0 : index
    %c0_2 = arith.constant 0 : index
    %1 = vector.load %arg3[%c0_1, %c0_2] : memref<1x128xf32, #tpu.memory_space<vmem>>, vector<1x128xf32>
    %c0_3 = arith.constant 0 : index
    %c0_4 = arith.constant 0 : index
    %c0_5 = arith.constant 0 : index
    %2 = vector.load %arg1[%c0_3, %c0_4, %c0_5] : memref<4x18x294xf32, #tpu.memory_space<vmem>>, vector<1x18x294xf32>
    %3 = vector.shape_cast %2 : vector<1x18x294xf32> to vector<18x294xf32>
    %cst = arith.constant dense<0.000000e+00> : vector<18x128xf32>
    %4 = tpu.matmul %3, %0, %cst {dimension_numbers = #tpu.dot_dimension_numbers<[1], [0], [0], [1], [0, 0, 1, 1], [], []>} : vector<18x294xf32>, vector<294x128xf32>, vector<18x128xf32> -> vector<18x128xf32>
    %5 = vector.broadcast %1 : vector<1x128xf32> to vector<18x128xf32>
    %6 = arith.addf %4, %5 : vector<18x128xf32>
    %cst_6 = arith.constant 0.000000e+00 : f32
    %7 = vector.broadcast %cst_6 : f32 to vector<18x128xf32>
    %8 = arith.maximumf %6, %7 : vector<18x128xf32>
    %c1 = arith.constant 1 : index
    %c0_7 = arith.constant 0 : index
    %c0_8 = arith.constant 0 : index
    %9 = vector.load %arg1[%c1, %c0_7, %c0_8] : memref<4x18x294xf32, #tpu.memory_space<vmem>>, vector<1x18x294xf32>
    %10 = vector.shape_cast %9 : vector<1x18x294xf32> to vector<18x294xf32>
    %cst_9 = arith.constant dense<0.000000e+00> : vector<18x128xf32>
    %11 = tpu.matmul %10, %0, %cst_9 {dimension_numbers = #tpu.dot_dimension_numbers<[1], [0], [0], [1], [0, 0, 1, 1], [], []>} : vector<18x294xf32>, vector<294x128xf32>, vector<18x128xf32> -> vector<18x128xf32>
    %12 = vector.broadcast %1 : vector<1x128xf32> to vector<18x128xf32>
    %13 = arith.addf %11, %12 : vector<18x128xf32>
    %cst_10 = arith.constant 0.000000e+00 : f32
    %14 = vector.broadcast %cst_10 : f32 to vector<18x128xf32>
    %15 = arith.maximumf %13, %14 : vector<18x128xf32>
    %16 = arith.maximumf %8, %15 : vector<18x128xf32>
    %c2 = arith.constant 2 : index
    %c0_11 = arith.constant 0 : index
    %c0_12 = arith.constant 0 : index
    %17 = vector.load %arg1[%c2, %c0_11, %c0_12] : memref<4x18x294xf32, #tpu.memory_space<vmem>>, vector<1x18x294xf32>
    %18 = vector.shape_cast %17 : vector<1x18x294xf32> to vector<18x294xf32>
    %cst_13 = arith.constant dense<0.000000e+00> : vector<18x128xf32>
    %19 = tpu.matmul %18, %0, %cst_13 {dimension_numbers = #tpu.dot_dimension_numbers<[1], [0], [0], [1], [0, 0, 1, 1], [], []>} : vector<18x294xf32>, vector<294x128xf32>, vector<18x128xf32> -> vector<18x128xf32>
    %20 = vector.broadcast %1 : vector<1x128xf32> to vector<18x128xf32>
    %21 = arith.addf %19, %20 : vector<18x128xf32>
    %cst_14 = arith.constant 0.000000e+00 : f32
    %22 = vector.broadcast %cst_14 : f32 to vector<18x128xf32>
    %23 = arith.maximumf %21, %22 : vector<18x128xf32>
    %24 = arith.maximumf %16, %23 : vector<18x128xf32>
    %c3 = arith.constant 3 : index
    %c0_15 = arith.constant 0 : index
    %c0_16 = arith.constant 0 : index
    %25 = vector.load %arg1[%c3, %c0_15, %c0_16] : memref<4x18x294xf32, #tpu.memory_space<vmem>>, vector<1x18x294xf32>
    %26 = vector.shape_cast %25 : vector<1x18x294xf32> to vector<18x294xf32>
    %cst_17 = arith.constant dense<0.000000e+00> : vector<18x128xf32>
    %27 = tpu.matmul %26, %0, %cst_17 {dimension_numbers = #tpu.dot_dimension_numbers<[1], [0], [0], [1], [0, 0, 1, 1], [], []>} : vector<18x294xf32>, vector<294x128xf32>, vector<18x128xf32> -> vector<18x128xf32>
    %28 = vector.broadcast %1 : vector<1x128xf32> to vector<18x128xf32>
    %29 = arith.addf %27, %28 : vector<18x128xf32>
    %cst_18 = arith.constant 0.000000e+00 : f32
    %30 = vector.broadcast %cst_18 : f32 to vector<18x128xf32>
    %31 = arith.maximumf %29, %30 : vector<18x128xf32>
    %32 = arith.maximumf %24, %31 : vector<18x128xf32>
    %c0_19 = arith.constant 0 : index
    %c0_20 = arith.constant 0 : index
    %33 = vector.load %arg4[%c0_19, %c0_20] : memref<18x128xf32, #tpu.memory_space<vmem>>, vector<18x128xf32>
    tpu.vector_store %arg4[%c0_19, %c0_20], %32 {strides = array<i32>} : memref<18x128xf32, #tpu.memory_space<vmem>>, vector<18x128xf32>,
    return
  }
  func.func @transform_0(%arg0: i32) -> (i32, i32, i32) {
    %c0_i32 = arith.constant 0 : i32
    %c0_i32_0 = arith.constant 0 : i32
    %c0_i32_1 = arith.constant 0 : i32
    %c0_i32_2 = arith.constant 0 : i32
    return %c0_i32, %c0_i32_0, %c0_i32_1 : i32, i32, i32
  }
  func.func @transform_1(%arg0: i32) -> (i32, i32) {
    %c0_i32 = arith.constant 0 : i32
    %c0_i32_0 = arith.constant 0 : i32
    %c0_i32_1 = arith.constant 0 : i32
    return %c0_i32, %c0_i32_0 : i32, i32
  }
  func.func @transform_2(%arg0: i32) -> (i32, i32) {
    %c0_i32 = arith.constant 0 : i32
    %c0_i32_0 = arith.constant 0 : i32
    %c0_i32_1 = arith.constant 0 : i32
    return %c0_i32, %c0_i32_0 : i32, i32
  }
  func.func @transform_3(%arg0: i32) -> (i32, i32) {
    %c0_i32 = arith.constant 0 : i32
    %c0_i32_0 = arith.constant 0 : i32
    %c0_i32_1 = arith.constant 0 : i32
    return %c0_i32, %c0_i32_0 : i32, i32
  }
}

module attributes {stable_mosaic.version = 11 : i64} {
  func.func @_fc_chain_kernel(%arg0: i32, %arg1: memref<2x144xf32, #tpu.memory_space<vmem>>, %arg2: memref<144x120xf32, #tpu.memory_space<vmem>>, %arg3: memref<1x120xf32, #tpu.memory_space<vmem>>, %arg4: memref<120x84xf32, #tpu.memory_space<vmem>>, %arg5: memref<1x84xf32, #tpu.memory_space<vmem>>, %arg6: memref<84x32xf32, #tpu.memory_space<vmem>>, %arg7: memref<1x32xf32, #tpu.memory_space<vmem>>, %arg8: memref<32x10xf32, #tpu.memory_space<vmem>>, %arg9: memref<1x10xf32, #tpu.memory_space<vmem>>, %arg10: memref<2x10xf32, #tpu.memory_space<vmem>>) attributes {dimension_semantics = [#tpu.dimension_semantics<arbitrary>], iteration_bounds = array<i64: 1>, scalar_prefetch = 0 : i64, scratch_operands = 0 : i64, tpu.core_type = #tpu.core_type<tc>, window_params = [{pipeline_mode = #tpu.pipeline_mode<synchronous>, transform_indices = @transform_0, window_bounds = array<i64: 2, 144>}, {pipeline_mode = #tpu.pipeline_mode<synchronous>, transform_indices = @transform_1, window_bounds = array<i64: 144, 120>}, {pipeline_mode = #tpu.pipeline_mode<synchronous>, transform_indices = @transform_2, window_bounds = array<i64: 1, 120>}, {pipeline_mode = #tpu.pipeline_mode<synchronous>, transform_indices = @transform_3, window_bounds = array<i64: 120, 84>}, {pipeline_mode = #tpu.pipeline_mode<synchronous>, transform_indices = @transform_4, window_bounds = array<i64: 1, 84>}, {pipeline_mode = #tpu.pipeline_mode<synchronous>, transform_indices = @transform_5, window_bounds = array<i64: 84, 32>}, {pipeline_mode = #tpu.pipeline_mode<synchronous>, transform_indices = @transform_6, window_bounds = array<i64: 1, 32>}, {pipeline_mode = #tpu.pipeline_mode<synchronous>, transform_indices = @transform_7, window_bounds = array<i64: 32, 10>}, {pipeline_mode = #tpu.pipeline_mode<synchronous>, transform_indices = @transform_8, window_bounds = array<i64: 1, 10>}, {pipeline_mode = #tpu.pipeline_mode<synchronous>, transform_indices = @transform_9, window_bounds = array<i64: 2, 10>}]} {
    %c0 = arith.constant 0 : index
    %c0_0 = arith.constant 0 : index
    %0 = vector.load %arg1[%c0, %c0_0] : memref<2x144xf32, #tpu.memory_space<vmem>>, vector<2x144xf32>
    %c0_1 = arith.constant 0 : index
    %c0_2 = arith.constant 0 : index
    %1 = vector.load %arg2[%c0_1, %c0_2] : memref<144x120xf32, #tpu.memory_space<vmem>>, vector<144x120xf32>
    %cst = arith.constant dense<0.000000e+00> : vector<2x120xf32>
    %2 = tpu.matmul %0, %1, %cst {dimension_numbers = #tpu.dot_dimension_numbers<[1], [0], [0], [1], [0, 0, 1, 1], [], []>} : vector<2x144xf32>, vector<144x120xf32>, vector<2x120xf32> -> vector<2x120xf32>
    %c0_3 = arith.constant 0 : index
    %c0_4 = arith.constant 0 : index
    %3 = vector.load %arg3[%c0_3, %c0_4] : memref<1x120xf32, #tpu.memory_space<vmem>>, vector<1x120xf32>
    %4 = vector.broadcast %3 : vector<1x120xf32> to vector<2x120xf32>
    %5 = arith.addf %2, %4 : vector<2x120xf32>
    %cst_5 = arith.constant 0.000000e+00 : f32
    %6 = vector.broadcast %cst_5 : f32 to vector<2x120xf32>
    %7 = arith.maximumf %5, %6 : vector<2x120xf32>
    %c0_6 = arith.constant 0 : index
    %c0_7 = arith.constant 0 : index
    %8 = vector.load %arg4[%c0_6, %c0_7] : memref<120x84xf32, #tpu.memory_space<vmem>>, vector<120x84xf32>
    %cst_8 = arith.constant dense<0.000000e+00> : vector<2x84xf32>
    %9 = tpu.matmul %7, %8, %cst_8 {dimension_numbers = #tpu.dot_dimension_numbers<[1], [0], [0], [1], [0, 0, 1, 1], [], []>} : vector<2x120xf32>, vector<120x84xf32>, vector<2x84xf32> -> vector<2x84xf32>
    %c0_9 = arith.constant 0 : index
    %c0_10 = arith.constant 0 : index
    %10 = vector.load %arg5[%c0_9, %c0_10] : memref<1x84xf32, #tpu.memory_space<vmem>>, vector<1x84xf32>
    %11 = vector.broadcast %10 : vector<1x84xf32> to vector<2x84xf32>
    %12 = arith.addf %9, %11 : vector<2x84xf32>
    %cst_11 = arith.constant 0.000000e+00 : f32
    %13 = vector.broadcast %cst_11 : f32 to vector<2x84xf32>
    %14 = arith.maximumf %12, %13 : vector<2x84xf32>
    %c0_12 = arith.constant 0 : index
    %c0_13 = arith.constant 0 : index
    %15 = vector.load %arg6[%c0_12, %c0_13] : memref<84x32xf32, #tpu.memory_space<vmem>>, vector<84x32xf32>
    %cst_14 = arith.constant dense<0.000000e+00> : vector<2x32xf32>
    %16 = tpu.matmul %14, %15, %cst_14 {dimension_numbers = #tpu.dot_dimension_numbers<[1], [0], [0], [1], [0, 0, 1, 1], [], []>} : vector<2x84xf32>, vector<84x32xf32>, vector<2x32xf32> -> vector<2x32xf32>
    %c0_15 = arith.constant 0 : index
    %c0_16 = arith.constant 0 : index
    %17 = vector.load %arg7[%c0_15, %c0_16] : memref<1x32xf32, #tpu.memory_space<vmem>>, vector<1x32xf32>
    %18 = vector.broadcast %17 : vector<1x32xf32> to vector<2x32xf32>
    %19 = arith.addf %16, %18 : vector<2x32xf32>
    %cst_17 = arith.constant 0.000000e+00 : f32
    %20 = vector.broadcast %cst_17 : f32 to vector<2x32xf32>
    %21 = arith.maximumf %19, %20 : vector<2x32xf32>
    %c0_18 = arith.constant 0 : index
    %c0_19 = arith.constant 0 : index
    %22 = vector.load %arg8[%c0_18, %c0_19] : memref<32x10xf32, #tpu.memory_space<vmem>>, vector<32x10xf32>
    %cst_20 = arith.constant dense<0.000000e+00> : vector<2x10xf32>
    %23 = tpu.matmul %21, %22, %cst_20 {dimension_numbers = #tpu.dot_dimension_numbers<[1], [0], [0], [1], [0, 0, 1, 1], [], []>} : vector<2x32xf32>, vector<32x10xf32>, vector<2x10xf32> -> vector<2x10xf32>
    %c0_21 = arith.constant 0 : index
    %c0_22 = arith.constant 0 : index
    %24 = vector.load %arg9[%c0_21, %c0_22] : memref<1x10xf32, #tpu.memory_space<vmem>>, vector<1x10xf32>
    %25 = vector.broadcast %24 : vector<1x10xf32> to vector<2x10xf32>
    %26 = arith.addf %23, %25 : vector<2x10xf32>
    %c0_23 = arith.constant 0 : index
    %c0_24 = arith.constant 0 : index
    %27 = vector.load %arg10[%c0_23, %c0_24] : memref<2x10xf32, #tpu.memory_space<vmem>>, vector<2x10xf32>
    tpu.vector_store %arg10[%c0_23, %c0_24], %26 {strides = array<i32>} : memref<2x10xf32, #tpu.memory_space<vmem>>, vector<2x10xf32>,
    return
  }
  func.func @transform_0(%arg0: i32) -> (i32, i32) {
    %c0_i32 = arith.constant 0 : i32
    %c0_i32_0 = arith.constant 0 : i32
    %c0_i32_1 = arith.constant 0 : i32
    return %c0_i32, %c0_i32_0 : i32, i32
  }
  func.func @transform_1(%arg0: i32) -> (i32, i32) {
    %c0_i32 = arith.constant 0 : i32
    %c0_i32_0 = arith.constant 0 : i32
    %c0_i32_1 = arith.constant 0 : i32
    return %c0_i32, %c0_i32_0 : i32, i32
  }
  func.func @transform_2(%arg0: i32) -> (i32, i32) {
    %c0_i32 = arith.constant 0 : i32
    %c0_i32_0 = arith.constant 0 : i32
    %c0_i32_1 = arith.constant 0 : i32
    return %c0_i32, %c0_i32_0 : i32, i32
  }
  func.func @transform_3(%arg0: i32) -> (i32, i32) {
    %c0_i32 = arith.constant 0 : i32
    %c0_i32_0 = arith.constant 0 : i32
    %c0_i32_1 = arith.constant 0 : i32
    return %c0_i32, %c0_i32_0 : i32, i32
  }
  func.func @transform_4(%arg0: i32) -> (i32, i32) {
    %c0_i32 = arith.constant 0 : i32
    %c0_i32_0 = arith.constant 0 : i32
    %c0_i32_1 = arith.constant 0 : i32
    return %c0_i32, %c0_i32_0 : i32, i32
  }
  func.func @transform_5(%arg0: i32) -> (i32, i32) {
    %c0_i32 = arith.constant 0 : i32
    %c0_i32_0 = arith.constant 0 : i32
    %c0_i32_1 = arith.constant 0 : i32
    return %c0_i32, %c0_i32_0 : i32, i32
  }
  func.func @transform_6(%arg0: i32) -> (i32, i32) {
    %c0_i32 = arith.constant 0 : i32
    %c0_i32_0 = arith.constant 0 : i32
    %c0_i32_1 = arith.constant 0 : i32
    return %c0_i32, %c0_i32_0 : i32, i32
  }
  func.func @transform_7(%arg0: i32) -> (i32, i32) {
    %c0_i32 = arith.constant 0 : i32
    %c0_i32_0 = arith.constant 0 : i32
    %c0_i32_1 = arith.constant 0 : i32
    return %c0_i32, %c0_i32_0 : i32, i32
  }
  func.func @transform_8(%arg0: i32) -> (i32, i32) {
    %c0_i32 = arith.constant 0 : i32
    %c0_i32_0 = arith.constant 0 : i32
    %c0_i32_1 = arith.constant 0 : i32
    return %c0_i32, %c0_i32_0 : i32, i32
  }
  func.func @transform_9(%arg0: i32) -> (i32, i32) {
    %c0_i32 = arith.constant 0 : i32
    %c0_i32_0 = arith.constant 0 : i32
    %c0_i32_1 = arith.constant 0 : i32
    return %c0_i32, %c0_i32_0 : i32, i32
  }
}

</mosaic_0001>

<llo_original>
// kernel: mynet4_forward.3
$region0: #{mynet4_forward.3}
  #allocation0 [shape = 'u32[]', space=smem, size = 0x4, offset = 0x4, fixed_abs, tag = 'smem constant byte address 0x4 - core index']
  #allocation1 [shape = 'u32[144,128]{1,0:T(1,128)}', space=vmem, size = 0x12000, scoped, tag = 'internal scratch']
  %s0 = inlined_call_operand.vmem [shape: f32[4,338,147], index: 0, kind: input, shape index: {}]
  %s1 = inlined_call_operand.vmem [shape: f32[147,128], index: 1, kind: input, shape index: {}]
  %s2 = inlined_call_operand.vmem [shape: f32[1,128], index: 2, kind: input, shape index: {}]
  %s3 = inlined_call_operand.vmem [shape: f32[338,128], index: 3, kind: output, shape index: {}]
  %s4 = sld [smem:[#allocation0]]
  $region22: #{mynet4_forward.3} parent=0
    _
  %s6 = ssub.s32 1, %s4
  %s7 = scalar_select 0, %s6, %s4
  // Predicated region
  $region2: #{mynet4_forward.3} parent=0 // pred_check
    _
  $region3: #{mynet4_forward.3} parent=0 // pred_check_branch
    %9 = sbr.rel (0) target = $region5
  $region4: #{mynet4_forward.3} parent=0 // pred_region
    _
  $region5: #{mynet4_forward.3} parent=0 // pred_fallthru
    _
  // Predicated region
  $region6: #{mynet4_forward.3} parent=0 // pred_check
    _
  $region7: #{mynet4_forward.3} parent=0 // pred_check_branch
    %11 = sbr.rel (0) target = $region9
  $region8: #{mynet4_forward.3} parent=0 // pred_region
    _
  $region9: #{mynet4_forward.3} parent=0 // pred_fallthru
    _
  // Predicated region
  $region10: #{mynet4_forward.3} parent=0 // pred_check
    _
  $region11: #{mynet4_forward.3} parent=0 // pred_check_branch
    %13 = sbr.rel (0) target = $region13
  $region12: #{mynet4_forward.3} parent=0 // pred_region
    _
  $region13: #{mynet4_forward.3} parent=0 // pred_fallthru
    _
  %v14 = vld [vmem:[%s1] sm:$0xff]
  %v15 = vld [vmem:[%s1 + $0x8] sm:$0xff]
  %v16 = vld [vmem:[%s1 + $0x10] sm:$0xff]
  %v17 = vld [vmem:[%s1 + $0x18] sm:$0xff]
  %v18 = vld [vmem:[%s1 + $0x20] sm:$0xff]
  %v19 = vld [vmem:[%s1 + $0x28] sm:$0xff]
  %v20 = vld [vmem:[%s1 + $0x30] sm:$0xff]
  %v21 = vld [vmem:[%s1 + $0x38] sm:$0xff]
  %v22 = vld [vmem:[%s1 + $0x40] sm:$0xff]
  %v23 = vld [vmem:[%s1 + $0x48] sm:$0xff]
  %v24 = vld [vmem:[%s1 + $0x50] sm:$0xff]
  %v25 = vld [vmem:[%s1 + $0x58] sm:$0xff]
  %v26 = vld [vmem:[%s1 + $0x60] sm:$0xff]
  %v27 = vld [vmem:[%s1 + $0x68] sm:$0xff]
  %v28 = vld [vmem:[%s1 + $0x70] sm:$0xff]
  %v29 = vld [vmem:[%s1 + $0x78] sm:$0xff]
  %v30 = vld [vmem:[%s1 + $0x80] sm:$0xff]
  %v31 = vld [vmem:[%s1 + $0x88] sm:$0xff]
  %v32 = vld [vmem:[%s1 + $0x90] sm:$0x7]
  %v33 = vld [vmem:[%s2] sm:$0x1]
  %v34 = vld [vmem:[%s0] sm:$0xff]
  %v35 = vld [vmem:[%s0 + $0x8] sm:$0xff]
  %v36 = vld [vmem:[%s0 + $0x10] sm:$0xff]
  %v37 = vld [vmem:[%s0 + $0x18] sm:$0xff]
  %v38 = vld [vmem:[%s0 + $0x20] sm:$0xff]
  %v39 = vld [vmem:[%s0 + $0x28] sm:$0xff]
  %v40 = vld [vmem:[%s0 + $0x30] sm:$0xff]
  %v41 = vld [vmem:[%s0 + $0x38] sm:$0xff]
  %v42 = vld [vmem:[%s0 + $0x40] sm:$0xff]
  %v43 = vld [vmem:[%s0 + $0x48] sm:$0xff]
  %v44 = vld [vmem:[%s0 + $0x50] sm:$0xff]
  %v45 = vld [vmem:[%s0 + $0x58] sm:$0xff]
  %v46 = vld [vmem:[%s0 + $0x60] sm:$0xff]
  %v47 = vld [vmem:[%s0 + $0x68] sm:$0xff]
  %v48 = vld [vmem:[%s0 + $0x70] sm:$0xff]
  %v49 = vld [vmem:[%s0 + $0x78] sm:$0xff]
  %v50 = vld [vmem:[%s0 + $0x80] sm:$0xff]
  %v51 = vld [vmem:[%s0 + $0x88] sm:$0xff]
  %v52 = vld [vmem:[%s0 + $0x90] sm:$0xff]
  %v53 = vld [vmem:[%s0 + $0x98] sm:$0xff]
  %v54 = vld [vmem:[%s0 + $0xa0] sm:$0xff]
  %v55 = vld [vmem:[%s0 + $0xa8] sm:$0xff]
  %v56 = vld [vmem:[%s0 + $0xb0] sm:$0xff]
  %v57 = vld [vmem:[%s0 + $0xb8] sm:$0xff]
  %v58 = vld [vmem:[%s0 + $0xc0] sm:$0xff]
  %v59 = vld [vmem:[%s0 + $0xc8] sm:$0xff]
  %v60 = vld [vmem:[%s0 + $0xd0] sm:$0xff]
  %v61 = vld [vmem:[%s0 + $0xd8] sm:$0xff]
  %v62 = vld [vmem:[%s0 + $0xe0] sm:$0xff]
  %v63 = vld [vmem:[%s0 + $0xe8] sm:$0xff]
  %v64 = vld [vmem:[%s0 + $0xf0] sm:$0xff]
  %v65 = vld [vmem:[%s0 + $0xf8] sm:$0xff]
  %v66 = vld [vmem:[%s0 + $0x100] sm:$0xff]
  %v67 = vld [vmem:[%s0 + $0x108] sm:$0xff]
  %v68 = vld [vmem:[%s0 + $0x110] sm:$0xff]
  %v69 = vld [vmem:[%s0 + $0x118] sm:$0xff]
  %v70 = vld [vmem:[%s0 + $0x120] sm:$0xff]
  %v71 = vld [vmem:[%s0 + $0x128] sm:$0xff]
  %v72 = vld [vmem:[%s0 + $0x130] sm:$0xff]
  %v73 = vld [vmem:[%s0 + $0x138] sm:$0xff]
  %v74 = vld [vmem:[%s0 + $0x140] sm:$0xff]
  %v75 = vld [vmem:[%s0 + $0x148] sm:$0xff]
  %v76 = vld [vmem:[%s0 + $0x150] sm:$0xff]
  %v77 = vld [vmem:[%s0 + $0x158] sm:$0xff]
  %v78 = vld [vmem:[%s0 + $0x160] sm:$0xff]
  %v79 = vld [vmem:[%s0 + $0x168] sm:$0xff]
  %v80 = vld [vmem:[%s0 + $0x170] sm:$0xff]
  %v81 = vld [vmem:[%s0 + $0x178] sm:$0xff]
  %v82 = vld [vmem:[%s0 + $0x180] sm:$0xff]
  %v83 = vld [vmem:[%s0 + $0x188] sm:$0xff]
  %v84 = vld [vmem:[%s0 + $0x190] sm:$0xff]
  %v85 = vld [vmem:[%s0 + $0x198] sm:$0xff]
  %v86 = vld [vmem:[%s0 + $0x1a0] sm:$0xff]
  %v87 = vld [vmem:[%s0 + $0x1a8] sm:$0xff]
  %v88 = vld [vmem:[%s0 + $0x1b0] sm:$0xff]
  %v89 = vld [vmem:[%s0 + $0x1b8] sm:$0xff]
  %v90 = vld [vmem:[%s0 + $0x1c0] sm:$0xff]
  %v91 = vld [vmem:[%s0 + $0x1c8] sm:$0xff]
  %v92 = vld [vmem:[%s0 + $0x1d0] sm:$0xff]
  %v93 = vld [vmem:[%s0 + $0x1d8] sm:$0xff]
  %v94 = vld [vmem:[%s0 + $0x1e0] sm:$0xff]
  %v95 = vld [vmem:[%s0 + $0x1e8] sm:$0xff]
  %v96 = vld [vmem:[%s0 + $0x1f0] sm:$0xff]
  %v97 = vld [vmem:[%s0 + $0x1f8] sm:$0xff]
  %v98 = vld [vmem:[%s0 + $0x200] sm:$0xff]
  %v99 = vld [vmem:[%s0 + $0x208] sm:$0xff]
  %v100 = vld [vmem:[%s0 + $0x210] sm:$0xff]
  %v101 = vld [vmem:[%s0 + $0x218] sm:$0xff]
  %v102 = vld [vmem:[%s0 + $0x220] sm:$0xff]
  %v103 = vld [vmem:[%s0 + $0x228] sm:$0xff]
  %v104 = vld [vmem:[%s0 + $0x230] sm:$0xff]
  %v105 = vld [vmem:[%s0 + $0x238] sm:$0xff]
  %v106 = vld [vmem:[%s0 + $0x240] sm:$0xff]
  %v107 = vld [vmem:[%s0 + $0x248] sm:$0xff]
  %v108 = vld [vmem:[%s0 + $0x250] sm:$0xff]
  %v109 = vld [vmem:[%s0 + $0x258] sm:$0xff]
  %v110 = vld [vmem:[%s0 + $0x260] sm:$0xff]
  %v111 = vld [vmem:[%s0 + $0x268] sm:$0xff]
  %v112 = vld [vmem:[%s0 + $0x270] sm:$0xff]
  %v113 = vld [vmem:[%s0 + $0x278] sm:$0xff]
  %v114 = vld [vmem:[%s0 + $0x280] sm:$0xff]
  %v115 = vld [vmem:[%s0 + $0x288] sm:$0xff]
  %v116 = vld [vmem:[%s0 + $0x290] sm:$0xff]
  %v117 = vld [vmem:[%s0 + $0x298] sm:$0xff]
  %v118 = vld [vmem:[%s0 + $0x2a0] sm:$0x3]
  %v119 = vld [vmem:[%s0 + $0x2a8] sm:$0x3]
  %v121 = vlaneseq
  %v122 = vshrl.u32 %v121, 7
  %v123 = vsub.s32 0, %v122
  %v124 = vrot.slane %v33, %v123
  %vm126 = vcmask 154624
  %v128 = vsel %vm126, %v35, 0
  %v131 = vsel %vm126, %v37, 0
  %v134 = vsel %vm126, %v39, 0
  %v137 = vsel %vm126, %v41, 0
  %v140 = vsel %vm126, %v43, 0
  %v143 = vsel %vm126, %v45, 0
  %v146 = vsel %vm126, %v47, 0
  %v149 = vsel %vm126, %v49, 0
  %v152 = vsel %vm126, %v51, 0
  %v155 = vsel %vm126, %v53, 0
  %v158 = vsel %vm126, %v55, 0
  %v161 = vsel %vm126, %v57, 0
  %v164 = vsel %vm126, %v59, 0
  %v167 = vsel %vm126, %v61, 0
  %v170 = vsel %vm126, %v63, 0
  %v173 = vsel %vm126, %v65, 0
  %v176 = vsel %vm126, %v67, 0
  %v179 = vsel %vm126, %v69, 0
  %v182 = vsel %vm126, %v71, 0
  %v185 = vsel %vm126, %v73, 0
  %v188 = vsel %vm126, %v75, 0
  %v191 = vsel %vm126, %v77, 0
  %v194 = vsel %vm126, %v79, 0
  %v197 = vsel %vm126, %v81, 0
  %v200 = vsel %vm126, %v83, 0
  %v203 = vsel %vm126, %v85, 0
  %v206 = vsel %vm126, %v87, 0
  %v209 = vsel %vm126, %v89, 0
  %v212 = vsel %vm126, %v91, 0
  %v215 = vsel %vm126, %v93, 0
  %v218 = vsel %vm126, %v95, 0
  %v221 = vsel %vm126, %v97, 0
  %v224 = vsel %vm126, %v99, 0
  %v227 = vsel %vm126, %v101, 0
  %v230 = vsel %vm126, %v103, 0
  %v233 = vsel %vm126, %v105, 0
  %v236 = vsel %vm126, %v107, 0
  %v239 = vsel %vm126, %v109, 0
  %v242 = vsel %vm126, %v111, 0
  %v245 = vsel %vm126, %v113, 0
  %v248 = vsel %vm126, %v115, 0
  %v251 = vsel %vm126, %v117, 0
  %v254 = vsel %vm126, %v119, 0
  %vm256 = vcmask 1042432
  %v258 = vsel %vm256, %v32, 0
  %260 = vmatprep.subr.mxu0 0.0
  %261 = vmatpush1.msra.mxu0 %v14
  %262 = vmatprep.subr.mxu0 0.0
  %263 = vmatpush1.msra.mxu0 %v15
  %264 = vmatprep.subr.mxu0 0.0
  %265 = vmatpush1.msra.mxu0 %v16
  %266 = vmatprep.subr.mxu0 0.0
  %267 = vmatpush1.msra.mxu0 %v17
  %268 = vmatprep.subr.mxu0 0.0
  %269 = vmatpush1.msra.mxu0 %v18
  %270 = vmatprep.subr.mxu0 0.0
  %271 = vmatpush1.msra.mxu0 %v19
  %272 = vmatprep.subr.mxu0 0.0
  %273 = vmatpush1.msra.mxu0 %v20
  %274 = vmatprep.subr.mxu0 0.0
  %275 = vmatpush1.msra.mxu0 %v21
  %276 = vmatprep.subr.mxu0 0.0
  %277 = vmatpush1.msra.mxu0 %v22
  %278 = vmatprep.subr.mxu0 0.0
  %279 = vmatpush1.msra.mxu0 %v23
  %280 = vmatprep.subr.mxu0 0.0
  %281 = vmatpush1.msra.mxu0 %v24
  %282 = vmatprep.subr.mxu0 0.0
  %283 = vmatpush1.msra.mxu0 %v25
  %284 = vmatprep.subr.mxu0 0.0
  %285 = vmatpush1.msra.mxu0 %v26
  %286 = vmatprep.subr.mxu0 0.0
  %287 = vmatpush1.msra.mxu0 %v27
  %288 = vmatprep.subr.mxu0 0.0
  %289 = vmatpush1.msra.mxu0 %v28
  %290 = vmatprep.subr.mxu0 0.0
  %291 = vmatpush1.msra.mxu0 %v29
  %292 = vmatprep.subr.mxu0 0.0
  %293 = vmatpush1.msra.mxu0 %v30
  %294 = vmatprep.subr.mxu0 0.0
  %295 = vmatpush1.msra.mxu0 %v31
  %296 = vmatprep.subr.mxu0 0.0
  %297 = vmatpush1.msra.mxu0 %v258
  %298 = vmatprep.subr.mxu0 0.0
  %299 = vmatpush1.msra.mxu0 0.0
  %300 = vmatprep.subr.mxu0 0.0
  %301 = vmatpush1.msra.mxu0 0.0
  %302 = vmatprep.subr.mxu0 0.0
  %303 = vmatpush1.msra.mxu0 0.0
  %304 = vmatprep.subr.mxu0 0.0
  %305 = vmatpush1.msra.mxu0 0.0
  %306 = vmatprep.subr.mxu0 0.0
  %307 = vmatpush1.msra.mxu0 0.0
  %308 = vmatprep.subr.mxu0 0.0
  %309 = vmatpush1.msra.mxu0 0.0
  %310 = vmatprep.subr.mxu0 0.0
  %311 = vmatpush1.msra.mxu0 0.0
  %312 = vmatprep.subr.mxu0 0.0
  %313 = vmatpush1.msra.mxu0 0.0
  %314 = vmatprep.subr.mxu0 0.0
  %315 = vmatpush1.msra.mxu0 0.0
  %316 = vmatprep.subr.mxu0 0.0
  %317 = vmatpush1.msra.mxu0 0.0
  %318 = vmatprep.subr.mxu0 0.0
  %319 = vmatpush1.msra.mxu0 0.0
  %320 = vmatprep.subr.mxu0 0.0
  %321 = vmatpush1.msra.mxu0 0.0
  %322 = vmatprep.subr.mxu0 0.0
  %323 = vmatpush1.msra.mxu0 0.0
  %324 = vmatprep.mubr.f32.mxu0 %v128
  %325 = vmatmul.mubr.f32.gmra.mrb[0].mxu0 %v34
  %v326 = vpop.f32.mrb[0].mxu0
  %v327 = vadd.f32 %v124, %v326
  %v328 = vpop.f32.mrb[0].mxu0
  %329 = vmatprep.mubr.f32.mxu0 %v131
  %330 = vmatmul.mubr.f32.gmra.mrb[0].mxu0 %v36
  %v331 = vpop.f32.mrb[0].mxu0
  %v332 = vadd.f32 %v124, %v331
  %v333 = vpop.f32.mrb[0].mxu0
  %334 = vmatprep.mubr.f32.mxu0 %v134
  %335 = vmatmul.mubr.f32.gmra.mrb[0].mxu0 %v38
  %v336 = vpop.f32.mrb[0].mxu0
  %v337 = vadd.f32 %v124, %v336
  %v338 = vpop.f32.mrb[0].mxu0
  %339 = vmatprep.mubr.f32.mxu0 %v137
  %340 = vmatmul.mubr.f32.gmra.mrb[0].mxu0 %v40
  %v341 = vpop.f32.mrb[0].mxu0
  %v342 = vadd.f32 %v124, %v341
  %v343 = vpop.f32.mrb[0].mxu0
  %344 = vmatprep.mubr.f32.mxu0 %v140
  %345 = vmatmul.mubr.f32.gmra.mrb[0].mxu0 %v42
  %v346 = vpop.f32.mrb[0].mxu0
  %v347 = vadd.f32 %v124, %v346
  %v348 = vpop.f32.mrb[0].mxu0
  %349 = vmatprep.mubr.f32.mxu0 %v143
  %350 = vmatmul.mubr.f32.gmra.mrb[0].mxu0 %v44
  %v351 = vpop.f32.mrb[0].mxu0
  %v352 = vadd.f32 %v124, %v351
  %v353 = vpop.f32.mrb[0].mxu0
  %354 = vmatprep.mubr.f32.mxu0 %v146
  %355 = vmatmul.mubr.f32.gmra.mrb[0].mxu0 %v46
  %v356 = vpop.f32.mrb[0].mxu0
  %v357 = vadd.f32 %v124, %v356
  %v358 = vpop.f32.mrb[0].mxu0
  %359 = vmatprep.mubr.f32.mxu0 %v149
  %360 = vmatmul.mubr.f32.gmra.mrb[0].mxu0 %v48
  %v361 = vpop.f32.mrb[0].mxu0
  %v362 = vadd.f32 %v124, %v361
  %v363 = vpop.f32.mrb[0].mxu0
  %364 = vmatprep.mubr.f32.mxu0 %v152
  %365 = vmatmul.mubr.f32.gmra.mrb[0].mxu0 %v50
  %v366 = vpop.f32.mrb[0].mxu0
  %v367 = vadd.f32 %v124, %v366
  %v368 = vpop.f32.mrb[0].mxu0
  %369 = vmatprep.mubr.f32.mxu0 %v155
  %370 = vmatmul.mubr.f32.gmra.mrb[0].mxu0 %v52
  %v371 = vpop.f32.mrb[0].mxu0
  %v372 = vadd.f32 %v124, %v371
  %v373 = vpop.f32.mrb[0].mxu0
  %374 = vmatprep.mubr.f32.mxu0 %v158
  %375 = vmatmul.mubr.f32.gmra.mrb[0].mxu0 %v54
  %v376 = vpop.f32.mrb[0].mxu0
  %v377 = vadd.f32 %v124, %v376
  %v378 = vpop.f32.mrb[0].mxu0
  %379 = vmatprep.mubr.f32.mxu0 %v161
  %380 = vmatmul.mubr.f32.gmra.mrb[0].mxu0 %v56
  %v381 = vpop.f32.mrb[0].mxu0
  %v382 = vadd.f32 %v124, %v381
  %v383 = vpop.f32.mrb[0].mxu0
  %384 = vmatprep.mubr.f32.mxu0 %v164
  %385 = vmatmul.mubr.f32.gmra.mrb[0].mxu0 %v58
  %v386 = vpop.f32.mrb[0].mxu0
  %v387 = vadd.f32 %v124, %v386
  %v388 = vpop.f32.mrb[0].mxu0
  %389 = vmatprep.mubr.f32.mxu0 %v167
  %390 = vmatmul.mubr.f32.gmra.mrb[0].mxu0 %v60
  %v391 = vpop.f32.mrb[0].mxu0
  %v392 = vadd.f32 %v124, %v391
  %v393 = vpop.f32.mrb[0].mxu0
  %394 = vmatprep.mubr.f32.mxu0 %v170
  %395 = vmatmul.mubr.f32.gmra.mrb[0].mxu0 %v62
  %v396 = vpop.f32.mrb[0].mxu0
  %v397 = vadd.f32 %v124, %v396
  %v398 = vpop.f32.mrb[0].mxu0
  %399 = vmatprep.mubr.f32.mxu0 %v173
  %400 = vmatmul.mubr.f32.gmra.mrb[0].mxu0 %v64
  %v401 = vpop.f32.mrb[0].mxu0
  %v402 = vadd.f32 %v124, %v401
  %v403 = vpop.f32.mrb[0].mxu0
  %404 = vmatprep.mubr.f32.mxu0 %v176
  %405 = vmatmul.mubr.f32.gmra.mrb[0].mxu0 %v66
  %v406 = vpop.f32.mrb[0].mxu0
  %v407 = vadd.f32 %v124, %v406
  %v408 = vpop.f32.mrb[0].mxu0
  %409 = vmatprep.mubr.f32.mxu0 %v179
  %410 = vmatmul.mubr.f32.gmra.mrb[0].mxu0 %v68
  %v411 = vpop.f32.mrb[0].mxu0
  %v412 = vadd.f32 %v124, %v411
  %v413 = vpop.f32.mrb[0].mxu0
  %414 = vmatprep.mubr.f32.mxu0 %v182
  %415 = vmatmul.mubr.f32.gmra.mrb[0].mxu0 %v70
  %v416 = vpop.f32.mrb[0].mxu0
  %v417 = vadd.f32 %v124, %v416
  %v418 = vpop.f32.mrb[0].mxu0
  %419 = vmatprep.mubr.f32.mxu0 %v185
  %420 = vmatmul.mubr.f32.gmra.mrb[0].mxu0 %v72
  %v421 = vpop.f32.mrb[0].mxu0
  %v422 = vadd.f32 %v124, %v421
  %v423 = vpop.f32.mrb[0].mxu0
  %424 = vmatprep.mubr.f32.mxu0 %v188
  %425 = vmatmul.mubr.f32.gmra.mrb[0].mxu0 %v74
  %v426 = vpop.f32.mrb[0].mxu0
  %v427 = vadd.f32 %v124, %v426
  %v428 = vpop.f32.mrb[0].mxu0
  %429 = vmatprep.mubr.f32.mxu0 %v191
  %430 = vmatmul.mubr.f32.gmra.mrb[0].mxu0 %v76
  %v431 = vpop.f32.mrb[0].mxu0
  %v432 = vadd.f32 %v124, %v431
  %v433 = vpop.f32.mrb[0].mxu0
  %434 = vmatprep.mubr.f32.mxu0 %v194
  %435 = vmatmul.mubr.f32.gmra.mrb[0].mxu0 %v78
  %v436 = vpop.f32.mrb[0].mxu0
  %v437 = vadd.f32 %v124, %v436
  %v438 = vpop.f32.mrb[0].mxu0
  %439 = vmatprep.mubr.f32.mxu0 %v197
  %440 = vmatmul.mubr.f32.gmra.mrb[0].mxu0 %v80
  %v441 = vpop.f32.mrb[0].mxu0
  %v442 = vadd.f32 %v124, %v441
  %v443 = vpop.f32.mrb[0].mxu0
  %444 = vmatprep.mubr.f32.mxu0 %v200
  %445 = vmatmul.mubr.f32.gmra.mrb[0].mxu0 %v82
  %v446 = vpop.f32.mrb[0].mxu0
  %v447 = vadd.f32 %v124, %v446
  %v448 = vpop.f32.mrb[0].mxu0
  %449 = vmatprep.mubr.f32.mxu0 %v203
  %450 = vmatmul.mubr.f32.gmra.mrb[0].mxu0 %v84
  %v451 = vpop.f32.mrb[0].mxu0
  %v452 = vadd.f32 %v124, %v451
  %v453 = vpop.f32.mrb[0].mxu0
  %454 = vmatprep.mubr.f32.mxu0 %v206
  %455 = vmatmul.mubr.f32.gmra.mrb[0].mxu0 %v86
  %v456 = vpop.f32.mrb[0].mxu0
  %v457 = vadd.f32 %v124, %v456
  %v458 = vpop.f32.mrb[0].mxu0
  %459 = vmatprep.mubr.f32.mxu0 %v209
  %460 = vmatmul.mubr.f32.gmra.mrb[0].mxu0 %v88
  %v461 = vpop.f32.mrb[0].mxu0
  %v462 = vadd.f32 %v124, %v461
  %v463 = vpop.f32.mrb[0].mxu0
  %464 = vmatprep.mubr.f32.mxu0 %v212
  %465 = vmatmul.mubr.f32.gmra.mrb[0].mxu0 %v90
  %v466 = vpop.f32.mrb[0].mxu0
  %v467 = vadd.f32 %v124, %v466
  %v468 = vpop.f32.mrb[0].mxu0
  %469 = vmatprep.mubr.f32.mxu0 %v215
  %470 = vmatmul.mubr.f32.gmra.mrb[0].mxu0 %v92
  %v471 = vpop.f32.mrb[0].mxu0
  %v472 = vadd.f32 %v124, %v471
  %v473 = vpop.f32.mrb[0].mxu0
  %474 = vmatprep.mubr.f32.mxu0 %v218
  %475 = vmatmul.mubr.f32.gmra.mrb[0].mxu0 %v94
  %v476 = vpop.f32.mrb[0].mxu0
  %v477 = vadd.f32 %v124, %v476
  %v478 = vpop.f32.mrb[0].mxu0
  %479 = vmatprep.mubr.f32.mxu0 %v221
  %480 = vmatmul.mubr.f32.gmra.mrb[0].mxu0 %v96
  %v481 = vpop.f32.mrb[0].mxu0
  %v482 = vadd.f32 %v124, %v481
  %v483 = vpop.f32.mrb[0].mxu0
  %484 = vmatprep.mubr.f32.mxu0 %v224
  %485 = vmatmul.mubr.f32.gmra.mrb[0].mxu0 %v98
  %v486 = vpop.f32.mrb[0].mxu0
  %v487 = vadd.f32 %v124, %v486
  %v488 = vpop.f32.mrb[0].mxu0
  %489 = vmatprep.mubr.f32.mxu0 %v227
  %490 = vmatmul.mubr.f32.gmra.mrb[0].mxu0 %v100
  %v491 = vpop.f32.mrb[0].mxu0
  %v492 = vadd.f32 %v124, %v491
  %v493 = vpop.f32.mrb[0].mxu0
  %494 = vmatprep.mubr.f32.mxu0 %v230
  %495 = vmatmul.mubr.f32.gmra.mrb[0].mxu0 %v102
  %v496 = vpop.f32.mrb[0].mxu0
  %v497 = vadd.f32 %v124, %v496
  %v498 = vpop.f32.mrb[0].mxu0
  %499 = vmatprep.mubr.f32.mxu0 %v233
  %500 = vmatmul.mubr.f32.gmra.mrb[0].mxu0 %v104
  %v501 = vpop.f32.mrb[0].mxu0
  %v502 = vadd.f32 %v124, %v501
  %v503 = vpop.f32.mrb[0].mxu0
  %504 = vmatprep.mubr.f32.mxu0 %v236
  %505 = vmatmul.mubr.f32.gmra.mrb[0].mxu0 %v106
  %v506 = vpop.f32.mrb[0].mxu0
  %v507 = vadd.f32 %v124, %v506
  %v508 = vpop.f32.mrb[0].mxu0
  %509 = vmatprep.mubr.f32.mxu0 %v239
  %510 = vmatmul.mubr.f32.gmra.mrb[0].mxu0 %v108
  %v511 = vpop.f32.mrb[0].mxu0
  %v512 = vadd.f32 %v124, %v511
  %v513 = vpop.f32.mrb[0].mxu0
  %514 = vmatprep.mubr.f32.mxu0 %v242
  %515 = vmatmul.mubr.f32.gmra.mrb[0].mxu0 %v110
  %v516 = vpop.f32.mrb[0].mxu0
  %v517 = vadd.f32 %v124, %v516
  %v518 = vpop.f32.mrb[0].mxu0
  %519 = vmatprep.mubr.f32.mxu0 %v245
  %520 = vmatmul.mubr.f32.gmra.mrb[0].mxu0 %v112
  %v521 = vpop.f32.mrb[0].mxu0
  %v522 = vadd.f32 %v124, %v521
  %v523 = vpop.f32.mrb[0].mxu0
  %524 = vmatprep.mubr.f32.mxu0 %v248
  %525 = vmatmul.mubr.f32.gmra.mrb[0].mxu0 %v114
  %v526 = vpop.f32.mrb[0].mxu0
  %v527 = vadd.f32 %v124, %v526
  %v528 = vpop.f32.mrb[0].mxu0
  %529 = vmatprep.mubr.f32.mxu0 %v251
  %530 = vmatmul.mubr.f32.gmra.mrb[0].mxu0 %v116
  %v531 = vpop.f32.mrb[0].mxu0
  %v532 = vadd.f32 %v124, %v531
  %v533 = vpop.f32.mrb[0].mxu0
  %534 = vmatprep.mubr.f32.mxu0 %v254
  %535 = vmatmul.mubr.f32.gmra.mrb[0].mxu0 %v118
  %v536 = vpop.f32.mrb[0].mxu0
  %v537 = vadd.f32 %v124, %v536
  %v538 = vpop.f32.mrb[0].mxu0
  %539 = vdwg.mxu0
  %v540 = vmax.f32 %v327, 0.0
  %v541 = vmax.f32 %v332, 0.0
  %v542 = vmax.f32 %v337, 0.0
  %v543 = vmax.f32 %v342, 0.0
  %v544 = vmax.f32 %v347, 0.0
  %v545 = vmax.f32 %v352, 0.0
  %v546 = vmax.f32 %v357, 0.0
  %v547 = vmax.f32 %v362, 0.0
  %v548 = vmax.f32 %v367, 0.0
  %v549 = vmax.f32 %v372, 0.0
  %v550 = vmax.f32 %v377, 0.0
  %v551 = vmax.f32 %v382, 0.0
  %v552 = vmax.f32 %v387, 0.0
  %v553 = vmax.f32 %v392, 0.0
  %v554 = vmax.f32 %v397, 0.0
  %v555 = vmax.f32 %v402, 0.0
  %v556 = vmax.f32 %v407, 0.0
  %v557 = vmax.f32 %v412, 0.0
  %v558 = vmax.f32 %v417, 0.0
  %v559 = vmax.f32 %v422, 0.0
  %v560 = vmax.f32 %v427, 0.0
  %v561 = vmax.f32 %v432, 0.0
  %v562 = vmax.f32 %v437, 0.0
  %v563 = vmax.f32 %v442, 0.0
  %v564 = vmax.f32 %v447, 0.0
  %v565 = vmax.f32 %v452, 0.0
  %v566 = vmax.f32 %v457, 0.0
  %v567 = vmax.f32 %v462, 0.0
  %v568 = vmax.f32 %v467, 0.0
  %v569 = vmax.f32 %v472, 0.0
  %v570 = vmax.f32 %v477, 0.0
  %v571 = vmax.f32 %v482, 0.0
  %v572 = vmax.f32 %v487, 0.0
  %v573 = vmax.f32 %v492, 0.0
  %v574 = vmax.f32 %v497, 0.0
  %v575 = vmax.f32 %v502, 0.0
  %v576 = vmax.f32 %v507, 0.0
  %v577 = vmax.f32 %v512, 0.0
  %v578 = vmax.f32 %v517, 0.0
  %v579 = vmax.f32 %v522, 0.0
  %v580 = vmax.f32 %v527, 0.0
  %v581 = vmax.f32 %v532, 0.0
  %v582 = vmax.f32 %v537, 0.0
  %s583 = scalar_lea.vmem %s0, 688
  %v584 = vld [vmem:[%s583] sm:$0xff]
  %v585 = vld [vmem:[%s583 + $0x8] sm:$0xff]
  %v586 = vld [vmem:[%s583 + $0x10] sm:$0xff]
  %v587 = vld [vmem:[%s583 + $0x18] sm:$0xff]
  %v588 = vld [vmem:[%s583 + $0x20] sm:$0xff]
  %v589 = vld [vmem:[%s583 + $0x28] sm:$0xff]
  %v590 = vld [vmem:[%s583 + $0x30] sm:$0xff]
  %v591 = vld [vmem:[%s583 + $0x38] sm:$0xff]
  %v592 = vld [vmem:[%s583 + $0x40] sm:$0xff]
  %v593 = vld [vmem:[%s583 + $0x48] sm:$0xff]
  %v594 = vld [vmem:[%s583 + $0x50] sm:$0xff]
  %v595 = vld [vmem:[%s583 + $0x58] sm:$0xff]
  %v596 = vld [vmem:[%s583 + $0x60] sm:$0xff]
  %v597 = vld [vmem:[%s583 + $0x68] sm:$0xff]
  %v598 = vld [vmem:[%s583 + $0x70] sm:$0xff]
  %v599 = vld [vmem:[%s583 + $0x78] sm:$0xff]
  %v600 = vld [vmem:[%s583 + $0x80] sm:$0xff]
  %v601 = vld [vmem:[%s583 + $0x88] sm:$0xff]
  %v602 = vld [vmem:[%s583 + $0x90] sm:$0xff]
  %v603 = vld [vmem:[%s583 + $0x98] sm:$0xff]
  %v604 = vld [vmem:[%s583 + $0xa0] sm:$0xff]
  %v605 = vld [vmem:[%s583 + $0xa8] sm:$0xff]
  %v606 = vld [vmem:[%s583 + $0xb0] sm:$0xff]
  %v607 = vld [vmem:[%s583 + $0xb8] sm:$0xff]
  %v608 = vld [vmem:[%s583 + $0xc0] sm:$0xff]
  %v609 = vld [vmem:[%s583 + $0xc8] sm:$0xff]
  %v610 = vld [vmem:[%s583 + $0xd0] sm:$0xff]
  %v611 = vld [vmem:[%s583 + $0xd8] sm:$0xff]
  %v612 = vld [vmem:[%s583 + $0xe0] sm:$0xff]
  %v613 = vld [vmem:[%s583 + $0xe8] sm:$0xff]
  %v614 = vld [vmem:[%s583 + $0xf0] sm:$0xff]
  %v615 = vld [vmem:[%s583 + $0xf8] sm:$0xff]
  %v616 = vld [vmem:[%s583 + $0x100] sm:$0xff]
  %v617 = vld [vmem:[%s583 + $0x108] sm:$0xff]
  %v618 = vld [vmem:[%s583 + $0x110] sm:$0xff]
  %v619 = vld [vmem:[%s583 + $0x118] sm:$0xff]
  %v620 = vld [vmem:[%s583 + $0x120] sm:$0xff]
  %v621 = vld [vmem:[%s583 + $0x128] sm:$0xff]
  %v622 = vld [vmem:[%s583 + $0x130] sm:$0xff]
  %v623 = vld [vmem:[%s583 + $0x138] sm:$0xff]
  %v624 = vld [vmem:[%s583 + $0x140] sm:$0xff]
  %v625 = vld [vmem:[%s583 + $0x148] sm:$0xff]
  %v626 = vld [vmem:[%s583 + $0x150] sm:$0xff]
  %v627 = vld [vmem:[%s583 + $0x158] sm:$0xff]
  %v628 = vld [vmem:[%s583 + $0x160] sm:$0xff]
  %v629 = vld [vmem:[%s583 + $0x168] sm:$0xff]
  %v630 = vld [vmem:[%s583 + $0x170] sm:$0xff]
  %v631 = vld [vmem:[%s583 + $0x178] sm:$0xff]
  %v632 = vld [vmem:[%s583 + $0x180] sm:$0xff]
  %v633 = vld [vmem:[%s583 + $0x188] sm:$0xff]
  %v634 = vld [vmem:[%s583 + $0x190] sm:$0xff]
  %v635 = vld [vmem:[%s583 + $0x198] sm:$0xff]
  %v636 = vld [vmem:[%s583 + $0x1a0] sm:$0xff]
  %v637 = vld [vmem:[%s583 + $0x1a8] sm:$0xff]
  %v638 = vld [vmem:[%s583 + $0x1b0] sm:$0xff]
  %v639 = vld [vmem:[%s583 + $0x1b8] sm:$0xff]
  %v640 = vld [vmem:[%s583 + $0x1c0] sm:$0xff]
  %v641 = vld [vmem:[%s583 + $0x1c8] sm:$0xff]
  %v642 = vld [vmem:[%s583 + $0x1d0] sm:$0xff]
  %v643 = vld [vmem:[%s583 + $0x1d8] sm:$0xff]
  %v644 = vld [vmem:[%s583 + $0x1e0] sm:$0xff]
  %v645 = vld [vmem:[%s583 + $0x1e8] sm:$0xff]
  %v646 = vld [vmem:[%s583 + $0x1f0] sm:$0xff]
  %v647 = vld [vmem:[%s583 + $0x1f8] sm:$0xff]
  %v648 = vld [vmem:[%s583 + $0x200] sm:$0xff]
  %v649 = vld [vmem:[%s583 + $0x208] sm:$0xff]
  %v650 = vld [vmem:[%s583 + $0x210] sm:$0xff]
  %v651 = vld [vmem:[%s583 + $0x218] sm:$0xff]
  %v652 = vld [vmem:[%s583 + $0x220] sm:$0xff]
  %v653 = vld [vmem:[%s583 + $0x228] sm:$0xff]
  %v654 = vld [vmem:[%s583 + $0x230] sm:$0xff]
  %v655 = vld [vmem:[%s583 + $0x238] sm:$0xff]
  %v656 = vld [vmem:[%s583 + $0x240] sm:$0xff]
  %v657 = vld [vmem:[%s583 + $0x248] sm:$0xff]
  %v658 = vld [vmem:[%s583 + $0x250] sm:$0xff]
  %v659 = vld [vmem:[%s583 + $0x258] sm:$0xff]
  %v660 = vld [vmem:[%s583 + $0x260] sm:$0xff]
  %v661 = vld [vmem:[%s583 + $0x268] sm:$0xff]
  %v662 = vld [vmem:[%s583 + $0x270] sm:$0xff]
  %v663 = vld [vmem:[%s583 + $0x278] sm:$0xff]
  %v664 = vld [vmem:[%s583 + $0x280] sm:$0xff]
  %v665 = vld [vmem:[%s583 + $0x288] sm:$0xff]
  %v666 = vld [vmem:[%s583 + $0x290] sm:$0xff]
  %v667 = vld [vmem:[%s583 + $0x298] sm:$0xff]
  %v668 = vld [vmem:[%s583 + $0x2a0] sm:$0x3]
  %v669 = vld [vmem:[%s583 + $0x2a8] sm:$0x3]
  %v671 = vsel %vm126, %v585, 0
  %v674 = vsel %vm126, %v587, 0
  %v677 = vsel %vm126, %v589, 0
  %v680 = vsel %vm126, %v591, 0
  %v683 = vsel %vm126, %v593, 0
  %v686 = vsel %vm126, %v595, 0
  %v689 = vsel %vm126, %v597, 0
  %v692 = vsel %vm126, %v599, 0
  %v695 = vsel %vm126, %v601, 0
  %v698 = vsel %vm126, %v603, 0
  %v701 = vsel %vm126, %v605, 0
  %v704 = vsel %vm126, %v607, 0
  %v707 = vsel %vm126, %v609, 0
  %v710 = vsel %vm126, %v611, 0
  %v713 = vsel %vm126, %v613, 0
  %v716 = vsel %vm126, %v615, 0
  %v719 = vsel %vm126, %v617, 0
  %v722 = vsel %vm126, %v619, 0
  %v725 = vsel %vm126, %v621, 0
  %v728 = vsel %vm126, %v623, 0
  %v731 = vsel %vm126, %v625, 0
  %v734 = vsel %vm126, %v627, 0
  %v737 = vsel %vm126, %v629, 0
  %v740 = vsel %vm126, %v631, 0
  %v743 = vsel %vm126, %v633, 0
  %v746 = vsel %vm126, %v635, 0
  %v749 = vsel %vm126, %v637, 0
  %v752 = vsel %vm126, %v639, 0
  %v755 = vsel %vm126, %v641, 0
  %v758 = vsel %vm126, %v643, 0
  %v761 = vsel %vm126, %v645, 0
  %v764 = vsel %vm126, %v647, 0
  %v767 = vsel %vm126, %v649, 0
  %v770 = vsel %vm126, %v651, 0
  %v773 = vsel %vm126, %v653, 0
  %v776 = vsel %vm126, %v655, 0
  %v779 = vsel %vm126, %v657, 0
  %v782 = vsel %vm126, %v659, 0
  %v785 = vsel %vm126, %v661, 0
  %v788 = vsel %vm126, %v663, 0
  %v791 = vsel %vm126, %v665, 0
  %v794 = vsel %vm126, %v667, 0
  %v797 = vsel %vm126, %v669, 0
  %799 = vmatprep.subr.mxu0 0.0
  %800 = vmatpush1.msra.mxu0 %v14
  %801 = vmatprep.subr.mxu0 0.0
  %802 = vmatpush1.msra.mxu0 %v15
  %803 = vmatprep.subr.mxu0 0.0
  %804 = vmatpush1.msra.mxu0 %v16
  %805 = vmatprep.subr.mxu0 0.0
  %806 = vmatpush1.msra.mxu0 %v17
  %807 = vmatprep.subr.mxu0 0.0
  %808 = vmatpush1.msra.mxu0 %v18
  %809 = vmatprep.subr.mxu0 0.0
  %810 = vmatpush1.msra.mxu0 %v19
  %811 = vmatprep.subr.mxu0 0.0
  %812 = vmatpush1.msra.mxu0 %v20
  %813 = vmatprep.subr.mxu0 0.0
  %814 = vmatpush1.msra.mxu0 %v21
  %815 = vmatprep.subr.mxu0 0.0
  %816 = vmatpush1.msra.mxu0 %v22
  %817 = vmatprep.subr.mxu0 0.0
  %818 = vmatpush1.msra.mxu0 %v23
  %819 = vmatprep.subr.mxu0 0.0
  %820 = vmatpush1.msra.mxu0 %v24
  %821 = vmatprep.subr.mxu0 0.0
  %822 = vmatpush1.msra.mxu0 %v25
  %823 = vmatprep.subr.mxu0 0.0
  %824 = vmatpush1.msra.mxu0 %v26
  %825 = vmatprep.subr.mxu0 0.0
  %826 = vmatpush1.msra.mxu0 %v27
  %827 = vmatprep.subr.mxu0 0.0
  %828 = vmatpush1.msra.mxu0 %v28
  %829 = vmatprep.subr.mxu0 0.0
  %830 = vmatpush1.msra.mxu0 %v29
  %831 = vmatprep.subr.mxu0 0.0
  %832 = vmatpush1.msra.mxu0 %v30
  %833 = vmatprep.subr.mxu0 0.0
  %834 = vmatpush1.msra.mxu0 %v31
  %835 = vmatprep.subr.mxu0 0.0
  %836 = vmatpush1.msra.mxu0 %v258
  %837 = vmatprep.subr.mxu0 0.0
  %838 = vmatpush1.msra.mxu0 0.0
  %839 = vmatprep.subr.mxu0 0.0
  %840 = vmatpush1.msra.mxu0 0.0
  %841 = vmatprep.subr.mxu0 0.0
  %842 = vmatpush1.msra.mxu0 0.0
  %843 = vmatprep.subr.mxu0 0.0
  %844 = vmatpush1.msra.mxu0 0.0
  %845 = vmatprep.subr.mxu0 0.0
  %846 = vmatpush1.msra.mxu0 0.0
  %847 = vmatprep.subr.mxu0 0.0
  %848 = vmatpush1.msra.mxu0 0.0
  %849 = vmatprep.subr.mxu0 0.0
  %850 = vmatpush1.msra.mxu0 0.0
  %851 = vmatprep.subr.mxu0 0.0
  %852 = vmatpush1.msra.mxu0 0.0
  %853 = vmatprep.subr.mxu0 0.0
  %854 = vmatpush1.msra.mxu0 0.0
  %855 = vmatprep.subr.mxu0 0.0
  %856 = vmatpush1.msra.mxu0 0.0
  %857 = vmatprep.subr.mxu0 0.0
  %858 = vmatpush1.msra.mxu0 0.0
  %859 = vmatprep.subr.mxu0 0.0
  %860 = vmatpush1.msra.mxu0 0.0
  %861 = vmatprep.subr.mxu0 0.0
  %862 = vmatpush1.msra.mxu0 0.0
  %863 = vmatprep.mubr.f32.mxu0 %v671
  %864 = vmatmul.mubr.f32.gmra.mrb[0].mxu0 %v584
  %v865 = vpop.f32.mrb[0].mxu0
  %v866 = vadd.f32 %v124, %v865
  %v867 = vpop.f32.mrb[0].mxu0
  %868 = vmatprep.mubr.f32.mxu0 %v674
  %869 = vmatmul.mubr.f32.gmra.mrb[0].mxu0 %v586
  %v870 = vpop.f32.mrb[0].mxu0
  %v871 = vadd.f32 %v124, %v870
  %v872 = vpop.f32.mrb[0].mxu0
  %873 = vmatprep.mubr.f32.mxu0 %v677
  %874 = vmatmul.mubr.f32.gmra.mrb[0].mxu0 %v588
  %v875 = vpop.f32.mrb[0].mxu0
  %v876 = vadd.f32 %v124, %v875
  %v877 = vpop.f32.mrb[0].mxu0
  %878 = vmatprep.mubr.f32.mxu0 %v680
  %879 = vmatmul.mubr.f32.gmra.mrb[0].mxu0 %v590
  %v880 = vpop.f32.mrb[0].mxu0
  %v881 = vadd.f32 %v124, %v880
  %v882 = vpop.f32.mrb[0].mxu0
  %883 = vmatprep.mubr.f32.mxu0 %v683
  %884 = vmatmul.mubr.f32.gmra.mrb[0].mxu0 %v592
  %v885 = vpop.f32.mrb[0].mxu0
  %v886 = vadd.f32 %v124, %v885
  %v887 = vpop.f32.mrb[0].mxu0
  %888 = vmatprep.mubr.f32.mxu0 %v686
  %889 = vmatmul.mubr.f32.gmra.mrb[0].mxu0 %v594
  %v890 = vpop.f32.mrb[0].mxu0
  %v891 = vadd.f32 %v124, %v890
  %v892 = vpop.f32.mrb[0].mxu0
  %893 = vmatprep.mubr.f32.mxu0 %v689
  %894 = vmatmul.mubr.f32.gmra.mrb[0].mxu0 %v596
  %v895 = vpop.f32.mrb[0].mxu0
  %v896 = vadd.f32 %v124, %v895
  %v897 = vpop.f32.mrb[0].mxu0
  %898 = vmatprep.mubr.f32.mxu0 %v692
  %899 = vmatmul.mubr.f32.gmra.mrb[0].mxu0 %v598
  %v900 = vpop.f32.mrb[0].mxu0
  %v901 = vadd.f32 %v124, %v900
  %v902 = vpop.f32.mrb[0].mxu0
  %903 = vmatprep.mubr.f32.mxu0 %v695
  %904 = vmatmul.mubr.f32.gmra.mrb[0].mxu0 %v600
  %v905 = vpop.f32.mrb[0].mxu0
  %v906 = vadd.f32 %v124, %v905
  %v907 = vpop.f32.mrb[0].mxu0
  %908 = vmatprep.mubr.f32.mxu0 %v698
  %909 = vmatmul.mubr.f32.gmra.mrb[0].mxu0 %v602
  %v910 = vpop.f32.mrb[0].mxu0
  %v911 = vadd.f32 %v124, %v910
  %v912 = vpop.f32.mrb[0].mxu0
  %913 = vmatprep.mubr.f32.mxu0 %v701
  %914 = vmatmul.mubr.f32.gmra.mrb[0].mxu0 %v604
  %v915 = vpop.f32.mrb[0].mxu0
  %v916 = vadd.f32 %v124, %v915
  %v917 = vpop.f32.mrb[0].mxu0
  %918 = vmatprep.mubr.f32.mxu0 %v704
  %919 = vmatmul.mubr.f32.gmra.mrb[0].mxu0 %v606
  %v920 = vpop.f32.mrb[0].mxu0
  %v921 = vadd.f32 %v124, %v920
  %v922 = vpop.f32.mrb[0].mxu0
  %923 = vmatprep.mubr.f32.mxu0 %v707
  %924 = vmatmul.mubr.f32.gmra.mrb[0].mxu0 %v608
  %v925 = vpop.f32.mrb[0].mxu0
  %v926 = vadd.f32 %v124, %v925
  %v927 = vpop.f32.mrb[0].mxu0
  %928 = vmatprep.mubr.f32.mxu0 %v710
  %929 = vmatmul.mubr.f32.gmra.mrb[0].mxu0 %v610
  %v930 = vpop.f32.mrb[0].mxu0
  %v931 = vadd.f32 %v124, %v930
  %v932 = vpop.f32.mrb[0].mxu0
  %933 = vmatprep.mubr.f32.mxu0 %v713
  %934 = vmatmul.mubr.f32.gmra.mrb[0].mxu0 %v612
  %v935 = vpop.f32.mrb[0].mxu0
  %v936 = vadd.f32 %v124, %v935
  %v937 = vpop.f32.mrb[0].mxu0
  %938 = vmatprep.mubr.f32.mxu0 %v716
  %939 = vmatmul.mubr.f32.gmra.mrb[0].mxu0 %v614
  %v940 = vpop.f32.mrb[0].mxu0
  %v941 = vadd.f32 %v124, %v940
  %v942 = vpop.f32.mrb[0].mxu0
  %943 = vmatprep.mubr.f32.mxu0 %v719
  %944 = vmatmul.mubr.f32.gmra.mrb[0].mxu0 %v616
  %v945 = vpop.f32.mrb[0].mxu0
  %v946 = vadd.f32 %v124, %v945
  %v947 = vpop.f32.mrb[0].mxu0
  %948 = vmatprep.mubr.f32.mxu0 %v722
  %949 = vmatmul.mubr.f32.gmra.mrb[0].mxu0 %v618
  %v950 = vpop.f32.mrb[0].mxu0
  %v951 = vadd.f32 %v124, %v950
  %v952 = vpop.f32.mrb[0].mxu0
  %953 = vmatprep.mubr.f32.mxu0 %v725
  %954 = vmatmul.mubr.f32.gmra.mrb[0].mxu0 %v620
  %v955 = vpop.f32.mrb[0].mxu0
  %v956 = vadd.f32 %v124, %v955
  %v957 = vpop.f32.mrb[0].mxu0
  %958 = vmatprep.mubr.f32.mxu0 %v728
  %959 = vmatmul.mubr.f32.gmra.mrb[0].mxu0 %v622
  %v960 = vpop.f32.mrb[0].mxu0
  %v961 = vadd.f32 %v124, %v960
  %v962 = vpop.f32.mrb[0].mxu0
  %963 = vmatprep.mubr.f32.mxu0 %v731
  %964 = vmatmul.mubr.f32.gmra.mrb[0].mxu0 %v624
  %v965 = vpop.f32.mrb[0].mxu0
  %v966 = vadd.f32 %v124, %v965
  %v967 = vpop.f32.mrb[0].mxu0
  %968 = vmatprep.mubr.f32.mxu0 %v734
  %969 = vmatmul.mubr.f32.gmra.mrb[0].mxu0 %v626
  %v970 = vpop.f32.mrb[0].mxu0
  %v971 = vadd.f32 %v124, %v970
  %v972 = vpop.f32.mrb[0].mxu0
  %973 = vmatprep.mubr.f32.mxu0 %v737
  %974 = vmatmul.mubr.f32.gmra.mrb[0].mxu0 %v628
  %v975 = vpop.f32.mrb[0].mxu0
  %v976 = vadd.f32 %v124, %v975
  %v977 = vpop.f32.mrb[0].mxu0
  %978 = vmatprep.mubr.f32.mxu0 %v740
  %979 = vmatmul.mubr.f32.gmra.mrb[0].mxu0 %v630
  %v980 = vpop.f32.mrb[0].mxu0
  %v981 = vadd.f32 %v124, %v980
  %v982 = vpop.f32.mrb[0].mxu0
  %983 = vmatprep.mubr.f32.mxu0 %v743
  %984 = vmatmul.mubr.f32.gmra.mrb[0].mxu0 %v632
  %v985 = vpop.f32.mrb[0].mxu0
  %v986 = vadd.f32 %v124, %v985
  %v987 = vpop.f32.mrb[0].mxu0
  %988 = vmatprep.mubr.f32.mxu0 %v746
  %989 = vmatmul.mubr.f32.gmra.mrb[0].mxu0 %v634
  %v990 = vpop.f32.mrb[0].mxu0
  %v991 = vadd.f32 %v124, %v990
  %v992 = vpop.f32.mrb[0].mxu0
  %993 = vmatprep.mubr.f32.mxu0 %v749
  %994 = vmatmul.mubr.f32.gmra.mrb[0].mxu0 %v636
  %v995 = vpop.f32.mrb[0].mxu0
  %v996 = vadd.f32 %v124, %v995
  %v997 = vpop.f32.mrb[0].mxu0
  %998 = vmatprep.mubr.f32.mxu0 %v752
  %999 = vmatmul.mubr.f32.gmra.mrb[0].mxu0 %v638
  %v1000 = vpop.f32.mrb[0].mxu0
  %v1001 = vadd.f32 %v124, %v1000
  %v1002 = vpop.f32.mrb[0].mxu0
  %1003 = vmatprep.mubr.f32.mxu0 %v755
  %1004 = vmatmul.mubr.f32.gmra.mrb[0].mxu0 %v640
  %v1005 = vpop.f32.mrb[0].mxu0
  %v1006 = vadd.f32 %v124, %v1005
  %v1007 = vpop.f32.mrb[0].mxu0
  %1008 = vmatprep.mubr.f32.mxu0 %v758
  %1009 = vmatmul.mubr.f32.gmra.mrb[0].mxu0 %v642
  %v1010 = vpop.f32.mrb[0].mxu0
  %v1011 = vadd.f32 %v124, %v1010
  %v1012 = vpop.f32.mrb[0].mxu0
  %1013 = vmatprep.mubr.f32.mxu0 %v761
  %1014 = vmatmul.mubr.f32.gmra.mrb[0].mxu0 %v644
  %v1015 = vpop.f32.mrb[0].mxu0
  %v1016 = vadd.f32 %v124, %v1015
  %v1017 = vpop.f32.mrb[0].mxu0
  %1018 = vmatprep.mubr.f32.mxu0 %v764
  %1019 = vmatmul.mubr.f32.gmra.mrb[0].mxu0 %v646
  %v1020 = vpop.f32.mrb[0].mxu0
  %v1021 = vadd.f32 %v124, %v1020
  %v1022 = vpop.f32.mrb[0].mxu0
  %1023 = vmatprep.mubr.f32.mxu0 %v767
  %1024 = vmatmul.mubr.f32.gmra.mrb[0].mxu0 %v648
  %v1025 = vpop.f32.mrb[0].mxu0
  %v1026 = vadd.f32 %v124, %v1025
  %v1027 = vpop.f32.mrb[0].mxu0
  %1028 = vmatprep.mubr.f32.mxu0 %v770
  %1029 = vmatmul.mubr.f32.gmra.mrb[0].mxu0 %v650
  %v1030 = vpop.f32.mrb[0].mxu0
  %v1031 = vadd.f32 %v124, %v1030
  %v1032 = vpop.f32.mrb[0].mxu0
  %1033 = vmatprep.mubr.f32.mxu0 %v773
  %1034 = vmatmul.mubr.f32.gmra.mrb[0].mxu0 %v652
  %v1035 = vpop.f32.mrb[0].mxu0
  %v1036 = vadd.f32 %v124, %v1035
  %v1037 = vpop.f32.mrb[0].mxu0
  %1038 = vmatprep.mubr.f32.mxu0 %v776
  %1039 = vmatmul.mubr.f32.gmra.mrb[0].mxu0 %v654
  %v1040 = vpop.f32.mrb[0].mxu0
  %v1041 = vadd.f32 %v124, %v1040
  %v1042 = vpop.f32.mrb[0].mxu0
  %1043 = vmatprep.mubr.f32.mxu0 %v779
  %1044 = vmatmul.mubr.f32.gmra.mrb[0].mxu0 %v656
  %v1045 = vpop.f32.mrb[0].mxu0
  %v1046 = vadd.f32 %v124, %v1045
  %v1047 = vpop.f32.mrb[0].mxu0
  %1048 = vmatprep.mubr.f32.mxu0 %v782
  %1049 = vmatmul.mubr.f32.gmra.mrb[0].mxu0 %v658
  %v1050 = vpop.f32.mrb[0].mxu0
  %v1051 = vadd.f32 %v124, %v1050
  %v1052 = vpop.f32.mrb[0].mxu0
  %1053 = vmatprep.mubr.f32.mxu0 %v785
  %1054 = vmatmul.mubr.f32.gmra.mrb[0].mxu0 %v660
  %v1055 = vpop.f32.mrb[0].mxu0
  %v1056 = vadd.f32 %v124, %v1055
  %v1057 = vpop.f32.mrb[0].mxu0
  %1058 = vmatprep.mubr.f32.mxu0 %v788
  %1059 = vmatmul.mubr.f32.gmra.mrb[0].mxu0 %v662
  %v1060 = vpop.f32.mrb[0].mxu0
  %v1061 = vadd.f32 %v124, %v1060
  %v1062 = vpop.f32.mrb[0].mxu0
  %1063 = vmatprep.mubr.f32.mxu0 %v791
  %1064 = vmatmul.mubr.f32.gmra.mrb[0].mxu0 %v664
  %v1065 = vpop.f32.mrb[0].mxu0
  %v1066 = vadd.f32 %v124, %v1065
  %v1067 = vpop.f32.mrb[0].mxu0
  %1068 = vmatprep.mubr.f32.mxu0 %v794
  %1069 = vmatmul.mubr.f32.gmra.mrb[0].mxu0 %v666
  %v1070 = vpop.f32.mrb[0].mxu0
  %v1071 = vadd.f32 %v124, %v1070
  %v1072 = vpop.f32.mrb[0].mxu0
  %1073 = vmatprep.mubr.f32.mxu0 %v797
  %1074 = vmatmul.mubr.f32.gmra.mrb[0].mxu0 %v668
  %v1075 = vpop.f32.mrb[0].mxu0
  %v1076 = vadd.f32 %v124, %v1075
  %v1077 = vpop.f32.mrb[0].mxu0
  %1078 = vdwg.mxu0
  %v1079 = vmax.f32 %v866, 0.0
  %v1080 = vmax.f32 %v871, 0.0
  %v1081 = vmax.f32 %v876, 0.0
  %v1082 = vmax.f32 %v881, 0.0
  %v1083 = vmax.f32 %v886, 0.0
  %v1084 = vmax.f32 %v891, 0.0
  %v1085 = vmax.f32 %v896, 0.0
  %v1086 = vmax.f32 %v901, 0.0
  %v1087 = vmax.f32 %v906, 0.0
  %v1088 = vmax.f32 %v911, 0.0
  %v1089 = vmax.f32 %v916, 0.0
  %v1090 = vmax.f32 %v921, 0.0
  %v1091 = vmax.f32 %v926, 0.0
  %v1092 = vmax.f32 %v931, 0.0
  %v1093 = vmax.f32 %v936, 0.0
  %v1094 = vmax.f32 %v941, 0.0
  %v1095 = vmax.f32 %v946, 0.0
  %v1096 = vmax.f32 %v951, 0.0
  %v1097 = vmax.f32 %v956, 0.0
  %v1098 = vmax.f32 %v961, 0.0
  %v1099 = vmax.f32 %v966, 0.0
  %v1100 = vmax.f32 %v971, 0.0
  %v1101 = vmax.f32 %v976, 0.0
  %v1102 = vmax.f32 %v981, 0.0
  %v1103 = vmax.f32 %v986, 0.0
  %v1104 = vmax.f32 %v991, 0.0
  %v1105 = vmax.f32 %v996, 0.0
  %v1106 = vmax.f32 %v1001, 0.0
  %v1107 = vmax.f32 %v1006, 0.0
  %v1108 = vmax.f32 %v1011, 0.0
  %v1109 = vmax.f32 %v1016, 0.0
  %v1110 = vmax.f32 %v1021, 0.0
  %v1111 = vmax.f32 %v1026, 0.0
  %v1112 = vmax.f32 %v1031, 0.0
  %v1113 = vmax.f32 %v1036, 0.0
  %v1114 = vmax.f32 %v1041, 0.0
  %v1115 = vmax.f32 %v1046, 0.0
  %v1116 = vmax.f32 %v1051, 0.0
  %v1117 = vmax.f32 %v1056, 0.0
  %v1118 = vmax.f32 %v1061, 0.0
  %v1119 = vmax.f32 %v1066, 0.0
  %v1120 = vmax.f32 %v1071, 0.0
  %v1121 = vmax.f32 %v1076, 0.0
  %v1122 = vmax.f32 %v540, %v1079
  %v1123 = vmax.f32 %v541, %v1080
  %v1124 = vmax.f32 %v542, %v1081
  %v1125 = vmax.f32 %v543, %v1082
  %v1126 = vmax.f32 %v544, %v1083
  %v1127 = vmax.f32 %v545, %v1084
  %v1128 = vmax.f32 %v546, %v1085
  %v1129 = vmax.f32 %v547, %v1086
  %v1130 = vmax.f32 %v548, %v1087
  %v1131 = vmax.f32 %v549, %v1088
  %v1132 = vmax.f32 %v550, %v1089
  %v1133 = vmax.f32 %v551, %v1090
  %v1134 = vmax.f32 %v552, %v1091
  %v1135 = vmax.f32 %v553, %v1092
  %v1136 = vmax.f32 %v554, %v1093
  %v1137 = vmax.f32 %v555, %v1094
  %v1138 = vmax.f32 %v556, %v1095
  %v1139 = vmax.f32 %v557, %v1096
  %v1140 = vmax.f32 %v558, %v1097
  %v1141 = vmax.f32 %v559, %v1098
  %v1142 = vmax.f32 %v560, %v1099
  %v1143 = vmax.f32 %v561, %v1100
  %v1144 = vmax.f32 %v562, %v1101
  %v1145 = vmax.f32 %v563, %v1102
  %v1146 = vmax.f32 %v564, %v1103
  %v1147 = vmax.f32 %v565, %v1104
  %v1148 = vmax.f32 %v566, %v1105
  %v1149 = vmax.f32 %v567, %v1106
  %v1150 = vmax.f32 %v568, %v1107
  %v1151 = vmax.f32 %v569, %v1108
  %v1152 = vmax.f32 %v570, %v1109
  %v1153 = vmax.f32 %v571, %v1110
  %v1154 = vmax.f32 %v572, %v1111
  %v1155 = vmax.f32 %v573, %v1112
  %v1156 = vmax.f32 %v574, %v1113
  %v1157 = vmax.f32 %v575, %v1114
  %v1158 = vmax.f32 %v576, %v1115
  %v1159 = vmax.f32 %v577, %v1116
  %v1160 = vmax.f32 %v578, %v1117
  %v1161 = vmax.f32 %v579, %v1118
  %v1162 = vmax.f32 %v580, %v1119
  %v1163 = vmax.f32 %v581, %v1120
  %v1164 = vmax.f32 %v582, %v1121
  %s1165 = scalar_lea.vmem %s0, 1376
  %v1166 = vld [vmem:[%s1165] sm:$0xff]
  %v1167 = vld [vmem:[%s1165 + $0x8] sm:$0xff]
  %v1168 = vld [vmem:[%s1165 + $0x10] sm:$0xff]
  %v1169 = vld [vmem:[%s1165 + $0x18] sm:$0xff]
  %v1170 = vld [vmem:[%s1165 + $0x20] sm:$0xff]
  %v1171 = vld [vmem:[%s1165 + $0x28] sm:$0xff]
  %v1172 = vld [vmem:[%s1165 + $0x30] sm:$0xff]
  %v1173 = vld [vmem:[%s1165 + $0x38] sm:$0xff]
  %v1174 = vld [vmem:[%s1165 + $0x40] sm:$0xff]
  %v1175 = vld [vmem:[%s1165 + $0x48] sm:$0xff]
  %v1176 = vld [vmem:[%s1165 + $0x50] sm:$0xff]
  %v1177 = vld [vmem:[%s1165 + $0x58] sm:$0xff]
  %v1178 = vld [vmem:[%s1165 + $0x60] sm:$0xff]
  %v1179 = vld [vmem:[%s1165 + $0x68] sm:$0xff]
  %v1180 = vld [vmem:[%s1165 + $0x70] sm:$0xff]
  %v1181 = vld [vmem:[%s1165 + $0x78] sm:$0xff]
  %v1182 = vld [vmem:[%s1165 + $0x80] sm:$0xff]
  %v1183 = vld [vmem:[%s1165 + $0x88] sm:$0xff]
  %v1184 = vld [vmem:[%s1165 + $0x90] sm:$0xff]
  %v1185 = vld [vmem:[%s1165 + $0x98] sm:$0xff]
  %v1186 = vld [vmem:[%s1165 + $0xa0] sm:$0xff]
  %v1187 = vld [vmem:[%s1165 + $0xa8] sm:$0xff]
  %v1188 = vld [vmem:[%s1165 + $0xb0] sm:$0xff]
  %v1189 = vld [vmem:[%s1165 + $0xb8] sm:$0xff]
  %v1190 = vld [vmem:[%s1165 + $0xc0] sm:$0xff]
  %v1191 = vld [vmem:[%s1165 + $0xc8] sm:$0xff]
  %v1192 = vld [vmem:[%s1165 + $0xd0] sm:$0xff]
  %v1193 = vld [vmem:[%s1165 + $0xd8] sm:$0xff]
  %v1194 = vld [vmem:[%s1165 + $0xe0] sm:$0xff]
  %v1195 = vld [vmem:[%s1165 + $0xe8] sm:$0xff]
  %v1196 = vld [vmem:[%s1165 + $0xf0] sm:$0xff]
  %v1197 = vld [vmem:[%s1165 + $0xf8] sm:$0xff]
  %v1198 = vld [vmem:[%s1165 + $0x100] sm:$0xff]
  %v1199 = vld [vmem:[%s1165 + $0x108] sm:$0xff]
  %v1200 = vld [vmem:[%s1165 + $0x110] sm:$0xff]
  %v1201 = vld [vmem:[%s1165 + $0x118] sm:$0xff]
  %v1202 = vld [vmem:[%s1165 + $0x120] sm:$0xff]
  %v1203 = vld [vmem:[%s1165 + $0x128] sm:$0xff]
  %v1204 = vld [vmem:[%s1165 + $0x130] sm:$0xff]
  %v1205 = vld [vmem:[%s1165 + $0x138] sm:$0xff]
  %v1206 = vld [vmem:[%s1165 + $0x140] sm:$0xff]
  %v1207 = vld [vmem:[%s1165 + $0x148] sm:$0xff]
  %v1208 = vld [vmem:[%s1165 + $0x150] sm:$0xff]
  %v1209 = vld [vmem:[%s1165 + $0x158] sm:$0xff]
  %v1210 = vld [vmem:[%s1165 + $0x160] sm:$0xff]
  %v1211 = vld [vmem:[%s1165 + $0x168] sm:$0xff]
  %v1212 = vld [vmem:[%s1165 + $0x170] sm:$0xff]
  %v1213 = vld [vmem:[%s1165 + $0x178] sm:$0xff]
  %v1214 = vld [vmem:[%s1165 + $0x180] sm:$0xff]
  %v1215 = vld [vmem:[%s1165 + $0x188] sm:$0xff]
  %v1216 = vld [vmem:[%s1165 + $0x190] sm:$0xff]
  %v1217 = vld [vmem:[%s1165 + $0x198] sm:$0xff]
  %v1218 = vld [vmem:[%s1165 + $0x1a0] sm:$0xff]
  %v1219 = vld [vmem:[%s1165 + $0x1a8] sm:$0xff]
  %v1220 = vld [vmem:[%s1165 + $0x1b0] sm:$0xff]
  %v1221 = vld [vmem:[%s1165 + $0x1b8] sm:$0xff]
  %v1222 = vld [vmem:[%s1165 + $0x1c0] sm:$0xff]
  %v1223 = vld [vmem:[%s1165 + $0x1c8] sm:$0xff]
  %v1224 = vld [vmem:[%s1165 + $0x1d0] sm:$0xff]
  %v1225 = vld [vmem:[%s1165 + $0x1d8] sm:$0xff]
  %v1226 = vld [vmem:[%s1165 + $0x1e0] sm:$0xff]
  %v1227 = vld [vmem:[%s1165 + $0x1e8] sm:$0xff]
  %v1228 = vld [vmem:[%s1165 + $0x1f0] sm:$0xff]
  %v1229 = vld [vmem:[%s1165 + $0x1f8] sm:$0xff]
  %v1230 = vld [vmem:[%s1165 + $0x200] sm:$0xff]
  %v1231 = vld [vmem:[%s1165 + $0x208] sm:$0xff]
  %v1232 = vld [vmem:[%s1165 + $0x210] sm:$0xff]
  %v1233 = vld [vmem:[%s1165 + $0x218] sm:$0xff]
  %v1234 = vld [vmem:[%s1165 + $0x220] sm:$0xff]
  %v1235 = vld [vmem:[%s1165 + $0x228] sm:$0xff]
  %v1236 = vld [vmem:[%s1165 + $0x230] sm:$0xff]
  %v1237 = vld [vmem:[%s1165 + $0x238] sm:$0xff]
  %v1238 = vld [vmem:[%s1165 + $0x240] sm:$0xff]
  %v1239 = vld [vmem:[%s1165 + $0x248] sm:$0xff]
  %v1240 = vld [vmem:[%s1165 + $0x250] sm:$0xff]
  %v1241 = vld [vmem:[%s1165 + $0x258] sm:$0xff]
  %v1242 = vld [vmem:[%s1165 + $0x260] sm:$0xff]
  %v1243 = vld [vmem:[%s1165 + $0x268] sm:$0xff]
  %v1244 = vld [vmem:[%s1165 + $0x270] sm:$0xff]
  %v1245 = vld [vmem:[%s1165 + $0x278] sm:$0xff]
  %v1246 = vld [vmem:[%s1165 + $0x280] sm:$0xff]
  %v1247 = vld [vmem:[%s1165 + $0x288] sm:$0xff]
  %v1248 = vld [vmem:[%s1165 + $0x290] sm:$0xff]
  %v1249 = vld [vmem:[%s1165 + $0x298] sm:$0xff]
  %v1250 = vld [vmem:[%s1165 + $0x2a0] sm:$0x3]
  %v1251 = vld [vmem:[%s1165 + $0x2a8] sm:$0x3]
  %v1253 = vsel %vm126, %v1167, 0
  %v1256 = vsel %vm126, %v1169, 0
  %v1259 = vsel %vm126, %v1171, 0
  %v1262 = vsel %vm126, %v1173, 0
  %v1265 = vsel %vm126, %v1175, 0
  %v1268 = vsel %vm126, %v1177, 0
  %v1271 = vsel %vm126, %v1179, 0
  %v1274 = vsel %vm126, %v1181, 0
  %v1277 = vsel %vm126, %v1183, 0
  %v1280 = vsel %vm126, %v1185, 0
  %v1283 = vsel %vm126, %v1187, 0
  %v1286 = vsel %vm126, %v1189, 0
  %v1289 = vsel %vm126, %v1191, 0
  %v1292 = vsel %vm126, %v1193, 0
  %v1295 = vsel %vm126, %v1195, 0
  %v1298 = vsel %vm126, %v1197, 0
  %v1301 = vsel %vm126, %v1199, 0
  %v1304 = vsel %vm126, %v1201, 0
  %v1307 = vsel %vm126, %v1203, 0
  %v1310 = vsel %vm126, %v1205, 0
  %v1313 = vsel %vm126, %v1207, 0
  %v1316 = vsel %vm126, %v1209, 0
  %v1319 = vsel %vm126, %v1211, 0
  %v1322 = vsel %vm126, %v1213, 0
  %v1325 = vsel %vm126, %v1215, 0
  %v1328 = vsel %vm126, %v1217, 0
  %v1331 = vsel %vm126, %v1219, 0
  %v1334 = vsel %vm126, %v1221, 0
  %v1337 = vsel %vm126, %v1223, 0
  %v1340 = vsel %vm126, %v1225, 0
  %v1343 = vsel %vm126, %v1227, 0
  %v1346 = vsel %vm126, %v1229, 0
  %v1349 = vsel %vm126, %v1231, 0
  %v1352 = vsel %vm126, %v1233, 0
  %v1355 = vsel %vm126, %v1235, 0
  %v1358 = vsel %vm126, %v1237, 0
  %v1361 = vsel %vm126, %v1239, 0
  %v1364 = vsel %vm126, %v1241, 0
  %v1367 = vsel %vm126, %v1243, 0
  %v1370 = vsel %vm126, %v1245, 0
  %v1373 = vsel %vm126, %v1247, 0
  %v1376 = vsel %vm126, %v1249, 0
  %v1379 = vsel %vm126, %v1251, 0
  %1381 = vmatprep.subr.mxu0 0.0
  %1382 = vmatpush1.msra.mxu0 %v14
  %1383 = vmatprep.subr.mxu0 0.0
  %1384 = vmatpush1.msra.mxu0 %v15
  %1385 = vmatprep.subr.mxu0 0.0
  %1386 = vmatpush1.msra.mxu0 %v16
  %1387 = vmatprep.subr.mxu0 0.0
  %1388 = vmatpush1.msra.mxu0 %v17
  %1389 = vmatprep.subr.mxu0 0.0
  %1390 = vmatpush1.msra.mxu0 %v18
  %1391 = vmatprep.subr.mxu0 0.0
  %1392 = vmatpush1.msra.mxu0 %v19
  %1393 = vmatprep.subr.mxu0 0.0
  %1394 = vmatpush1.msra.mxu0 %v20
  %1395 = vmatprep.subr.mxu0 0.0
  %1396 = vmatpush1.msra.mxu0 %v21
  %1397 = vmatprep.subr.mxu0 0.0
  %1398 = vmatpush1.msra.mxu0 %v22
  %1399 = vmatprep.subr.mxu0 0.0
  %1400 = vmatpush1.msra.mxu0 %v23
  %1401 = vmatprep.subr.mxu0 0.0
  %1402 = vmatpush1.msra.mxu0 %v24
  %1403 = vmatprep.subr.mxu0 0.0
  %1404 = vmatpush1.msra.mxu0 %v25
  %1405 = vmatprep.subr.mxu0 0.0
  %1406 = vmatpush1.msra.mxu0 %v26
  %1407 = vmatprep.subr.mxu0 0.0
  %1408 = vmatpush1.msra.mxu0 %v27
  %1409 = vmatprep.subr.mxu0 0.0
  %1410 = vmatpush1.msra.mxu0 %v28
  %1411 = vmatprep.subr.mxu0 0.0
  %1412 = vmatpush1.msra.mxu0 %v29
  %1413 = vmatprep.subr.mxu0 0.0
  %1414 = vmatpush1.msra.mxu0 %v30
  %1415 = vmatprep.subr.mxu0 0.0
  %1416 = vmatpush1.msra.mxu0 %v31
  %1417 = vmatprep.subr.mxu0 0.0
  %1418 = vmatpush1.msra.mxu0 %v258
  %1419 = vmatprep.subr.mxu0 0.0
  %1420 = vmatpush1.msra.mxu0 0.0
  %1421 = vmatprep.subr.mxu0 0.0
  %1422 = vmatpush1.msra.mxu0 0.0
  %1423 = vmatprep.subr.mxu0 0.0
  %1424 = vmatpush1.msra.mxu0 0.0
  %1425 = vmatprep.subr.mxu0 0.0
  %1426 = vmatpush1.msra.mxu0 0.0
  %1427 = vmatprep.subr.mxu0 0.0
  %1428 = vmatpush1.msra.mxu0 0.0
  %1429 = vmatprep.subr.mxu0 0.0
  %1430 = vmatpush1.msra.mxu0 0.0
  %1431 = vmatprep.subr.mxu0 0.0
  %1432 = vmatpush1.msra.mxu0 0.0
  %1433 = vmatprep.subr.mxu0 0.0
  %1434 = vmatpush1.msra.mxu0 0.0
  %1435 = vmatprep.subr.mxu0 0.0
  %1436 = vmatpush1.msra.mxu0 0.0
  %1437 = vmatprep.subr.mxu0 0.0
  %1438 = vmatpush1.msra.mxu0 0.0
  %1439 = vmatprep.subr.mxu0 0.0
  %1440 = vmatpush1.msra.mxu0 0.0
  %1441 = vmatprep.subr.mxu0 0.0
  %1442 = vmatpush1.msra.mxu0 0.0
  %1443 = vmatprep.subr.mxu0 0.0
  %1444 = vmatpush1.msra.mxu0 0.0
  %1445 = vmatprep.mubr.f32.mxu0 %v1253
  %1446 = vmatmul.mubr.f32.gmra.mrb[0].mxu0 %v1166
  %v1447 = vpop.f32.mrb[0].mxu0
  %v1448 = vadd.f32 %v124, %v1447
  %v1449 = vpop.f32.mrb[0].mxu0
  %1450 = vmatprep.mubr.f32.mxu0 %v1256
  %1451 = vmatmul.mubr.f32.gmra.mrb[0].mxu0 %v1168
  %v1452 = vpop.f32.mrb[0].mxu0
  %v1453 = vadd.f32 %v124, %v1452
  %v1454 = vpop.f32.mrb[0].mxu0
  %1455 = vmatprep.mubr.f32.mxu0 %v1259
  %1456 = vmatmul.mubr.f32.gmra.mrb[0].mxu0 %v1170
  %v1457 = vpop.f32.mrb[0].mxu0
  %v1458 = vadd.f32 %v124, %v1457
  %v1459 = vpop.f32.mrb[0].mxu0
  %1460 = vmatprep.mubr.f32.mxu0 %v1262
  %1461 = vmatmul.mubr.f32.gmra.mrb[0].mxu0 %v1172
  %v1462 = vpop.f32.mrb[0].mxu0
  %v1463 = vadd.f32 %v124, %v1462
  %v1464 = vpop.f32.mrb[0].mxu0
  %1465 = vmatprep.mubr.f32.mxu0 %v1265
  %1466 = vmatmul.mubr.f32.gmra.mrb[0].mxu0 %v1174
  %v1467 = vpop.f32.mrb[0].mxu0
  %v1468 = vadd.f32 %v124, %v1467
  %v1469 = vpop.f32.mrb[0].mxu0
  %1470 = vmatprep.mubr.f32.mxu0 %v1268
  %1471 = vmatmul.mubr.f32.gmra.mrb[0].mxu0 %v1176
  %v1472 = vpop.f32.mrb[0].mxu0
  %v1473 = vadd.f32 %v124, %v1472
  %v1474 = vpop.f32.mrb[0].mxu0
  %1475 = vmatprep.mubr.f32.mxu0 %v1271
  %1476 = vmatmul.mubr.f32.gmra.mrb[0].mxu0 %v1178
  %v1477 = vpop.f32.mrb[0].mxu0
  %v1478 = vadd.f32 %v124, %v1477
  %v1479 = vpop.f32.mrb[0].mxu0
  %1480 = vmatprep.mubr.f32.mxu0 %v1274
  %1481 = vmatmul.mubr.f32.gmra.mrb[0].mxu0 %v1180
  %v1482 = vpop.f32.mrb[0].mxu0
  %v1483 = vadd.f32 %v124, %v1482
  %v1484 = vpop.f32.mrb[0].mxu0
  %1485 = vmatprep.mubr.f32.mxu0 %v1277
  %1486 = vmatmul.mubr.f32.gmra.mrb[0].mxu0 %v1182
  %v1487 = vpop.f32.mrb[0].mxu0
  %v1488 = vadd.f32 %v124, %v1487
  %v1489 = vpop.f32.mrb[0].mxu0
  %1490 = vmatprep.mubr.f32.mxu0 %v1280
  %1491 = vmatmul.mubr.f32.gmra.mrb[0].mxu0 %v1184
  %v1492 = vpop.f32.mrb[0].mxu0
  %v1493 = vadd.f32 %v124, %v1492
  %v1494 = vpop.f32.mrb[0].mxu0
  %1495 = vmatprep.mubr.f32.mxu0 %v1283
  %1496 = vmatmul.mubr.f32.gmra.mrb[0].mxu0 %v1186
  %v1497 = vpop.f32.mrb[0].mxu0
  %v1498 = vadd.f32 %v124, %v1497
  %v1499 = vpop.f32.mrb[0].mxu0
  %1500 = vmatprep.mubr.f32.mxu0 %v1286
  %1501 = vmatmul.mubr.f32.gmra.mrb[0].mxu0 %v1188
  %v1502 = vpop.f32.mrb[0].mxu0
  %v1503 = vadd.f32 %v124, %v1502
  %v1504 = vpop.f32.mrb[0].mxu0
  %1505 = vmatprep.mubr.f32.mxu0 %v1289
  %1506 = vmatmul.mubr.f32.gmra.mrb[0].mxu0 %v1190
  %v1507 = vpop.f32.mrb[0].mxu0
  %v1508 = vadd.f32 %v124, %v1507
  %v1509 = vpop.f32.mrb[0].mxu0
  %1510 = vmatprep.mubr.f32.mxu0 %v1292
  %1511 = vmatmul.mubr.f32.gmra.mrb[0].mxu0 %v1192
  %v1512 = vpop.f32.mrb[0].mxu0
  %v1513 = vadd.f32 %v124, %v1512
  %v1514 = vpop.f32.mrb[0].mxu0
  %1515 = vmatprep.mubr.f32.mxu0 %v1295
  %1516 = vmatmul.mubr.f32.gmra.mrb[0].mxu0 %v1194
  %v1517 = vpop.f32.mrb[0].mxu0
  %v1518 = vadd.f32 %v124, %v1517
  %v1519 = vpop.f32.mrb[0].mxu0
  %1520 = vmatprep.mubr.f32.mxu0 %v1298
  %1521 = vmatmul.mubr.f32.gmra.mrb[0].mxu0 %v1196
  %v1522 = vpop.f32.mrb[0].mxu0
  %v1523 = vadd.f32 %v124, %v1522
  %v1524 = vpop.f32.mrb[0].mxu0
  %1525 = vmatprep.mubr.f32.mxu0 %v1301
  %1526 = vmatmul.mubr.f32.gmra.mrb[0].mxu0 %v1198
  %v1527 = vpop.f32.mrb[0].mxu0
  %v1528 = vadd.f32 %v124, %v1527
  %v1529 = vpop.f32.mrb[0].mxu0
  %1530 = vmatprep.mubr.f32.mxu0 %v1304
  %1531 = vmatmul.mubr.f32.gmra.mrb[0].mxu0 %v1200
  %v1532 = vpop.f32.mrb[0].mxu0
  %v1533 = vadd.f32 %v124, %v1532
  %v1534 = vpop.f32.mrb[0].mxu0
  %1535 = vmatprep.mubr.f32.mxu0 %v1307
  %1536 = vmatmul.mubr.f32.gmra.mrb[0].mxu0 %v1202
  %v1537 = vpop.f32.mrb[0].mxu0
  %v1538 = vadd.f32 %v124, %v1537
  %v1539 = vpop.f32.mrb[0].mxu0
  %1540 = vmatprep.mubr.f32.mxu0 %v1310
  %1541 = vmatmul.mubr.f32.gmra.mrb[0].mxu0 %v1204
  %v1542 = vpop.f32.mrb[0].mxu0
  %v1543 = vadd.f32 %v124, %v1542
  %v1544 = vpop.f32.mrb[0].mxu0
  %1545 = vmatprep.mubr.f32.mxu0 %v1313
  %1546 = vmatmul.mubr.f32.gmra.mrb[0].mxu0 %v1206
  %v1547 = vpop.f32.mrb[0].mxu0
  %v1548 = vadd.f32 %v124, %v1547
  %v1549 = vpop.f32.mrb[0].mxu0
  %1550 = vmatprep.mubr.f32.mxu0 %v1316
  %1551 = vmatmul.mubr.f32.gmra.mrb[0].mxu0 %v1208
  %v1552 = vpop.f32.mrb[0].mxu0
  %v1553 = vadd.f32 %v124, %v1552
  %v1554 = vpop.f32.mrb[0].mxu0
  %1555 = vmatprep.mubr.f32.mxu0 %v1319
  %1556 = vmatmul.mubr.f32.gmra.mrb[0].mxu0 %v1210
  %v1557 = vpop.f32.mrb[0].mxu0
  %v1558 = vadd.f32 %v124, %v1557
  %v1559 = vpop.f32.mrb[0].mxu0
  %1560 = vmatprep.mubr.f32.mxu0 %v1322
  %1561 = vmatmul.mubr.f32.gmra.mrb[0].mxu0 %v1212
  %v1562 = vpop.f32.mrb[0].mxu0
  %v1563 = vadd.f32 %v124, %v1562
  %v1564 = vpop.f32.mrb[0].mxu0
  %1565 = vmatprep.mubr.f32.mxu0 %v1325
  %1566 = vmatmul.mubr.f32.gmra.mrb[0].mxu0 %v1214
  %v1567 = vpop.f32.mrb[0].mxu0
  %v1568 = vadd.f32 %v124, %v1567
  %v1569 = vpop.f32.mrb[0].mxu0
  %1570 = vmatprep.mubr.f32.mxu0 %v1328
  %1571 = vmatmul.mubr.f32.gmra.mrb[0].mxu0 %v1216
  %v1572 = vpop.f32.mrb[0].mxu0
  %v1573 = vadd.f32 %v124, %v1572
  %v1574 = vpop.f32.mrb[0].mxu0
  %1575 = vmatprep.mubr.f32.mxu0 %v1331
  %1576 = vmatmul.mubr.f32.gmra.mrb[0].mxu0 %v1218
  %v1577 = vpop.f32.mrb[0].mxu0
  %v1578 = vadd.f32 %v124, %v1577
  %v1579 = vpop.f32.mrb[0].mxu0
  %1580 = vmatprep.mubr.f32.mxu0 %v1334
  %1581 = vmatmul.mubr.f32.gmra.mrb[0].mxu0 %v1220
  %v1582 = vpop.f32.mrb[0].mxu0
  %v1583 = vadd.f32 %v124, %v1582
  %v1584 = vpop.f32.mrb[0].mxu0
  %1585 = vmatprep.mubr.f32.mxu0 %v1337
  %1586 = vmatmul.mubr.f32.gmra.mrb[0].mxu0 %v1222
  %v1587 = vpop.f32.mrb[0].mxu0
  %v1588 = vadd.f32 %v124, %v1587
  %v1589 = vpop.f32.mrb[0].mxu0
  %1590 = vmatprep.mubr.f32.mxu0 %v1340
  %1591 = vmatmul.mubr.f32.gmra.mrb[0].mxu0 %v1224
  %v1592 = vpop.f32.mrb[0].mxu0
  %v1593 = vadd.f32 %v124, %v1592
  %v1594 = vpop.f32.mrb[0].mxu0
  %1595 = vmatprep.mubr.f32.mxu0 %v1343
  %1596 = vmatmul.mubr.f32.gmra.mrb[0].mxu0 %v1226
  %v1597 = vpop.f32.mrb[0].mxu0
  %v1598 = vadd.f32 %v124, %v1597
  %v1599 = vpop.f32.mrb[0].mxu0
  %1600 = vmatprep.mubr.f32.mxu0 %v1346
  %1601 = vmatmul.mubr.f32.gmra.mrb[0].mxu0 %v1228
  %v1602 = vpop.f32.mrb[0].mxu0
  %v1603 = vadd.f32 %v124, %v1602
  %v1604 = vpop.f32.mrb[0].mxu0
  %1605 = vmatprep.mubr.f32.mxu0 %v1349
  %1606 = vmatmul.mubr.f32.gmra.mrb[0].mxu0 %v1230
  %v1607 = vpop.f32.mrb[0].mxu0
  %v1608 = vadd.f32 %v124, %v1607
  %v1609 = vpop.f32.mrb[0].mxu0
  %1610 = vmatprep.mubr.f32.mxu0 %v1352
  %1611 = vmatmul.mubr.f32.gmra.mrb[0].mxu0 %v1232
  %v1612 = vpop.f32.mrb[0].mxu0
  %v1613 = vadd.f32 %v124, %v1612
  %v1614 = vpop.f32.mrb[0].mxu0
  %1615 = vmatprep.mubr.f32.mxu0 %v1355
  %1616 = vmatmul.mubr.f32.gmra.mrb[0].mxu0 %v1234
  %v1617 = vpop.f32.mrb[0].mxu0
  %v1618 = vadd.f32 %v124, %v1617
  %v1619 = vpop.f32.mrb[0].mxu0
  %1620 = vmatprep.mubr.f32.mxu0 %v1358
  %1621 = vmatmul.mubr.f32.gmra.mrb[0].mxu0 %v1236
  %v1622 = vpop.f32.mrb[0].mxu0
  %v1623 = vadd.f32 %v124, %v1622
  %v1624 = vpop.f32.mrb[0].mxu0
  %1625 = vmatprep.mubr.f32.mxu0 %v1361
  %1626 = vmatmul.mubr.f32.gmra.mrb[0].mxu0 %v1238
  %v1627 = vpop.f32.mrb[0].mxu0
  %v1628 = vadd.f32 %v124, %v1627
  %v1629 = vpop.f32.mrb[0].mxu0
  %1630 = vmatprep.mubr.f32.mxu0 %v1364
  %1631 = vmatmul.mubr.f32.gmra.mrb[0].mxu0 %v1240
  %v1632 = vpop.f32.mrb[0].mxu0
  %v1633 = vadd.f32 %v124, %v1632
  %v1634 = vpop.f32.mrb[0].mxu0
  %1635 = vmatprep.mubr.f32.mxu0 %v1367
  %1636 = vmatmul.mubr.f32.gmra.mrb[0].mxu0 %v1242
  %v1637 = vpop.f32.mrb[0].mxu0
  %v1638 = vadd.f32 %v124, %v1637
  %v1639 = vpop.f32.mrb[0].mxu0
  %1640 = vmatprep.mubr.f32.mxu0 %v1370
  %1641 = vmatmul.mubr.f32.gmra.mrb[0].mxu0 %v1244
  %v1642 = vpop.f32.mrb[0].mxu0
  %v1643 = vadd.f32 %v124, %v1642
  %v1644 = vpop.f32.mrb[0].mxu0
  %1645 = vmatprep.mubr.f32.mxu0 %v1373
  %1646 = vmatmul.mubr.f32.gmra.mrb[0].mxu0 %v1246
  %v1647 = vpop.f32.mrb[0].mxu0
  %v1648 = vadd.f32 %v124, %v1647
  %v1649 = vpop.f32.mrb[0].mxu0
  %1650 = vmatprep.mubr.f32.mxu0 %v1376
  %1651 = vmatmul.mubr.f32.gmra.mrb[0].mxu0 %v1248
  %v1652 = vpop.f32.mrb[0].mxu0
  %v1653 = vadd.f32 %v124, %v1652
  %v1654 = vpop.f32.mrb[0].mxu0
  %1655 = vmatprep.mubr.f32.mxu0 %v1379
  %1656 = vmatmul.mubr.f32.gmra.mrb[0].mxu0 %v1250
  %v1657 = vpop.f32.mrb[0].mxu0
  %v1658 = vadd.f32 %v124, %v1657
  %v1659 = vpop.f32.mrb[0].mxu0
  %1660 = vdwg.mxu0
  %v1661 = vmax.f32 %v1448, 0.0
  %v1662 = vmax.f32 %v1453, 0.0
  %v1663 = vmax.f32 %v1458, 0.0
  %v1664 = vmax.f32 %v1463, 0.0
  %v1665 = vmax.f32 %v1468, 0.0
  %v1666 = vmax.f32 %v1473, 0.0
  %v1667 = vmax.f32 %v1478, 0.0
  %v1668 = vmax.f32 %v1483, 0.0
  %v1669 = vmax.f32 %v1488, 0.0
  %v1670 = vmax.f32 %v1493, 0.0
  %v1671 = vmax.f32 %v1498, 0.0
  %v1672 = vmax.f32 %v1503, 0.0
  %v1673 = vmax.f32 %v1508, 0.0
  %v1674 = vmax.f32 %v1513, 0.0
  %v1675 = vmax.f32 %v1518, 0.0
  %v1676 = vmax.f32 %v1523, 0.0
  %v1677 = vmax.f32 %v1528, 0.0
  %v1678 = vmax.f32 %v1533, 0.0
  %v1679 = vmax.f32 %v1538, 0.0
  %v1680 = vmax.f32 %v1543, 0.0
  %v1681 = vmax.f32 %v1548, 0.0
  %v1682 = vmax.f32 %v1553, 0.0
  %v1683 = vmax.f32 %v1558, 0.0
  %v1684 = vmax.f32 %v1563, 0.0
  %v1685 = vmax.f32 %v1568, 0.0
  %v1686 = vmax.f32 %v1573, 0.0
  %v1687 = vmax.f32 %v1578, 0.0
  %v1688 = vmax.f32 %v1583, 0.0
  %v1689 = vmax.f32 %v1588, 0.0
  %v1690 = vmax.f32 %v1593, 0.0
  %v1691 = vmax.f32 %v1598, 0.0
  %v1692 = vmax.f32 %v1603, 0.0
  %v1693 = vmax.f32 %v1608, 0.0
  %v1694 = vmax.f32 %v1613, 0.0
  %v1695 = vmax.f32 %v1618, 0.0
  %v1696 = vmax.f32 %v1623, 0.0
  %v1697 = vmax.f32 %v1628, 0.0
  %v1698 = vmax.f32 %v1633, 0.0
  %v1699 = vmax.f32 %v1638, 0.0
  %v1700 = vmax.f32 %v1643, 0.0
  %v1701 = vmax.f32 %v1648, 0.0
  %v1702 = vmax.f32 %v1653, 0.0
  %v1703 = vmax.f32 %v1658, 0.0
  %v1704 = vmax.f32 %v1122, %v1661
  %v1705 = vmax.f32 %v1123, %v1662
  %v1706 = vmax.f32 %v1124, %v1663
  %v1707 = vmax.f32 %v1125, %v1664
  %v1708 = vmax.f32 %v1126, %v1665
  %v1709 = vmax.f32 %v1127, %v1666
  %v1710 = vmax.f32 %v1128, %v1667
  %v1711 = vmax.f32 %v1129, %v1668
  %v1712 = vmax.f32 %v1130, %v1669
  %v1713 = vmax.f32 %v1131, %v1670
  %v1714 = vmax.f32 %v1132, %v1671
  %v1715 = vmax.f32 %v1133, %v1672
  %v1716 = vmax.f32 %v1134, %v1673
  %v1717 = vmax.f32 %v1135, %v1674
  %v1718 = vmax.f32 %v1136, %v1675
  %v1719 = vmax.f32 %v1137, %v1676
  %v1720 = vmax.f32 %v1138, %v1677
  %v1721 = vmax.f32 %v1139, %v1678
  %v1722 = vmax.f32 %v1140, %v1679
  %v1723 = vmax.f32 %v1141, %v1680
  %v1724 = vmax.f32 %v1142, %v1681
  %v1725 = vmax.f32 %v1143, %v1682
  %v1726 = vmax.f32 %v1144, %v1683
  %v1727 = vmax.f32 %v1145, %v1684
  %v1728 = vmax.f32 %v1146, %v1685
  %v1729 = vmax.f32 %v1147, %v1686
  %v1730 = vmax.f32 %v1148, %v1687
  %v1731 = vmax.f32 %v1149, %v1688
  %v1732 = vmax.f32 %v1150, %v1689
  %v1733 = vmax.f32 %v1151, %v1690
  %v1734 = vmax.f32 %v1152, %v1691
  %v1735 = vmax.f32 %v1153, %v1692
  %v1736 = vmax.f32 %v1154, %v1693
  %v1737 = vmax.f32 %v1155, %v1694
  %v1738 = vmax.f32 %v1156, %v1695
  %v1739 = vmax.f32 %v1157, %v1696
  %v1740 = vmax.f32 %v1158, %v1697
  %v1741 = vmax.f32 %v1159, %v1698
  %v1742 = vmax.f32 %v1160, %v1699
  %v1743 = vmax.f32 %v1161, %v1700
  %v1744 = vmax.f32 %v1162, %v1701
  %v1745 = vmax.f32 %v1163, %v1702
  %v1746 = vmax.f32 %v1164, %v1703
  %s1747 = scalar_lea.vmem %s0, 2064
  %v1748 = vld [vmem:[%s1747] sm:$0xff]
  %v1749 = vld [vmem:[%s1747 + $0x8] sm:$0xff]
  %v1750 = vld [vmem:[%s1747 + $0x10] sm:$0xff]
  %v1751 = vld [vmem:[%s1747 + $0x18] sm:$0xff]
  %v1752 = vld [vmem:[%s1747 + $0x20] sm:$0xff]
  %v1753 = vld [vmem:[%s1747 + $0x28] sm:$0xff]
  %v1754 = vld [vmem:[%s1747 + $0x30] sm:$0xff]
  %v1755 = vld [vmem:[%s1747 + $0x38] sm:$0xff]
  %v1756 = vld [vmem:[%s1747 + $0x40] sm:$0xff]
  %v1757 = vld [vmem:[%s1747 + $0x48] sm:$0xff]
  %v1758 = vld [vmem:[%s1747 + $0x50] sm:$0xff]
  %v1759 = vld [vmem:[%s1747 + $0x58] sm:$0xff]
  %v1760 = vld [vmem:[%s1747 + $0x60] sm:$0xff]
  %v1761 = vld [vmem:[%s1747 + $0x68] sm:$0xff]
  %v1762 = vld [vmem:[%s1747 + $0x70] sm:$0xff]
  %v1763 = vld [vmem:[%s1747 + $0x78] sm:$0xff]
  %v1764 = vld [vmem:[%s1747 + $0x80] sm:$0xff]
  %v1765 = vld [vmem:[%s1747 + $0x88] sm:$0xff]
  %v1766 = vld [vmem:[%s1747 + $0x90] sm:$0xff]
  %v1767 = vld [vmem:[%s1747 + $0x98] sm:$0xff]
  %v1768 = vld [vmem:[%s1747 + $0xa0] sm:$0xff]
  %v1769 = vld [vmem:[%s1747 + $0xa8] sm:$0xff]
  %v1770 = vld [vmem:[%s1747 + $0xb0] sm:$0xff]
  %v1771 = vld [vmem:[%s1747 + $0xb8] sm:$0xff]
  %v1772 = vld [vmem:[%s1747 + $0xc0] sm:$0xff]
  %v1773 = vld [vmem:[%s1747 + $0xc8] sm:$0xff]
  %v1774 = vld [vmem:[%s1747 + $0xd0] sm:$0xff]
  %v1775 = vld [vmem:[%s1747 + $0xd8] sm:$0xff]
  %v1776 = vld [vmem:[%s1747 + $0xe0] sm:$0xff]
  %v1777 = vld [vmem:[%s1747 + $0xe8] sm:$0xff]
  %v1778 = vld [vmem:[%s1747 + $0xf0] sm:$0xff]
  %v1779 = vld [vmem:[%s1747 + $0xf8] sm:$0xff]
  %v1780 = vld [vmem:[%s1747 + $0x100] sm:$0xff]
  %v1781 = vld [vmem:[%s1747 + $0x108] sm:$0xff]
  %v1782 = vld [vmem:[%s1747 + $0x110] sm:$0xff]
  %v1783 = vld [vmem:[%s1747 + $0x118] sm:$0xff]
  %v1784 = vld [vmem:[%s1747 + $0x120] sm:$0xff]
  %v1785 = vld [vmem:[%s1747 + $0x128] sm:$0xff]
  %v1786 = vld [vmem:[%s1747 + $0x130] sm:$0xff]
  %v1787 = vld [vmem:[%s1747 + $0x138] sm:$0xff]
  %v1788 = vld [vmem:[%s1747 + $0x140] sm:$0xff]
  %v1789 = vld [vmem:[%s1747 + $0x148] sm:$0xff]
  %v1790 = vld [vmem:[%s1747 + $0x150] sm:$0xff]
  %v1791 = vld [vmem:[%s1747 + $0x158] sm:$0xff]
  %v1792 = vld [vmem:[%s1747 + $0x160] sm:$0xff]
  %v1793 = vld [vmem:[%s1747 + $0x168] sm:$0xff]
  %v1794 = vld [vmem:[%s1747 + $0x170] sm:$0xff]
  %v1795 = vld [vmem:[%s1747 + $0x178] sm:$0xff]
  %v1796 = vld [vmem:[%s1747 + $0x180] sm:$0xff]
  %v1797 = vld [vmem:[%s1747 + $0x188] sm:$0xff]
  %v1798 = vld [vmem:[%s1747 + $0x190] sm:$0xff]
  %v1799 = vld [vmem:[%s1747 + $0x198] sm:$0xff]
  %v1800 = vld [vmem:[%s1747 + $0x1a0] sm:$0xff]
  %v1801 = vld [vmem:[%s1747 + $0x1a8] sm:$0xff]
  %v1802 = vld [vmem:[%s1747 + $0x1b0] sm:$0xff]
  %v1803 = vld [vmem:[%s1747 + $0x1b8] sm:$0xff]
  %v1804 = vld [vmem:[%s1747 + $0x1c0] sm:$0xff]
  %v1805 = vld [vmem:[%s1747 + $0x1c8] sm:$0xff]
  %v1806 = vld [vmem:[%s1747 + $0x1d0] sm:$0xff]
  %v1807 = vld [vmem:[%s1747 + $0x1d8] sm:$0xff]
  %v1808 = vld [vmem:[%s1747 + $0x1e0] sm:$0xff]
  %v1809 = vld [vmem:[%s1747 + $0x1e8] sm:$0xff]
  %v1810 = vld [vmem:[%s1747 + $0x1f0] sm:$0xff]
  %v1811 = vld [vmem:[%s1747 + $0x1f8] sm:$0xff]
  %v1812 = vld [vmem:[%s1747 + $0x200] sm:$0xff]
  %v1813 = vld [vmem:[%s1747 + $0x208] sm:$0xff]
  %v1814 = vld [vmem:[%s1747 + $0x210] sm:$0xff]
  %v1815 = vld [vmem:[%s1747 + $0x218] sm:$0xff]
  %v1816 = vld [vmem:[%s1747 + $0x220] sm:$0xff]
  %v1817 = vld [vmem:[%s1747 + $0x228] sm:$0xff]
  %v1818 = vld [vmem:[%s1747 + $0x230] sm:$0xff]
  %v1819 = vld [vmem:[%s1747 + $0x238] sm:$0xff]
  %v1820 = vld [vmem:[%s1747 + $0x240] sm:$0xff]
  %v1821 = vld [vmem:[%s1747 + $0x248] sm:$0xff]
  %v1822 = vld [vmem:[%s1747 + $0x250] sm:$0xff]
  %v1823 = vld [vmem:[%s1747 + $0x258] sm:$0xff]
  %v1824 = vld [vmem:[%s1747 + $0x260] sm:$0xff]
  %v1825 = vld [vmem:[%s1747 + $0x268] sm:$0xff]
  %v1826 = vld [vmem:[%s1747 + $0x270] sm:$0xff]
  %v1827 = vld [vmem:[%s1747 + $0x278] sm:$0xff]
  %v1828 = vld [vmem:[%s1747 + $0x280] sm:$0xff]
  %v1829 = vld [vmem:[%s1747 + $0x288] sm:$0xff]
  %v1830 = vld [vmem:[%s1747 + $0x290] sm:$0xff]
  %v1831 = vld [vmem:[%s1747 + $0x298] sm:$0xff]
  %v1832 = vld [vmem:[%s1747 + $0x2a0] sm:$0x3]
  %v1833 = vld [vmem:[%s1747 + $0x2a8] sm:$0x3]
  %v1835 = vsel %vm126, %v1749, 0
  %v1838 = vsel %vm126, %v1751, 0
  %v1841 = vsel %vm126, %v1753, 0
  %v1844 = vsel %vm126, %v1755, 0
  %v1847 = vsel %vm126, %v1757, 0
  %v1850 = vsel %vm126, %v1759, 0
  %v1853 = vsel %vm126, %v1761, 0
  %v1856 = vsel %vm126, %v1763, 0
  %v1859 = vsel %vm126, %v1765, 0
  %v1862 = vsel %vm126, %v1767, 0
  %v1865 = vsel %vm126, %v1769, 0
  %v1868 = vsel %vm126, %v1771, 0
  %v1871 = vsel %vm126, %v1773, 0
  %v1874 = vsel %vm126, %v1775, 0
  %v1877 = vsel %vm126, %v1777, 0
  %v1880 = vsel %vm126, %v1779, 0
  %v1883 = vsel %vm126, %v1781, 0
  %v1886 = vsel %vm126, %v1783, 0
  %v1889 = vsel %vm126, %v1785, 0
  %v1892 = vsel %vm126, %v1787, 0
  %v1895 = vsel %vm126, %v1789, 0
  %v1898 = vsel %vm126, %v1791, 0
  %v1901 = vsel %vm126, %v1793, 0
  %v1904 = vsel %vm126, %v1795, 0
  %v1907 = vsel %vm126, %v1797, 0
  %v1910 = vsel %vm126, %v1799, 0
  %v1913 = vsel %vm126, %v1801, 0
  %v1916 = vsel %vm126, %v1803, 0
  %v1919 = vsel %vm126, %v1805, 0
  %v1922 = vsel %vm126, %v1807, 0
  %v1925 = vsel %vm126, %v1809, 0
  %v1928 = vsel %vm126, %v1811, 0
  %v1931 = vsel %vm126, %v1813, 0
  %v1934 = vsel %vm126, %v1815, 0
  %v1937 = vsel %vm126, %v1817, 0
  %v1940 = vsel %vm126, %v1819, 0
  %v1943 = vsel %vm126, %v1821, 0
  %v1946 = vsel %vm126, %v1823, 0
  %v1949 = vsel %vm126, %v1825, 0
  %v1952 = vsel %vm126, %v1827, 0
  %v1955 = vsel %vm126, %v1829, 0
  %v1958 = vsel %vm126, %v1831, 0
  %v1961 = vsel %vm126, %v1833, 0
  %1963 = vmatprep.subr.mxu0 0.0
  %1964 = vmatpush1.msra.mxu0 %v14
  %1965 = vmatprep.subr.mxu0 0.0
  %1966 = vmatpush1.msra.mxu0 %v15
  %1967 = vmatprep.subr.mxu0 0.0
  %1968 = vmatpush1.msra.mxu0 %v16
  %1969 = vmatprep.subr.mxu0 0.0
  %1970 = vmatpush1.msra.mxu0 %v17
  %1971 = vmatprep.subr.mxu0 0.0
  %1972 = vmatpush1.msra.mxu0 %v18
  %1973 = vmatprep.subr.mxu0 0.0
  %1974 = vmatpush1.msra.mxu0 %v19
  %1975 = vmatprep.subr.mxu0 0.0
  %1976 = vmatpush1.msra.mxu0 %v20
  %1977 = vmatprep.subr.mxu0 0.0
  %1978 = vmatpush1.msra.mxu0 %v21
  %1979 = vmatprep.subr.mxu0 0.0
  %1980 = vmatpush1.msra.mxu0 %v22
  %1981 = vmatprep.subr.mxu0 0.0
  %1982 = vmatpush1.msra.mxu0 %v23
  %1983 = vmatprep.subr.mxu0 0.0
  %1984 = vmatpush1.msra.mxu0 %v24
  %1985 = vmatprep.subr.mxu0 0.0
  %1986 = vmatpush1.msra.mxu0 %v25
  %1987 = vmatprep.subr.mxu0 0.0
  %1988 = vmatpush1.msra.mxu0 %v26
  %1989 = vmatprep.subr.mxu0 0.0
  %1990 = vmatpush1.msra.mxu0 %v27
  %1991 = vmatprep.subr.mxu0 0.0
  %1992 = vmatpush1.msra.mxu0 %v28
  %1993 = vmatprep.subr.mxu0 0.0
  %1994 = vmatpush1.msra.mxu0 %v29
  %1995 = vmatprep.subr.mxu0 0.0
  %1996 = vmatpush1.msra.mxu0 %v30
  %1997 = vmatprep.subr.mxu0 0.0
  %1998 = vmatpush1.msra.mxu0 %v31
  %1999 = vmatprep.subr.mxu0 0.0
  %2000 = vmatpush1.msra.mxu0 %v258
  %2001 = vmatprep.subr.mxu0 0.0
  %2002 = vmatpush1.msra.mxu0 0.0
  %2003 = vmatprep.subr.mxu0 0.0
  %2004 = vmatpush1.msra.mxu0 0.0
  %2005 = vmatprep.subr.mxu0 0.0
  %2006 = vmatpush1.msra.mxu0 0.0
  %2007 = vmatprep.subr.mxu0 0.0
  %2008 = vmatpush1.msra.mxu0 0.0
  %2009 = vmatprep.subr.mxu0 0.0
  %2010 = vmatpush1.msra.mxu0 0.0
  %2011 = vmatprep.subr.mxu0 0.0
  %2012 = vmatpush1.msra.mxu0 0.0
  %2013 = vmatprep.subr.mxu0 0.0
  %2014 = vmatpush1.msra.mxu0 0.0
  %2015 = vmatprep.subr.mxu0 0.0
  %2016 = vmatpush1.msra.mxu0 0.0
  %2017 = vmatprep.subr.mxu0 0.0
  %2018 = vmatpush1.msra.mxu0 0.0
  %2019 = vmatprep.subr.mxu0 0.0
  %2020 = vmatpush1.msra.mxu0 0.0
  %2021 = vmatprep.subr.mxu0 0.0
  %2022 = vmatpush1.msra.mxu0 0.0
  %2023 = vmatprep.subr.mxu0 0.0
  %2024 = vmatpush1.msra.mxu0 0.0
  %2025 = vmatprep.subr.mxu0 0.0
  %2026 = vmatpush1.msra.mxu0 0.0
  %2027 = vmatprep.mubr.f32.mxu0 %v1835
  %2028 = vmatmul.mubr.f32.gmra.mrb[0].mxu0 %v1748
  %v2029 = vpop.f32.mrb[0].mxu0
  %v2030 = vadd.f32 %v124, %v2029
  %v2031 = vpop.f32.mrb[0].mxu0
  %2032 = vmatprep.mubr.f32.mxu0 %v1838
  %2033 = vmatmul.mubr.f32.gmra.mrb[0].mxu0 %v1750
  %v2034 = vpop.f32.mrb[0].mxu0
  %v2035 = vadd.f32 %v124, %v2034
  %v2036 = vpop.f32.mrb[0].mxu0
  %2037 = vmatprep.mubr.f32.mxu0 %v1841
  %2038 = vmatmul.mubr.f32.gmra.mrb[0].mxu0 %v1752
  %v2039 = vpop.f32.mrb[0].mxu0
  %v2040 = vadd.f32 %v124, %v2039
  %v2041 = vpop.f32.mrb[0].mxu0
  %2042 = vmatprep.mubr.f32.mxu0 %v1844
  %2043 = vmatmul.mubr.f32.gmra.mrb[0].mxu0 %v1754
  %v2044 = vpop.f32.mrb[0].mxu0
  %v2045 = vadd.f32 %v124, %v2044
  %v2046 = vpop.f32.mrb[0].mxu0
  %2047 = vmatprep.mubr.f32.mxu0 %v1847
  %2048 = vmatmul.mubr.f32.gmra.mrb[0].mxu0 %v1756
  %v2049 = vpop.f32.mrb[0].mxu0
  %v2050 = vadd.f32 %v124, %v2049
  %v2051 = vpop.f32.mrb[0].mxu0
  %2052 = vmatprep.mubr.f32.mxu0 %v1850
  %2053 = vmatmul.mubr.f32.gmra.mrb[0].mxu0 %v1758
  %v2054 = vpop.f32.mrb[0].mxu0
  %v2055 = vadd.f32 %v124, %v2054
  %v2056 = vpop.f32.mrb[0].mxu0
  %2057 = vmatprep.mubr.f32.mxu0 %v1853
  %2058 = vmatmul.mubr.f32.gmra.mrb[0].mxu0 %v1760
  %v2059 = vpop.f32.mrb[0].mxu0
  %v2060 = vadd.f32 %v124, %v2059
  %v2061 = vpop.f32.mrb[0].mxu0
  %2062 = vmatprep.mubr.f32.mxu0 %v1856
  %2063 = vmatmul.mubr.f32.gmra.mrb[0].mxu0 %v1762
  %v2064 = vpop.f32.mrb[0].mxu0
  %v2065 = vadd.f32 %v124, %v2064
  %v2066 = vpop.f32.mrb[0].mxu0
  %2067 = vmatprep.mubr.f32.mxu0 %v1859
  %2068 = vmatmul.mubr.f32.gmra.mrb[0].mxu0 %v1764
  %v2069 = vpop.f32.mrb[0].mxu0
  %v2070 = vadd.f32 %v124, %v2069
  %v2071 = vpop.f32.mrb[0].mxu0
  %2072 = vmatprep.mubr.f32.mxu0 %v1862
  %2073 = vmatmul.mubr.f32.gmra.mrb[0].mxu0 %v1766
  %v2074 = vpop.f32.mrb[0].mxu0
  %v2075 = vadd.f32 %v124, %v2074
  %v2076 = vpop.f32.mrb[0].mxu0
  %2077 = vmatprep.mubr.f32.mxu0 %v1865
  %2078 = vmatmul.mubr.f32.gmra.mrb[0].mxu0 %v1768
  %v2079 = vpop.f32.mrb[0].mxu0
  %v2080 = vadd.f32 %v124, %v2079
  %v2081 = vpop.f32.mrb[0].mxu0
  %2082 = vmatprep.mubr.f32.mxu0 %v1868
  %2083 = vmatmul.mubr.f32.gmra.mrb[0].mxu0 %v1770
  %v2084 = vpop.f32.mrb[0].mxu0
  %v2085 = vadd.f32 %v124, %v2084
  %v2086 = vpop.f32.mrb[0].mxu0
  %2087 = vmatprep.mubr.f32.mxu0 %v1871
  %2088 = vmatmul.mubr.f32.gmra.mrb[0].mxu0 %v1772
  %v2089 = vpop.f32.mrb[0].mxu0
  %v2090 = vadd.f32 %v124, %v2089
  %v2091 = vpop.f32.mrb[0].mxu0
  %2092 = vmatprep.mubr.f32.mxu0 %v1874
  %2093 = vmatmul.mubr.f32.gmra.mrb[0].mxu0 %v1774
  %v2094 = vpop.f32.mrb[0].mxu0
  %v2095 = vadd.f32 %v124, %v2094
  %v2096 = vpop.f32.mrb[0].mxu0
  %2097 = vmatprep.mubr.f32.mxu0 %v1877
  %2098 = vmatmul.mubr.f32.gmra.mrb[0].mxu0 %v1776
  %v2099 = vpop.f32.mrb[0].mxu0
  %v2100 = vadd.f32 %v124, %v2099
  %v2101 = vpop.f32.mrb[0].mxu0
  %2102 = vmatprep.mubr.f32.mxu0 %v1880
  %2103 = vmatmul.mubr.f32.gmra.mrb[0].mxu0 %v1778
  %v2104 = vpop.f32.mrb[0].mxu0
  %v2105 = vadd.f32 %v124, %v2104
  %v2106 = vpop.f32.mrb[0].mxu0
  %2107 = vmatprep.mubr.f32.mxu0 %v1883
  %2108 = vmatmul.mubr.f32.gmra.mrb[0].mxu0 %v1780
  %v2109 = vpop.f32.mrb[0].mxu0
  %v2110 = vadd.f32 %v124, %v2109
  %v2111 = vpop.f32.mrb[0].mxu0
  %2112 = vmatprep.mubr.f32.mxu0 %v1886
  %2113 = vmatmul.mubr.f32.gmra.mrb[0].mxu0 %v1782
  %v2114 = vpop.f32.mrb[0].mxu0
  %v2115 = vadd.f32 %v124, %v2114
  %v2116 = vpop.f32.mrb[0].mxu0
  %2117 = vmatprep.mubr.f32.mxu0 %v1889
  %2118 = vmatmul.mubr.f32.gmra.mrb[0].mxu0 %v1784
  %v2119 = vpop.f32.mrb[0].mxu0
  %v2120 = vadd.f32 %v124, %v2119
  %v2121 = vpop.f32.mrb[0].mxu0
  %2122 = vmatprep.mubr.f32.mxu0 %v1892
  %2123 = vmatmul.mubr.f32.gmra.mrb[0].mxu0 %v1786
  %v2124 = vpop.f32.mrb[0].mxu0
  %v2125 = vadd.f32 %v124, %v2124
  %v2126 = vpop.f32.mrb[0].mxu0
  %2127 = vmatprep.mubr.f32.mxu0 %v1895
  %2128 = vmatmul.mubr.f32.gmra.mrb[0].mxu0 %v1788
  %v2129 = vpop.f32.mrb[0].mxu0
  %v2130 = vadd.f32 %v124, %v2129
  %v2131 = vpop.f32.mrb[0].mxu0
  %2132 = vmatprep.mubr.f32.mxu0 %v1898
  %2133 = vmatmul.mubr.f32.gmra.mrb[0].mxu0 %v1790
  %v2134 = vpop.f32.mrb[0].mxu0
  %v2135 = vadd.f32 %v124, %v2134
  %v2136 = vpop.f32.mrb[0].mxu0
  %2137 = vmatprep.mubr.f32.mxu0 %v1901
  %2138 = vmatmul.mubr.f32.gmra.mrb[0].mxu0 %v1792
  %v2139 = vpop.f32.mrb[0].mxu0
  %v2140 = vadd.f32 %v124, %v2139
  %v2141 = vpop.f32.mrb[0].mxu0
  %2142 = vmatprep.mubr.f32.mxu0 %v1904
  %2143 = vmatmul.mubr.f32.gmra.mrb[0].mxu0 %v1794
  %v2144 = vpop.f32.mrb[0].mxu0
  %v2145 = vadd.f32 %v124, %v2144
  %v2146 = vpop.f32.mrb[0].mxu0
  %2147 = vmatprep.mubr.f32.mxu0 %v1907
  %2148 = vmatmul.mubr.f32.gmra.mrb[0].mxu0 %v1796
  %v2149 = vpop.f32.mrb[0].mxu0
  %v2150 = vadd.f32 %v124, %v2149
  %v2151 = vpop.f32.mrb[0].mxu0
  %2152 = vmatprep.mubr.f32.mxu0 %v1910
  %2153 = vmatmul.mubr.f32.gmra.mrb[0].mxu0 %v1798
  %v2154 = vpop.f32.mrb[0].mxu0
  %v2155 = vadd.f32 %v124, %v2154
  %v2156 = vpop.f32.mrb[0].mxu0
  %2157 = vmatprep.mubr.f32.mxu0 %v1913
  %2158 = vmatmul.mubr.f32.gmra.mrb[0].mxu0 %v1800
  %v2159 = vpop.f32.mrb[0].mxu0
  %v2160 = vadd.f32 %v124, %v2159
  %v2161 = vpop.f32.mrb[0].mxu0
  %2162 = vmatprep.mubr.f32.mxu0 %v1916
  %2163 = vmatmul.mubr.f32.gmra.mrb[0].mxu0 %v1802
  %v2164 = vpop.f32.mrb[0].mxu0
  %v2165 = vadd.f32 %v124, %v2164
  %v2166 = vpop.f32.mrb[0].mxu0
  %2167 = vmatprep.mubr.f32.mxu0 %v1919
  %2168 = vmatmul.mubr.f32.gmra.mrb[0].mxu0 %v1804
  %v2169 = vpop.f32.mrb[0].mxu0
  %v2170 = vadd.f32 %v124, %v2169
  %v2171 = vpop.f32.mrb[0].mxu0
  %2172 = vmatprep.mubr.f32.mxu0 %v1922
  %2173 = vmatmul.mubr.f32.gmra.mrb[0].mxu0 %v1806
  %v2174 = vpop.f32.mrb[0].mxu0
  %v2175 = vadd.f32 %v124, %v2174
  %v2176 = vpop.f32.mrb[0].mxu0
  %2177 = vmatprep.mubr.f32.mxu0 %v1925
  %2178 = vmatmul.mubr.f32.gmra.mrb[0].mxu0 %v1808
  %v2179 = vpop.f32.mrb[0].mxu0
  %v2180 = vadd.f32 %v124, %v2179
  %v2181 = vpop.f32.mrb[0].mxu0
  %2182 = vmatprep.mubr.f32.mxu0 %v1928
  %2183 = vmatmul.mubr.f32.gmra.mrb[0].mxu0 %v1810
  %v2184 = vpop.f32.mrb[0].mxu0
  %v2185 = vadd.f32 %v124, %v2184
  %v2186 = vpop.f32.mrb[0].mxu0
  %2187 = vmatprep.mubr.f32.mxu0 %v1931
  %2188 = vmatmul.mubr.f32.gmra.mrb[0].mxu0 %v1812
  %v2189 = vpop.f32.mrb[0].mxu0
  %v2190 = vadd.f32 %v124, %v2189
  %v2191 = vpop.f32.mrb[0].mxu0
  %2192 = vmatprep.mubr.f32.mxu0 %v1934
  %2193 = vmatmul.mubr.f32.gmra.mrb[0].mxu0 %v1814
  %v2194 = vpop.f32.mrb[0].mxu0
  %v2195 = vadd.f32 %v124, %v2194
  %v2196 = vpop.f32.mrb[0].mxu0
  %2197 = vmatprep.mubr.f32.mxu0 %v1937
  %2198 = vmatmul.mubr.f32.gmra.mrb[0].mxu0 %v1816
  %v2199 = vpop.f32.mrb[0].mxu0
  %v2200 = vadd.f32 %v124, %v2199
  %v2201 = vpop.f32.mrb[0].mxu0
  %2202 = vmatprep.mubr.f32.mxu0 %v1940
  %2203 = vmatmul.mubr.f32.gmra.mrb[0].mxu0 %v1818
  %v2204 = vpop.f32.mrb[0].mxu0
  %v2205 = vadd.f32 %v124, %v2204
  %v2206 = vpop.f32.mrb[0].mxu0
  %2207 = vmatprep.mubr.f32.mxu0 %v1943
  %2208 = vmatmul.mubr.f32.gmra.mrb[0].mxu0 %v1820
  %v2209 = vpop.f32.mrb[0].mxu0
  %v2210 = vadd.f32 %v124, %v2209
  %v2211 = vpop.f32.mrb[0].mxu0
  %2212 = vmatprep.mubr.f32.mxu0 %v1946
  %2213 = vmatmul.mubr.f32.gmra.mrb[0].mxu0 %v1822
  %v2214 = vpop.f32.mrb[0].mxu0
  %v2215 = vadd.f32 %v124, %v2214
  %v2216 = vpop.f32.mrb[0].mxu0
  %2217 = vmatprep.mubr.f32.mxu0 %v1949
  %2218 = vmatmul.mubr.f32.gmra.mrb[0].mxu0 %v1824
  %v2219 = vpop.f32.mrb[0].mxu0
  %v2220 = vadd.f32 %v124, %v2219
  %v2221 = vpop.f32.mrb[0].mxu0
  %2222 = vmatprep.mubr.f32.mxu0 %v1952
  %2223 = vmatmul.mubr.f32.gmra.mrb[0].mxu0 %v1826
  %v2224 = vpop.f32.mrb[0].mxu0
  %v2225 = vadd.f32 %v124, %v2224
  %v2226 = vpop.f32.mrb[0].mxu0
  %2227 = vmatprep.mubr.f32.mxu0 %v1955
  %2228 = vmatmul.mubr.f32.gmra.mrb[0].mxu0 %v1828
  %v2229 = vpop.f32.mrb[0].mxu0
  %v2230 = vadd.f32 %v124, %v2229
  %v2231 = vpop.f32.mrb[0].mxu0
  %2232 = vmatprep.mubr.f32.mxu0 %v1958
  %2233 = vmatmul.mubr.f32.gmra.mrb[0].mxu0 %v1830
  %v2234 = vpop.f32.mrb[0].mxu0
  %v2235 = vadd.f32 %v124, %v2234
  %v2236 = vpop.f32.mrb[0].mxu0
  %2237 = vmatprep.mubr.f32.mxu0 %v1961
  %2238 = vmatmul.mubr.f32.gmra.mrb[0].mxu0 %v1832
  %v2239 = vpop.f32.mrb[0].mxu0
  %v2240 = vadd.f32 %v124, %v2239
  %v2241 = vpop.f32.mrb[0].mxu0
  %2242 = vdwg.mxu0
  %v2243 = vmax.f32 %v2030, 0.0
  %v2244 = vmax.f32 %v2035, 0.0
  %v2245 = vmax.f32 %v2040, 0.0
  %v2246 = vmax.f32 %v2045, 0.0
  %v2247 = vmax.f32 %v2050, 0.0
  %v2248 = vmax.f32 %v2055, 0.0
  %v2249 = vmax.f32 %v2060, 0.0
  %v2250 = vmax.f32 %v2065, 0.0
  %v2251 = vmax.f32 %v2070, 0.0
  %v2252 = vmax.f32 %v2075, 0.0
  %v2253 = vmax.f32 %v2080, 0.0
  %v2254 = vmax.f32 %v2085, 0.0
  %v2255 = vmax.f32 %v2090, 0.0
  %v2256 = vmax.f32 %v2095, 0.0
  %v2257 = vmax.f32 %v2100, 0.0
  %v2258 = vmax.f32 %v2105, 0.0
  %v2259 = vmax.f32 %v2110, 0.0
  %v2260 = vmax.f32 %v2115, 0.0
  %v2261 = vmax.f32 %v2120, 0.0
  %v2262 = vmax.f32 %v2125, 0.0
  %v2263 = vmax.f32 %v2130, 0.0
  %v2264 = vmax.f32 %v2135, 0.0
  %v2265 = vmax.f32 %v2140, 0.0
  %v2266 = vmax.f32 %v2145, 0.0
  %v2267 = vmax.f32 %v2150, 0.0
  %v2268 = vmax.f32 %v2155, 0.0
  %v2269 = vmax.f32 %v2160, 0.0
  %v2270 = vmax.f32 %v2165, 0.0
  %v2271 = vmax.f32 %v2170, 0.0
  %v2272 = vmax.f32 %v2175, 0.0
  %v2273 = vmax.f32 %v2180, 0.0
  %v2274 = vmax.f32 %v2185, 0.0
  %v2275 = vmax.f32 %v2190, 0.0
  %v2276 = vmax.f32 %v2195, 0.0
  %v2277 = vmax.f32 %v2200, 0.0
  %v2278 = vmax.f32 %v2205, 0.0
  %v2279 = vmax.f32 %v2210, 0.0
  %v2280 = vmax.f32 %v2215, 0.0
  %v2281 = vmax.f32 %v2220, 0.0
  %v2282 = vmax.f32 %v2225, 0.0
  %v2283 = vmax.f32 %v2230, 0.0
  %v2284 = vmax.f32 %v2235, 0.0
  %v2285 = vmax.f32 %v2240, 0.0
  %v2286 = vmax.f32 %v1704, %v2243
  %v2287 = vmax.f32 %v1705, %v2244
  %v2288 = vmax.f32 %v1706, %v2245
  %v2289 = vmax.f32 %v1707, %v2246
  %v2290 = vmax.f32 %v1708, %v2247
  %v2291 = vmax.f32 %v1709, %v2248
  %v2292 = vmax.f32 %v1710, %v2249
  %v2293 = vmax.f32 %v1711, %v2250
  %v2294 = vmax.f32 %v1712, %v2251
  %v2295 = vmax.f32 %v1713, %v2252
  %v2296 = vmax.f32 %v1714, %v2253
  %v2297 = vmax.f32 %v1715, %v2254
  %v2298 = vmax.f32 %v1716, %v2255
  %v2299 = vmax.f32 %v1717, %v2256
  %v2300 = vmax.f32 %v1718, %v2257
  %v2301 = vmax.f32 %v1719, %v2258
  %v2302 = vmax.f32 %v1720, %v2259
  %v2303 = vmax.f32 %v1721, %v2260
  %v2304 = vmax.f32 %v1722, %v2261
  %v2305 = vmax.f32 %v1723, %v2262
  %v2306 = vmax.f32 %v1724, %v2263
  %v2307 = vmax.f32 %v1725, %v2264
  %v2308 = vmax.f32 %v1726, %v2265
  %v2309 = vmax.f32 %v1727, %v2266
  %v2310 = vmax.f32 %v1728, %v2267
  %v2311 = vmax.f32 %v1729, %v2268
  %v2312 = vmax.f32 %v1730, %v2269
  %v2313 = vmax.f32 %v1731, %v2270
  %v2314 = vmax.f32 %v1732, %v2271
  %v2315 = vmax.f32 %v1733, %v2272
  %v2316 = vmax.f32 %v1734, %v2273
  %v2317 = vmax.f32 %v1735, %v2274
  %v2318 = vmax.f32 %v1736, %v2275
  %v2319 = vmax.f32 %v1737, %v2276
  %v2320 = vmax.f32 %v1738, %v2277
  %v2321 = vmax.f32 %v1739, %v2278
  %v2322 = vmax.f32 %v1740, %v2279
  %v2323 = vmax.f32 %v1741, %v2280
  %v2324 = vmax.f32 %v1742, %v2281
  %v2325 = vmax.f32 %v1743, %v2282
  %v2326 = vmax.f32 %v1744, %v2283
  %v2327 = vmax.f32 %v1745, %v2284
  %v2328 = vmax.f32 %v1746, %v2285
  %2329 = vst [vmem:[%s3] sm:$0xff] %v2286
  %2330 = vst [vmem:[%s3 + $0x8] sm:$0xff] %v2287
  %2331 = vst [vmem:[%s3 + $0x10] sm:$0xff] %v2288
  %2332 = vst [vmem:[%s3 + $0x18] sm:$0xff] %v2289
  %2333 = vst [vmem:[%s3 + $0x20] sm:$0xff] %v2290
  %2334 = vst [vmem:[%s3 + $0x28] sm:$0xff] %v2291
  %2335 = vst [vmem:[%s3 + $0x30] sm:$0xff] %v2292
  %2336 = vst [vmem:[%s3 + $0x38] sm:$0xff] %v2293
  %2337 = vst [vmem:[%s3 + $0x40] sm:$0xff] %v2294
  %2338 = vst [vmem:[%s3 + $0x48] sm:$0xff] %v2295
  %2339 = vst [vmem:[%s3 + $0x50] sm:$0xff] %v2296
  %2340 = vst [vmem:[%s3 + $0x58] sm:$0xff] %v2297
  %2341 = vst [vmem:[%s3 + $0x60] sm:$0xff] %v2298
  %2342 = vst [vmem:[%s3 + $0x68] sm:$0xff] %v2299
  %2343 = vst [vmem:[%s3 + $0x70] sm:$0xff] %v2300
  %2344 = vst [vmem:[%s3 + $0x78] sm:$0xff] %v2301
  %2345 = vst [vmem:[%s3 + $0x80] sm:$0xff] %v2302
  %2346 = vst [vmem:[%s3 + $0x88] sm:$0xff] %v2303
  %2347 = vst [vmem:[%s3 + $0x90] sm:$0xff] %v2304
  %2348 = vst [vmem:[%s3 + $0x98] sm:$0xff] %v2305
  %2349 = vst [vmem:[%s3 + $0xa0] sm:$0xff] %v2306
  %2350 = vst [vmem:[%s3 + $0xa8] sm:$0xff] %v2307
  %2351 = vst [vmem:[%s3 + $0xb0] sm:$0xff] %v2308
  %2352 = vst [vmem:[%s3 + $0xb8] sm:$0xff] %v2309
  %2353 = vst [vmem:[%s3 + $0xc0] sm:$0xff] %v2310
  %2354 = vst [vmem:[%s3 + $0xc8] sm:$0xff] %v2311
  %2355 = vst [vmem:[%s3 + $0xd0] sm:$0xff] %v2312
  %2356 = vst [vmem:[%s3 + $0xd8] sm:$0xff] %v2313
  %2357 = vst [vmem:[%s3 + $0xe0] sm:$0xff] %v2314
  %2358 = vst [vmem:[%s3 + $0xe8] sm:$0xff] %v2315
  %2359 = vst [vmem:[%s3 + $0xf0] sm:$0xff] %v2316
  %2360 = vst [vmem:[%s3 + $0xf8] sm:$0xff] %v2317
  %2361 = vst [vmem:[%s3 + $0x100] sm:$0xff] %v2318
  %2362 = vst [vmem:[%s3 + $0x108] sm:$0xff] %v2319
  %2363 = vst [vmem:[%s3 + $0x110] sm:$0xff] %v2320
  %2364 = vst [vmem:[%s3 + $0x118] sm:$0xff] %v2321
  %2365 = vst [vmem:[%s3 + $0x120] sm:$0xff] %v2322
  %2366 = vst [vmem:[%s3 + $0x128] sm:$0xff] %v2323
  %2367 = vst [vmem:[%s3 + $0x130] sm:$0xff] %v2324
  %2368 = vst [vmem:[%s3 + $0x138] sm:$0xff] %v2325
  %2369 = vst [vmem:[%s3 + $0x140] sm:$0xff] %v2326
  %2370 = vst [vmem:[%s3 + $0x148] sm:$0xff] %v2327
  %2371 = vst [vmem:[%s3 + $0x150] sm:$0x3] %v2328
  // Predicated region
  $region14: #{mynet4_forward.3} parent=0 // pred_check
    _
  $region15: #{mynet4_forward.3} parent=0 // pred_check_branch
    %2373 = sbr.rel (0) target = $region17
  $region16: #{mynet4_forward.3} parent=0 // pred_region
    _
  $region17: #{mynet4_forward.3} parent=0 // pred_fallthru
    _
  // Predicated region
  $region18: #{mynet4_forward.3} parent=0 // pred_check
    _
  $region19: #{mynet4_forward.3} parent=0 // pred_check_branch
    %2375 = sbr.rel (0) target = $region21
  $region20: #{mynet4_forward.3} parent=0 // pred_region
    _
  $region21: #{mynet4_forward.3} parent=0 // pred_fallthru
    _

// kernel: mynet4_forward.4
$region0: #{mynet4_forward.4}
  #allocation0 [shape = 'u32[]', space=smem, size = 0x4, offset = 0x4, fixed_abs, tag = 'smem constant byte address 0x4 - core index']
  #allocation1 [shape = 'u32[144,128]{1,0:T(1,128)}', space=vmem, size = 0x12000, scoped, tag = 'internal scratch']
  %s0 = inlined_call_operand.vmem [shape: f32[4,18,294], index: 0, kind: input, shape index: {}]
  %s1 = inlined_call_operand.vmem [shape: f32[294,128], index: 1, kind: input, shape index: {}]
  %s2 = inlined_call_operand.vmem [shape: f32[1,128], index: 2, kind: input, shape index: {}]
  %s3 = inlined_call_operand.vmem [shape: f32[18,128], index: 3, kind: output, shape index: {}]
  %s4 = sld [smem:[#allocation0]]
  $region22: #{mynet4_forward.4} parent=0
    _
  %s6 = ssub.s32 1, %s4
  %s7 = scalar_select 0, %s6, %s4
  // Predicated region
  $region2: #{mynet4_forward.4} parent=0 // pred_check
    _
  $region3: #{mynet4_forward.4} parent=0 // pred_check_branch
    %9 = sbr.rel (0) target = $region5
  $region4: #{mynet4_forward.4} parent=0 // pred_region
    _
  $region5: #{mynet4_forward.4} parent=0 // pred_fallthru
    _
  // Predicated region
  $region6: #{mynet4_forward.4} parent=0 // pred_check
    _
  $region7: #{mynet4_forward.4} parent=0 // pred_check_branch
    %11 = sbr.rel (0) target = $region9
  $region8: #{mynet4_forward.4} parent=0 // pred_region
    _
  $region9: #{mynet4_forward.4} parent=0 // pred_fallthru
    _
  // Predicated region
  $region10: #{mynet4_forward.4} parent=0 // pred_check
    _
  $region11: #{mynet4_forward.4} parent=0 // pred_check_branch
    %13 = sbr.rel (0) target = $region13
  $region12: #{mynet4_forward.4} parent=0 // pred_region
    _
  $region13: #{mynet4_forward.4} parent=0 // pred_fallthru
    _
  %v14 = vld [vmem:[%s1] sm:$0xff]
  %v15 = vld [vmem:[%s1 + $0x8] sm:$0xff]
  %v16 = vld [vmem:[%s1 + $0x10] sm:$0xff]
  %v17 = vld [vmem:[%s1 + $0x18] sm:$0xff]
  %v18 = vld [vmem:[%s1 + $0x20] sm:$0xff]
  %v19 = vld [vmem:[%s1 + $0x28] sm:$0xff]
  %v20 = vld [vmem:[%s1 + $0x30] sm:$0xff]
  %v21 = vld [vmem:[%s1 + $0x38] sm:$0xff]
  %v22 = vld [vmem:[%s1 + $0x40] sm:$0xff]
  %v23 = vld [vmem:[%s1 + $0x48] sm:$0xff]
  %v24 = vld [vmem:[%s1 + $0x50] sm:$0xff]
  %v25 = vld [vmem:[%s1 + $0x58] sm:$0xff]
  %v26 = vld [vmem:[%s1 + $0x60] sm:$0xff]
  %v27 = vld [vmem:[%s1 + $0x68] sm:$0xff]
  %v28 = vld [vmem:[%s1 + $0x70] sm:$0xff]
  %v29 = vld [vmem:[%s1 + $0x78] sm:$0xff]
  %v30 = vld [vmem:[%s1 + $0x80] sm:$0xff]
  %v31 = vld [vmem:[%s1 + $0x88] sm:$0xff]
  %v32 = vld [vmem:[%s1 + $0x90] sm:$0xff]
  %v33 = vld [vmem:[%s1 + $0x98] sm:$0xff]
  %v34 = vld [vmem:[%s1 + $0xa0] sm:$0xff]
  %v35 = vld [vmem:[%s1 + $0xa8] sm:$0xff]
  %v36 = vld [vmem:[%s1 + $0xb0] sm:$0xff]
  %v37 = vld [vmem:[%s1 + $0xb8] sm:$0xff]
  %v38 = vld [vmem:[%s1 + $0xc0] sm:$0xff]
  %v39 = vld [vmem:[%s1 + $0xc8] sm:$0xff]
  %v40 = vld [vmem:[%s1 + $0xd0] sm:$0xff]
  %v41 = vld [vmem:[%s1 + $0xd8] sm:$0xff]
  %v42 = vld [vmem:[%s1 + $0xe0] sm:$0xff]
  %v43 = vld [vmem:[%s1 + $0xe8] sm:$0xff]
  %v44 = vld [vmem:[%s1 + $0xf0] sm:$0xff]
  %v45 = vld [vmem:[%s1 + $0xf8] sm:$0xff]
  %v46 = vld [vmem:[%s1 + $0x100] sm:$0xff]
  %v47 = vld [vmem:[%s1 + $0x108] sm:$0xff]
  %v48 = vld [vmem:[%s1 + $0x110] sm:$0xff]
  %v49 = vld [vmem:[%s1 + $0x118] sm:$0xff]
  %v50 = vld [vmem:[%s1 + $0x120] sm:$0x3f]
  %v51 = vld [vmem:[%s2] sm:$0x1]
  %v52 = vld [vmem:[%s0] sm:$0xff]
  %v53 = vld [vmem:[%s0 + $0x8] sm:$0xff]
  %v54 = vld [vmem:[%s0 + $0x10] sm:$0xff]
  %v55 = vld [vmem:[%s0 + $0x18] sm:$0xff]
  %v56 = vld [vmem:[%s0 + $0x20] sm:$0xff]
  %v57 = vld [vmem:[%s0 + $0x28] sm:$0xff]
  %v58 = vld [vmem:[%s0 + $0x30] sm:$0x3]
  %v59 = vld [vmem:[%s0 + $0x38] sm:$0x3]
  %v60 = vld [vmem:[%s0 + $0x40] sm:$0x3]
  %v62 = vlaneseq
  %v63 = vshrl.u32 %v62, 7
  %v64 = vsub.s32 0, %v63
  %v65 = vrot.slane %v51, %v64
  %vm67 = vcmask 310272
  %v69 = vsel %vm67, %v54, 0
  %v72 = vsel %vm67, %v57, 0
  %v75 = vsel %vm67, %v60, 0
  %vm77 = vcmask 1045504
  %v79 = vsel %vm77, %v50, 0
  %81 = vmatprep.subr.mxu0 0.0
  %82 = vmatpush1.msra.mxu0 %v14
  %83 = vmatprep.subr.mxu0 0.0
  %84 = vmatpush1.msra.mxu0 %v15
  %85 = vmatprep.subr.mxu0 0.0
  %86 = vmatpush1.msra.mxu0 %v16
  %87 = vmatprep.subr.mxu0 0.0
  %88 = vmatpush1.msra.mxu0 %v17
  %89 = vmatprep.subr.mxu0 0.0
  %90 = vmatpush1.msra.mxu0 %v18
  %91 = vmatprep.subr.mxu0 0.0
  %92 = vmatpush1.msra.mxu0 %v19
  %93 = vmatprep.subr.mxu0 0.0
  %94 = vmatpush1.msra.mxu0 %v20
  %95 = vmatprep.subr.mxu0 0.0
  %96 = vmatpush1.msra.mxu0 %v21
  %97 = vmatprep.subr.mxu0 0.0
  %98 = vmatpush1.msra.mxu0 %v22
  %99 = vmatprep.subr.mxu0 0.0
  %100 = vmatpush1.msra.mxu0 %v23
  %101 = vmatprep.subr.mxu0 0.0
  %102 = vmatpush1.msra.mxu0 %v24
  %103 = vmatprep.subr.mxu0 0.0
  %104 = vmatpush1.msra.mxu0 %v25
  %105 = vmatprep.subr.mxu0 0.0
  %106 = vmatpush1.msra.mxu0 %v26
  %107 = vmatprep.subr.mxu0 0.0
  %108 = vmatpush1.msra.mxu0 %v27
  %109 = vmatprep.subr.mxu0 0.0
  %110 = vmatpush1.msra.mxu0 %v28
  %111 = vmatprep.subr.mxu0 0.0
  %112 = vmatpush1.msra.mxu0 %v29
  %113 = vmatprep.subr.mxu0 0.0
  %114 = vmatpush1.msra.mxu0 %v30
  %115 = vmatprep.subr.mxu0 0.0
  %116 = vmatpush1.msra.mxu0 %v31
  %117 = vmatprep.subr.mxu0 0.0
  %118 = vmatpush1.msra.mxu0 %v32
  %119 = vmatprep.subr.mxu0 0.0
  %120 = vmatpush1.msra.mxu0 %v33
  %121 = vmatprep.subr.mxu0 0.0
  %122 = vmatpush1.msra.mxu0 %v34
  %123 = vmatprep.subr.mxu0 0.0
  %124 = vmatpush1.msra.mxu0 %v35
  %125 = vmatprep.subr.mxu0 0.0
  %126 = vmatpush1.msra.mxu0 %v36
  %127 = vmatprep.subr.mxu0 0.0
  %128 = vmatpush1.msra.mxu0 %v37
  %129 = vmatprep.subr.mxu0 0.0
  %130 = vmatpush1.msra.mxu0 %v38
  %131 = vmatprep.subr.mxu0 0.0
  %132 = vmatpush1.msra.mxu0 %v39
  %133 = vmatprep.subr.mxu0 0.0
  %134 = vmatpush1.msra.mxu0 %v40
  %135 = vmatprep.subr.mxu0 0.0
  %136 = vmatpush1.msra.mxu0 %v41
  %137 = vmatprep.subr.mxu0 0.0
  %138 = vmatpush1.msra.mxu0 %v42
  %139 = vmatprep.subr.mxu0 0.0
  %140 = vmatpush1.msra.mxu0 %v43
  %141 = vmatprep.subr.mxu0 0.0
  %142 = vmatpush1.msra.mxu0 %v44
  %143 = vmatprep.subr.mxu0 0.0
  %144 = vmatpush1.msra.mxu0 %v45
  %145 = vmatprep.mubr.f32.mxu0 %v53
  %146 = vmatmul.mubr.f32.gmra.mrb[0].mxu0 %v52
  %v147 = vpop.f32.mrb[0].mxu0
  %v148 = vadd.f32 %v65, %v147
  %v149 = vpop.f32.mrb[0].mxu0
  %150 = vmatprep.mubr.f32.mxu0 %v56
  %151 = vmatmul.mubr.f32.gmra.mrb[0].mxu0 %v55
  %v152 = vpop.f32.mrb[0].mxu0
  %v153 = vadd.f32 %v65, %v152
  %v154 = vpop.f32.mrb[0].mxu0
  %155 = vmatprep.mubr.f32.mxu0 %v59
  %156 = vmatmul.mubr.f32.gmra.mrb[0].mxu0 %v58
  %v157 = vpop.f32.mrb[0].mxu0
  %v158 = vadd.f32 %v65, %v157
  %v159 = vpop.f32.mrb[0].mxu0
  %160 = vdwg.mxu0
  %161 = vmatprep.subr.mxu0 0.0
  %162 = vmatpush1.msra.mxu0 %v46
  %163 = vmatprep.subr.mxu0 0.0
  %164 = vmatpush1.msra.mxu0 %v47
  %165 = vmatprep.subr.mxu0 0.0
  %166 = vmatpush1.msra.mxu0 %v48
  %167 = vmatprep.subr.mxu0 0.0
  %168 = vmatpush1.msra.mxu0 %v49
  %169 = vmatprep.subr.mxu0 0.0
  %170 = vmatpush1.msra.mxu0 %v79
  %171 = vmatprep.subr.mxu0 0.0
  %172 = vmatpush1.msra.mxu0 0.0
  %173 = vmatprep.subr.mxu0 0.0
  %174 = vmatpush1.msra.mxu0 0.0
  %175 = vmatprep.subr.mxu0 0.0
  %176 = vmatpush1.msra.mxu0 0.0
  %177 = vmatprep.subr.mxu0 0.0
  %178 = vmatpush1.msra.mxu0 0.0
  %179 = vmatprep.subr.mxu0 0.0
  %180 = vmatpush1.msra.mxu0 0.0
  %181 = vmatprep.subr.mxu0 0.0
  %182 = vmatpush1.msra.mxu0 0.0
  %183 = vmatprep.subr.mxu0 0.0
  %184 = vmatpush1.msra.mxu0 0.0
  %185 = vmatprep.subr.mxu0 0.0
  %186 = vmatpush1.msra.mxu0 0.0
  %187 = vmatprep.subr.mxu0 0.0
  %188 = vmatpush1.msra.mxu0 0.0
  %189 = vmatprep.subr.mxu0 0.0
  %190 = vmatpush1.msra.mxu0 0.0
  %191 = vmatprep.subr.mxu0 0.0
  %192 = vmatpush1.msra.mxu0 0.0
  %193 = vmatprep.subr.mxu0 0.0
  %194 = vmatpush1.msra.mxu0 0.0
  %195 = vmatprep.subr.mxu0 0.0
  %196 = vmatpush1.msra.mxu0 0.0
  %197 = vmatprep.subr.mxu0 0.0
  %198 = vmatpush1.msra.mxu0 0.0
  %199 = vmatprep.subr.mxu0 0.0
  %200 = vmatpush1.msra.mxu0 0.0
  %201 = vmatprep.subr.mxu0 0.0
  %202 = vmatpush1.msra.mxu0 0.0
  %203 = vmatprep.subr.mxu0 0.0
  %204 = vmatpush1.msra.mxu0 0.0
  %205 = vmatprep.subr.mxu0 0.0
  %206 = vmatpush1.msra.mxu0 0.0
  %207 = vmatprep.subr.mxu0 0.0
  %208 = vmatpush1.msra.mxu0 0.0
  %209 = vmatprep.subr.mxu0 0.0
  %210 = vmatpush1.msra.mxu0 0.0
  %211 = vmatprep.subr.mxu0 0.0
  %212 = vmatpush1.msra.mxu0 0.0
  %213 = vmatprep.subr.mxu0 0.0
  %214 = vmatpush1.msra.mxu0 0.0
  %215 = vmatprep.subr.mxu0 0.0
  %216 = vmatpush1.msra.mxu0 0.0
  %217 = vmatprep.subr.mxu0 0.0
  %218 = vmatpush1.msra.mxu0 0.0
  %219 = vmatprep.subr.mxu0 0.0
  %220 = vmatpush1.msra.mxu0 0.0
  %221 = vmatprep.subr.mxu0 0.0
  %222 = vmatpush1.msra.mxu0 0.0
  %223 = vmatprep.subr.mxu0 0.0
  %224 = vmatpush1.msra.mxu0 0.0
  %225 = vmatprep.mubr.f32.mxu0 0.0
  %226 = vmatmul.mubr.f32.gmra.mrb[0].mxu0 %v69
  %v227 = vpop.f32.mrb[0].mxu0
  %v228 = vadd.f32 %v148, %v227
  %v229 = vpop.f32.mrb[0].mxu0
  %230 = vmatprep.mubr.f32.mxu0 0.0
  %231 = vmatmul.mubr.f32.gmra.mrb[0].mxu0 %v72
  %v232 = vpop.f32.mrb[0].mxu0
  %v233 = vadd.f32 %v153, %v232
  %v234 = vpop.f32.mrb[0].mxu0
  %235 = vmatprep.mubr.f32.mxu0 0.0
  %236 = vmatmul.mubr.f32.gmra.mrb[0].mxu0 %v75
  %v237 = vpop.f32.mrb[0].mxu0
  %v238 = vadd.f32 %v158, %v237
  %v239 = vpop.f32.mrb[0].mxu0
  %240 = vdwg.mxu0
  %v241 = vmax.f32 %v228, 0.0
  %v242 = vmax.f32 %v233, 0.0
  %v243 = vmax.f32 %v238, 0.0
  %s244 = scalar_lea.vmem %s0, 72
  %v245 = vld [vmem:[%s244] sm:$0xff]
  %v246 = vld [vmem:[%s244 + $0x8] sm:$0xff]
  %v247 = vld [vmem:[%s244 + $0x10] sm:$0xff]
  %v248 = vld [vmem:[%s244 + $0x18] sm:$0xff]
  %v249 = vld [vmem:[%s244 + $0x20] sm:$0xff]
  %v250 = vld [vmem:[%s244 + $0x28] sm:$0xff]
  %v251 = vld [vmem:[%s244 + $0x30] sm:$0x3]
  %v252 = vld [vmem:[%s244 + $0x38] sm:$0x3]
  %v253 = vld [vmem:[%s244 + $0x40] sm:$0x3]
  %v255 = vsel %vm67, %v247, 0
  %v258 = vsel %vm67, %v250, 0
  %v261 = vsel %vm67, %v253, 0
  %263 = vmatprep.subr.mxu0 0.0
  %264 = vmatpush1.msra.mxu0 %v14
  %265 = vmatprep.subr.mxu0 0.0
  %266 = vmatpush1.msra.mxu0 %v15
  %267 = vmatprep.subr.mxu0 0.0
  %268 = vmatpush1.msra.mxu0 %v16
  %269 = vmatprep.subr.mxu0 0.0
  %270 = vmatpush1.msra.mxu0 %v17
  %271 = vmatprep.subr.mxu0 0.0
  %272 = vmatpush1.msra.mxu0 %v18
  %273 = vmatprep.subr.mxu0 0.0
  %274 = vmatpush1.msra.mxu0 %v19
  %275 = vmatprep.subr.mxu0 0.0
  %276 = vmatpush1.msra.mxu0 %v20
  %277 = vmatprep.subr.mxu0 0.0
  %278 = vmatpush1.msra.mxu0 %v21
  %279 = vmatprep.subr.mxu0 0.0
  %280 = vmatpush1.msra.mxu0 %v22
  %281 = vmatprep.subr.mxu0 0.0
  %282 = vmatpush1.msra.mxu0 %v23
  %283 = vmatprep.subr.mxu0 0.0
  %284 = vmatpush1.msra.mxu0 %v24
  %285 = vmatprep.subr.mxu0 0.0
  %286 = vmatpush1.msra.mxu0 %v25
  %287 = vmatprep.subr.mxu0 0.0
  %288 = vmatpush1.msra.mxu0 %v26
  %289 = vmatprep.subr.mxu0 0.0
  %290 = vmatpush1.msra.mxu0 %v27
  %291 = vmatprep.subr.mxu0 0.0
  %292 = vmatpush1.msra.mxu0 %v28
  %293 = vmatprep.subr.mxu0 0.0
  %294 = vmatpush1.msra.mxu0 %v29
  %295 = vmatprep.subr.mxu0 0.0
  %296 = vmatpush1.msra.mxu0 %v30
  %297 = vmatprep.subr.mxu0 0.0
  %298 = vmatpush1.msra.mxu0 %v31
  %299 = vmatprep.subr.mxu0 0.0
  %300 = vmatpush1.msra.mxu0 %v32
  %301 = vmatprep.subr.mxu0 0.0
  %302 = vmatpush1.msra.mxu0 %v33
  %303 = vmatprep.subr.mxu0 0.0
  %304 = vmatpush1.msra.mxu0 %v34
  %305 = vmatprep.subr.mxu0 0.0
  %306 = vmatpush1.msra.mxu0 %v35
  %307 = vmatprep.subr.mxu0 0.0
  %308 = vmatpush1.msra.mxu0 %v36
  %309 = vmatprep.subr.mxu0 0.0
  %310 = vmatpush1.msra.mxu0 %v37
  %311 = vmatprep.subr.mxu0 0.0
  %312 = vmatpush1.msra.mxu0 %v38
  %313 = vmatprep.subr.mxu0 0.0
  %314 = vmatpush1.msra.mxu0 %v39
  %315 = vmatprep.subr.mxu0 0.0
  %316 = vmatpush1.msra.mxu0 %v40
  %317 = vmatprep.subr.mxu0 0.0
  %318 = vmatpush1.msra.mxu0 %v41
  %319 = vmatprep.subr.mxu0 0.0
  %320 = vmatpush1.msra.mxu0 %v42
  %321 = vmatprep.subr.mxu0 0.0
  %322 = vmatpush1.msra.mxu0 %v43
  %323 = vmatprep.subr.mxu0 0.0
  %324 = vmatpush1.msra.mxu0 %v44
  %325 = vmatprep.subr.mxu0 0.0
  %326 = vmatpush1.msra.mxu0 %v45
  %327 = vmatprep.mubr.f32.mxu0 %v246
  %328 = vmatmul.mubr.f32.gmra.mrb[0].mxu0 %v245
  %v329 = vpop.f32.mrb[0].mxu0
  %v330 = vadd.f32 %v65, %v329
  %v331 = vpop.f32.mrb[0].mxu0
  %332 = vmatprep.mubr.f32.mxu0 %v249
  %333 = vmatmul.mubr.f32.gmra.mrb[0].mxu0 %v248
  %v334 = vpop.f32.mrb[0].mxu0
  %v335 = vadd.f32 %v65, %v334
  %v336 = vpop.f32.mrb[0].mxu0
  %337 = vmatprep.mubr.f32.mxu0 %v252
  %338 = vmatmul.mubr.f32.gmra.mrb[0].mxu0 %v251
  %v339 = vpop.f32.mrb[0].mxu0
  %v340 = vadd.f32 %v65, %v339
  %v341 = vpop.f32.mrb[0].mxu0
  %342 = vdwg.mxu0
  %343 = vmatprep.subr.mxu0 0.0
  %344 = vmatpush1.msra.mxu0 %v46
  %345 = vmatprep.subr.mxu0 0.0
  %346 = vmatpush1.msra.mxu0 %v47
  %347 = vmatprep.subr.mxu0 0.0
  %348 = vmatpush1.msra.mxu0 %v48
  %349 = vmatprep.subr.mxu0 0.0
  %350 = vmatpush1.msra.mxu0 %v49
  %351 = vmatprep.subr.mxu0 0.0
  %352 = vmatpush1.msra.mxu0 %v79
  %353 = vmatprep.subr.mxu0 0.0
  %354 = vmatpush1.msra.mxu0 0.0
  %355 = vmatprep.subr.mxu0 0.0
  %356 = vmatpush1.msra.mxu0 0.0
  %357 = vmatprep.subr.mxu0 0.0
  %358 = vmatpush1.msra.mxu0 0.0
  %359 = vmatprep.subr.mxu0 0.0
  %360 = vmatpush1.msra.mxu0 0.0
  %361 = vmatprep.subr.mxu0 0.0
  %362 = vmatpush1.msra.mxu0 0.0
  %363 = vmatprep.subr.mxu0 0.0
  %364 = vmatpush1.msra.mxu0 0.0
  %365 = vmatprep.subr.mxu0 0.0
  %366 = vmatpush1.msra.mxu0 0.0
  %367 = vmatprep.subr.mxu0 0.0
  %368 = vmatpush1.msra.mxu0 0.0
  %369 = vmatprep.subr.mxu0 0.0
  %370 = vmatpush1.msra.mxu0 0.0
  %371 = vmatprep.subr.mxu0 0.0
  %372 = vmatpush1.msra.mxu0 0.0
  %373 = vmatprep.subr.mxu0 0.0
  %374 = vmatpush1.msra.mxu0 0.0
  %375 = vmatprep.subr.mxu0 0.0
  %376 = vmatpush1.msra.mxu0 0.0
  %377 = vmatprep.subr.mxu0 0.0
  %378 = vmatpush1.msra.mxu0 0.0
  %379 = vmatprep.subr.mxu0 0.0
  %380 = vmatpush1.msra.mxu0 0.0
  %381 = vmatprep.subr.mxu0 0.0
  %382 = vmatpush1.msra.mxu0 0.0
  %383 = vmatprep.subr.mxu0 0.0
  %384 = vmatpush1.msra.mxu0 0.0
  %385 = vmatprep.subr.mxu0 0.0
  %386 = vmatpush1.msra.mxu0 0.0
  %387 = vmatprep.subr.mxu0 0.0
  %388 = vmatpush1.msra.mxu0 0.0
  %389 = vmatprep.subr.mxu0 0.0
  %390 = vmatpush1.msra.mxu0 0.0
  %391 = vmatprep.subr.mxu0 0.0
  %392 = vmatpush1.msra.mxu0 0.0
  %393 = vmatprep.subr.mxu0 0.0
  %394 = vmatpush1.msra.mxu0 0.0
  %395 = vmatprep.subr.mxu0 0.0
  %396 = vmatpush1.msra.mxu0 0.0
  %397 = vmatprep.subr.mxu0 0.0
  %398 = vmatpush1.msra.mxu0 0.0
  %399 = vmatprep.subr.mxu0 0.0
  %400 = vmatpush1.msra.mxu0 0.0
  %401 = vmatprep.subr.mxu0 0.0
  %402 = vmatpush1.msra.mxu0 0.0
  %403 = vmatprep.subr.mxu0 0.0
  %404 = vmatpush1.msra.mxu0 0.0
  %405 = vmatprep.subr.mxu0 0.0
  %406 = vmatpush1.msra.mxu0 0.0
  %407 = vmatprep.mubr.f32.mxu0 0.0
  %408 = vmatmul.mubr.f32.gmra.mrb[0].mxu0 %v255
  %v409 = vpop.f32.mrb[0].mxu0
  %v410 = vadd.f32 %v330, %v409
  %v411 = vpop.f32.mrb[0].mxu0
  %412 = vmatprep.mubr.f32.mxu0 0.0
  %413 = vmatmul.mubr.f32.gmra.mrb[0].mxu0 %v258
  %v414 = vpop.f32.mrb[0].mxu0
  %v415 = vadd.f32 %v335, %v414
  %v416 = vpop.f32.mrb[0].mxu0
  %417 = vmatprep.mubr.f32.mxu0 0.0
  %418 = vmatmul.mubr.f32.gmra.mrb[0].mxu0 %v261
  %v419 = vpop.f32.mrb[0].mxu0
  %v420 = vadd.f32 %v340, %v419
  %v421 = vpop.f32.mrb[0].mxu0
  %422 = vdwg.mxu0
  %v423 = vmax.f32 %v410, 0.0
  %v424 = vmax.f32 %v415, 0.0
  %v425 = vmax.f32 %v420, 0.0
  %v426 = vmax.f32 %v241, %v423
  %v427 = vmax.f32 %v242, %v424
  %v428 = vmax.f32 %v243, %v425
  %s429 = scalar_lea.vmem %s0, 144
  %v430 = vld [vmem:[%s429] sm:$0xff]
  %v431 = vld [vmem:[%s429 + $0x8] sm:$0xff]
  %v432 = vld [vmem:[%s429 + $0x10] sm:$0xff]
  %v433 = vld [vmem:[%s429 + $0x18] sm:$0xff]
  %v434 = vld [vmem:[%s429 + $0x20] sm:$0xff]
  %v435 = vld [vmem:[%s429 + $0x28] sm:$0xff]
  %v436 = vld [vmem:[%s429 + $0x30] sm:$0x3]
  %v437 = vld [vmem:[%s429 + $0x38] sm:$0x3]
  %v438 = vld [vmem:[%s429 + $0x40] sm:$0x3]
  %v440 = vsel %vm67, %v432, 0
  %v443 = vsel %vm67, %v435, 0
  %v446 = vsel %vm67, %v438, 0
  %448 = vmatprep.subr.mxu0 0.0
  %449 = vmatpush1.msra.mxu0 %v14
  %450 = vmatprep.subr.mxu0 0.0
  %451 = vmatpush1.msra.mxu0 %v15
  %452 = vmatprep.subr.mxu0 0.0
  %453 = vmatpush1.msra.mxu0 %v16
  %454 = vmatprep.subr.mxu0 0.0
  %455 = vmatpush1.msra.mxu0 %v17
  %456 = vmatprep.subr.mxu0 0.0
  %457 = vmatpush1.msra.mxu0 %v18
  %458 = vmatprep.subr.mxu0 0.0
  %459 = vmatpush1.msra.mxu0 %v19
  %460 = vmatprep.subr.mxu0 0.0
  %461 = vmatpush1.msra.mxu0 %v20
  %462 = vmatprep.subr.mxu0 0.0
  %463 = vmatpush1.msra.mxu0 %v21
  %464 = vmatprep.subr.mxu0 0.0
  %465 = vmatpush1.msra.mxu0 %v22
  %466 = vmatprep.subr.mxu0 0.0
  %467 = vmatpush1.msra.mxu0 %v23
  %468 = vmatprep.subr.mxu0 0.0
  %469 = vmatpush1.msra.mxu0 %v24
  %470 = vmatprep.subr.mxu0 0.0
  %471 = vmatpush1.msra.mxu0 %v25
  %472 = vmatprep.subr.mxu0 0.0
  %473 = vmatpush1.msra.mxu0 %v26
  %474 = vmatprep.subr.mxu0 0.0
  %475 = vmatpush1.msra.mxu0 %v27
  %476 = vmatprep.subr.mxu0 0.0
  %477 = vmatpush1.msra.mxu0 %v28
  %478 = vmatprep.subr.mxu0 0.0
  %479 = vmatpush1.msra.mxu0 %v29
  %480 = vmatprep.subr.mxu0 0.0
  %481 = vmatpush1.msra.mxu0 %v30
  %482 = vmatprep.subr.mxu0 0.0
  %483 = vmatpush1.msra.mxu0 %v31
  %484 = vmatprep.subr.mxu0 0.0
  %485 = vmatpush1.msra.mxu0 %v32
  %486 = vmatprep.subr.mxu0 0.0
  %487 = vmatpush1.msra.mxu0 %v33
  %488 = vmatprep.subr.mxu0 0.0
  %489 = vmatpush1.msra.mxu0 %v34
  %490 = vmatprep.subr.mxu0 0.0
  %491 = vmatpush1.msra.mxu0 %v35
  %492 = vmatprep.subr.mxu0 0.0
  %493 = vmatpush1.msra.mxu0 %v36
  %494 = vmatprep.subr.mxu0 0.0
  %495 = vmatpush1.msra.mxu0 %v37
  %496 = vmatprep.subr.mxu0 0.0
  %497 = vmatpush1.msra.mxu0 %v38
  %498 = vmatprep.subr.mxu0 0.0
  %499 = vmatpush1.msra.mxu0 %v39
  %500 = vmatprep.subr.mxu0 0.0
  %501 = vmatpush1.msra.mxu0 %v40
  %502 = vmatprep.subr.mxu0 0.0
  %503 = vmatpush1.msra.mxu0 %v41
  %504 = vmatprep.subr.mxu0 0.0
  %505 = vmatpush1.msra.mxu0 %v42
  %506 = vmatprep.subr.mxu0 0.0
  %507 = vmatpush1.msra.mxu0 %v43
  %508 = vmatprep.subr.mxu0 0.0
  %509 = vmatpush1.msra.mxu0 %v44
  %510 = vmatprep.subr.mxu0 0.0
  %511 = vmatpush1.msra.mxu0 %v45
  %512 = vmatprep.mubr.f32.mxu0 %v431
  %513 = vmatmul.mubr.f32.gmra.mrb[0].mxu0 %v430
  %v514 = vpop.f32.mrb[0].mxu0
  %v515 = vadd.f32 %v65, %v514
  %v516 = vpop.f32.mrb[0].mxu0
  %517 = vmatprep.mubr.f32.mxu0 %v434
  %518 = vmatmul.mubr.f32.gmra.mrb[0].mxu0 %v433
  %v519 = vpop.f32.mrb[0].mxu0
  %v520 = vadd.f32 %v65, %v519
  %v521 = vpop.f32.mrb[0].mxu0
  %522 = vmatprep.mubr.f32.mxu0 %v437
  %523 = vmatmul.mubr.f32.gmra.mrb[0].mxu0 %v436
  %v524 = vpop.f32.mrb[0].mxu0
  %v525 = vadd.f32 %v65, %v524
  %v526 = vpop.f32.mrb[0].mxu0
  %527 = vdwg.mxu0
  %528 = vmatprep.subr.mxu0 0.0
  %529 = vmatpush1.msra.mxu0 %v46
  %530 = vmatprep.subr.mxu0 0.0
  %531 = vmatpush1.msra.mxu0 %v47
  %532 = vmatprep.subr.mxu0 0.0
  %533 = vmatpush1.msra.mxu0 %v48
  %534 = vmatprep.subr.mxu0 0.0
  %535 = vmatpush1.msra.mxu0 %v49
  %536 = vmatprep.subr.mxu0 0.0
  %537 = vmatpush1.msra.mxu0 %v79
  %538 = vmatprep.subr.mxu0 0.0
  %539 = vmatpush1.msra.mxu0 0.0
  %540 = vmatprep.subr.mxu0 0.0
  %541 = vmatpush1.msra.mxu0 0.0
  %542 = vmatprep.subr.mxu0 0.0
  %543 = vmatpush1.msra.mxu0 0.0
  %544 = vmatprep.subr.mxu0 0.0
  %545 = vmatpush1.msra.mxu0 0.0
  %546 = vmatprep.subr.mxu0 0.0
  %547 = vmatpush1.msra.mxu0 0.0
  %548 = vmatprep.subr.mxu0 0.0
  %549 = vmatpush1.msra.mxu0 0.0
  %550 = vmatprep.subr.mxu0 0.0
  %551 = vmatpush1.msra.mxu0 0.0
  %552 = vmatprep.subr.mxu0 0.0
  %553 = vmatpush1.msra.mxu0 0.0
  %554 = vmatprep.subr.mxu0 0.0
  %555 = vmatpush1.msra.mxu0 0.0
  %556 = vmatprep.subr.mxu0 0.0
  %557 = vmatpush1.msra.mxu0 0.0
  %558 = vmatprep.subr.mxu0 0.0
  %559 = vmatpush1.msra.mxu0 0.0
  %560 = vmatprep.subr.mxu0 0.0
  %561 = vmatpush1.msra.mxu0 0.0
  %562 = vmatprep.subr.mxu0 0.0
  %563 = vmatpush1.msra.mxu0 0.0
  %564 = vmatprep.subr.mxu0 0.0
  %565 = vmatpush1.msra.mxu0 0.0
  %566 = vmatprep.subr.mxu0 0.0
  %567 = vmatpush1.msra.mxu0 0.0
  %568 = vmatprep.subr.mxu0 0.0
  %569 = vmatpush1.msra.mxu0 0.0
  %570 = vmatprep.subr.mxu0 0.0
  %571 = vmatpush1.msra.mxu0 0.0
  %572 = vmatprep.subr.mxu0 0.0
  %573 = vmatpush1.msra.mxu0 0.0
  %574 = vmatprep.subr.mxu0 0.0
  %575 = vmatpush1.msra.mxu0 0.0
  %576 = vmatprep.subr.mxu0 0.0
  %577 = vmatpush1.msra.mxu0 0.0
  %578 = vmatprep.subr.mxu0 0.0
  %579 = vmatpush1.msra.mxu0 0.0
  %580 = vmatprep.subr.mxu0 0.0
  %581 = vmatpush1.msra.mxu0 0.0
  %582 = vmatprep.subr.mxu0 0.0
  %583 = vmatpush1.msra.mxu0 0.0
  %584 = vmatprep.subr.mxu0 0.0
  %585 = vmatpush1.msra.mxu0 0.0
  %586 = vmatprep.subr.mxu0 0.0
  %587 = vmatpush1.msra.mxu0 0.0
  %588 = vmatprep.subr.mxu0 0.0
  %589 = vmatpush1.msra.mxu0 0.0
  %590 = vmatprep.subr.mxu0 0.0
  %591 = vmatpush1.msra.mxu0 0.0
  %592 = vmatprep.mubr.f32.mxu0 0.0
  %593 = vmatmul.mubr.f32.gmra.mrb[0].mxu0 %v440
  %v594 = vpop.f32.mrb[0].mxu0
  %v595 = vadd.f32 %v515, %v594
  %v596 = vpop.f32.mrb[0].mxu0
  %597 = vmatprep.mubr.f32.mxu0 0.0
  %598 = vmatmul.mubr.f32.gmra.mrb[0].mxu0 %v443
  %v599 = vpop.f32.mrb[0].mxu0
  %v600 = vadd.f32 %v520, %v599
  %v601 = vpop.f32.mrb[0].mxu0
  %602 = vmatprep.mubr.f32.mxu0 0.0
  %603 = vmatmul.mubr.f32.gmra.mrb[0].mxu0 %v446
  %v604 = vpop.f32.mrb[0].mxu0
  %v605 = vadd.f32 %v525, %v604
  %v606 = vpop.f32.mrb[0].mxu0
  %607 = vdwg.mxu0
  %v608 = vmax.f32 %v595, 0.0
  %v609 = vmax.f32 %v600, 0.0
  %v610 = vmax.f32 %v605, 0.0
  %v611 = vmax.f32 %v426, %v608
  %v612 = vmax.f32 %v427, %v609
  %v613 = vmax.f32 %v428, %v610
  %s614 = scalar_lea.vmem %s0, 216
  %v615 = vld [vmem:[%s614] sm:$0xff]
  %v616 = vld [vmem:[%s614 + $0x8] sm:$0xff]
  %v617 = vld [vmem:[%s614 + $0x10] sm:$0xff]
  %v618 = vld [vmem:[%s614 + $0x18] sm:$0xff]
  %v619 = vld [vmem:[%s614 + $0x20] sm:$0xff]
  %v620 = vld [vmem:[%s614 + $0x28] sm:$0xff]
  %v621 = vld [vmem:[%s614 + $0x30] sm:$0x3]
  %v622 = vld [vmem:[%s614 + $0x38] sm:$0x3]
  %v623 = vld [vmem:[%s614 + $0x40] sm:$0x3]
  %v625 = vsel %vm67, %v617, 0
  %v628 = vsel %vm67, %v620, 0
  %v631 = vsel %vm67, %v623, 0
  %633 = vmatprep.subr.mxu0 0.0
  %634 = vmatpush1.msra.mxu0 %v14
  %635 = vmatprep.subr.mxu0 0.0
  %636 = vmatpush1.msra.mxu0 %v15
  %637 = vmatprep.subr.mxu0 0.0
  %638 = vmatpush1.msra.mxu0 %v16
  %639 = vmatprep.subr.mxu0 0.0
  %640 = vmatpush1.msra.mxu0 %v17
  %641 = vmatprep.subr.mxu0 0.0
  %642 = vmatpush1.msra.mxu0 %v18
  %643 = vmatprep.subr.mxu0 0.0
  %644 = vmatpush1.msra.mxu0 %v19
  %645 = vmatprep.subr.mxu0 0.0
  %646 = vmatpush1.msra.mxu0 %v20
  %647 = vmatprep.subr.mxu0 0.0
  %648 = vmatpush1.msra.mxu0 %v21
  %649 = vmatprep.subr.mxu0 0.0
  %650 = vmatpush1.msra.mxu0 %v22
  %651 = vmatprep.subr.mxu0 0.0
  %652 = vmatpush1.msra.mxu0 %v23
  %653 = vmatprep.subr.mxu0 0.0
  %654 = vmatpush1.msra.mxu0 %v24
  %655 = vmatprep.subr.mxu0 0.0
  %656 = vmatpush1.msra.mxu0 %v25
  %657 = vmatprep.subr.mxu0 0.0
  %658 = vmatpush1.msra.mxu0 %v26
  %659 = vmatprep.subr.mxu0 0.0
  %660 = vmatpush1.msra.mxu0 %v27
  %661 = vmatprep.subr.mxu0 0.0
  %662 = vmatpush1.msra.mxu0 %v28
  %663 = vmatprep.subr.mxu0 0.0
  %664 = vmatpush1.msra.mxu0 %v29
  %665 = vmatprep.subr.mxu0 0.0
  %666 = vmatpush1.msra.mxu0 %v30
  %667 = vmatprep.subr.mxu0 0.0
  %668 = vmatpush1.msra.mxu0 %v31
  %669 = vmatprep.subr.mxu0 0.0
  %670 = vmatpush1.msra.mxu0 %v32
  %671 = vmatprep.subr.mxu0 0.0
  %672 = vmatpush1.msra.mxu0 %v33
  %673 = vmatprep.subr.mxu0 0.0
  %674 = vmatpush1.msra.mxu0 %v34
  %675 = vmatprep.subr.mxu0 0.0
  %676 = vmatpush1.msra.mxu0 %v35
  %677 = vmatprep.subr.mxu0 0.0
  %678 = vmatpush1.msra.mxu0 %v36
  %679 = vmatprep.subr.mxu0 0.0
  %680 = vmatpush1.msra.mxu0 %v37
  %681 = vmatprep.subr.mxu0 0.0
  %682 = vmatpush1.msra.mxu0 %v38
  %683 = vmatprep.subr.mxu0 0.0
  %684 = vmatpush1.msra.mxu0 %v39
  %685 = vmatprep.subr.mxu0 0.0
  %686 = vmatpush1.msra.mxu0 %v40
  %687 = vmatprep.subr.mxu0 0.0
  %688 = vmatpush1.msra.mxu0 %v41
  %689 = vmatprep.subr.mxu0 0.0
  %690 = vmatpush1.msra.mxu0 %v42
  %691 = vmatprep.subr.mxu0 0.0
  %692 = vmatpush1.msra.mxu0 %v43
  %693 = vmatprep.subr.mxu0 0.0
  %694 = vmatpush1.msra.mxu0 %v44
  %695 = vmatprep.subr.mxu0 0.0
  %696 = vmatpush1.msra.mxu0 %v45
  %697 = vmatprep.mubr.f32.mxu0 %v616
  %698 = vmatmul.mubr.f32.gmra.mrb[0].mxu0 %v615
  %v699 = vpop.f32.mrb[0].mxu0
  %v700 = vadd.f32 %v65, %v699
  %v701 = vpop.f32.mrb[0].mxu0
  %702 = vmatprep.mubr.f32.mxu0 %v619
  %703 = vmatmul.mubr.f32.gmra.mrb[0].mxu0 %v618
  %v704 = vpop.f32.mrb[0].mxu0
  %v705 = vadd.f32 %v65, %v704
  %v706 = vpop.f32.mrb[0].mxu0
  %707 = vmatprep.mubr.f32.mxu0 %v622
  %708 = vmatmul.mubr.f32.gmra.mrb[0].mxu0 %v621
  %v709 = vpop.f32.mrb[0].mxu0
  %v710 = vadd.f32 %v65, %v709
  %v711 = vpop.f32.mrb[0].mxu0
  %712 = vdwg.mxu0
  %713 = vmatprep.subr.mxu0 0.0
  %714 = vmatpush1.msra.mxu0 %v46
  %715 = vmatprep.subr.mxu0 0.0
  %716 = vmatpush1.msra.mxu0 %v47
  %717 = vmatprep.subr.mxu0 0.0
  %718 = vmatpush1.msra.mxu0 %v48
  %719 = vmatprep.subr.mxu0 0.0
  %720 = vmatpush1.msra.mxu0 %v49
  %721 = vmatprep.subr.mxu0 0.0
  %722 = vmatpush1.msra.mxu0 %v79
  %723 = vmatprep.subr.mxu0 0.0
  %724 = vmatpush1.msra.mxu0 0.0
  %725 = vmatprep.subr.mxu0 0.0
  %726 = vmatpush1.msra.mxu0 0.0
  %727 = vmatprep.subr.mxu0 0.0
  %728 = vmatpush1.msra.mxu0 0.0
  %729 = vmatprep.subr.mxu0 0.0
  %730 = vmatpush1.msra.mxu0 0.0
  %731 = vmatprep.subr.mxu0 0.0
  %732 = vmatpush1.msra.mxu0 0.0
  %733 = vmatprep.subr.mxu0 0.0
  %734 = vmatpush1.msra.mxu0 0.0
  %735 = vmatprep.subr.mxu0 0.0
  %736 = vmatpush1.msra.mxu0 0.0
  %737 = vmatprep.subr.mxu0 0.0
  %738 = vmatpush1.msra.mxu0 0.0
  %739 = vmatprep.subr.mxu0 0.0
  %740 = vmatpush1.msra.mxu0 0.0
  %741 = vmatprep.subr.mxu0 0.0
  %742 = vmatpush1.msra.mxu0 0.0
  %743 = vmatprep.subr.mxu0 0.0
  %744 = vmatpush1.msra.mxu0 0.0
  %745 = vmatprep.subr.mxu0 0.0
  %746 = vmatpush1.msra.mxu0 0.0
  %747 = vmatprep.subr.mxu0 0.0
  %748 = vmatpush1.msra.mxu0 0.0
  %749 = vmatprep.subr.mxu0 0.0
  %750 = vmatpush1.msra.mxu0 0.0
  %751 = vmatprep.subr.mxu0 0.0
  %752 = vmatpush1.msra.mxu0 0.0
  %753 = vmatprep.subr.mxu0 0.0
  %754 = vmatpush1.msra.mxu0 0.0
  %755 = vmatprep.subr.mxu0 0.0
  %756 = vmatpush1.msra.mxu0 0.0
  %757 = vmatprep.subr.mxu0 0.0
  %758 = vmatpush1.msra.mxu0 0.0
  %759 = vmatprep.subr.mxu0 0.0
  %760 = vmatpush1.msra.mxu0 0.0
  %761 = vmatprep.subr.mxu0 0.0
  %762 = vmatpush1.msra.mxu0 0.0
  %763 = vmatprep.subr.mxu0 0.0
  %764 = vmatpush1.msra.mxu0 0.0
  %765 = vmatprep.subr.mxu0 0.0
  %766 = vmatpush1.msra.mxu0 0.0
  %767 = vmatprep.subr.mxu0 0.0
  %768 = vmatpush1.msra.mxu0 0.0
  %769 = vmatprep.subr.mxu0 0.0
  %770 = vmatpush1.msra.mxu0 0.0
  %771 = vmatprep.subr.mxu0 0.0
  %772 = vmatpush1.msra.mxu0 0.0
  %773 = vmatprep.subr.mxu0 0.0
  %774 = vmatpush1.msra.mxu0 0.0
  %775 = vmatprep.subr.mxu0 0.0
  %776 = vmatpush1.msra.mxu0 0.0
  %777 = vmatprep.mubr.f32.mxu0 0.0
  %778 = vmatmul.mubr.f32.gmra.mrb[0].mxu0 %v625
  %v779 = vpop.f32.mrb[0].mxu0
  %v780 = vadd.f32 %v700, %v779
  %v781 = vpop.f32.mrb[0].mxu0
  %782 = vmatprep.mubr.f32.mxu0 0.0
  %783 = vmatmul.mubr.f32.gmra.mrb[0].mxu0 %v628
  %v784 = vpop.f32.mrb[0].mxu0
  %v785 = vadd.f32 %v705, %v784
  %v786 = vpop.f32.mrb[0].mxu0
  %787 = vmatprep.mubr.f32.mxu0 0.0
  %788 = vmatmul.mubr.f32.gmra.mrb[0].mxu0 %v631
  %v789 = vpop.f32.mrb[0].mxu0
  %v790 = vadd.f32 %v710, %v789
  %v791 = vpop.f32.mrb[0].mxu0
  %792 = vdwg.mxu0
  %v793 = vmax.f32 %v780, 0.0
  %v794 = vmax.f32 %v785, 0.0
  %v795 = vmax.f32 %v790, 0.0
  %v796 = vmax.f32 %v611, %v793
  %v797 = vmax.f32 %v612, %v794
  %v798 = vmax.f32 %v613, %v795
  %799 = vst [vmem:[%s3] sm:$0xff] %v796
  %800 = vst [vmem:[%s3 + $0x8] sm:$0xff] %v797
  %801 = vst [vmem:[%s3 + $0x10] sm:$0x3] %v798
  // Predicated region
  $region14: #{mynet4_forward.4} parent=0 // pred_check
    _
  $region15: #{mynet4_forward.4} parent=0 // pred_check_branch
    %803 = sbr.rel (0) target = $region17
  $region16: #{mynet4_forward.4} parent=0 // pred_region
    _
  $region17: #{mynet4_forward.4} parent=0 // pred_fallthru
    _
  // Predicated region
  $region18: #{mynet4_forward.4} parent=0 // pred_check
    _
  $region19: #{mynet4_forward.4} parent=0 // pred_check_branch
    %805 = sbr.rel (0) target = $region21
  $region20: #{mynet4_forward.4} parent=0 // pred_region
    _
  $region21: #{mynet4_forward.4} parent=0 // pred_fallthru
    _

// kernel: mynet4_forward.5
$region0: #{mynet4_forward.5}
  #allocation0 [shape = 'u32[]', space=smem, size = 0x4, offset = 0x4, fixed_abs, tag = 'smem constant byte address 0x4 - core index']
  #allocation1 [shape = 'u32[144,128]{1,0:T(1,128)}', space=vmem, size = 0x12000, scoped, tag = 'internal scratch']
  %s0 = inlined_call_operand.vmem [shape: f32[2,144], index: 0, kind: input, shape index: {}]
  %s1 = inlined_call_operand.vmem [shape: f32[144,120], index: 1, kind: input, shape index: {}]
  %s2 = inlined_call_operand.vmem [shape: f32[1,120], index: 2, kind: input, shape index: {}]
  %s3 = inlined_call_operand.vmem [shape: f32[120,84], index: 3, kind: input, shape index: {}]
  %s4 = inlined_call_operand.vmem [shape: f32[1,84], index: 4, kind: input, shape index: {}]
  %s5 = inlined_call_operand.vmem [shape: f32[84,32], index: 5, kind: input, shape index: {}]
  %s6 = inlined_call_operand.vmem [shape: f32[1,32], index: 6, kind: input, shape index: {}]
  %s7 = inlined_call_operand.vmem [shape: f32[32,10], index: 7, kind: input, shape index: {}]
  %s8 = inlined_call_operand.vmem [shape: f32[1,10], index: 8, kind: input, shape index: {}]
  %s9 = inlined_call_operand.hbm [shape: f32[2,10], index: 9, kind: output, shape index: {}]
  %s10 = sld [smem:[#allocation0]]
  $region46: #{mynet4_forward.5} parent=0
    _
  %s12 = ssub.s32 1, %s10
  %s13 = scalar_select 0, %s12, %s10
  $region1: #{mynet4_forward.5} parent=0
    #allocation2 [shape = 'u8[1024]{0}', space=vmem, size = 0x400, scoped, tag = 'output window, operand 0, single buffered']
    #allocation3 [shape = 's32[1]{0}', space=sflag, size = 0x4, scoped, tag = 'scoped memory for mynet4_forward.5']
    %14 = vsyncpa [#allocation3], 0
    // Predicated region
    $region2: #{mynet4_forward.5} parent=1 // pred_check
      _
    $region3: #{mynet4_forward.5} parent=1 // pred_check_branch
      %16 = sbr.rel (0) target = $region5
    $region4: #{mynet4_forward.5} parent=1 // pred_region
      _
    $region5: #{mynet4_forward.5} parent=1 // pred_fallthru
      _
    // Predicated region
    $region6: #{mynet4_forward.5} parent=1 // pred_check
      _
    $region7: #{mynet4_forward.5} parent=1 // pred_check_branch
      %18 = sbr.rel (0) target = $region9
    $region8: #{mynet4_forward.5} parent=1 // pred_region
      _
    $region9: #{mynet4_forward.5} parent=1 // pred_fallthru
      _
    // Predicated region
    $region10: #{mynet4_forward.5} parent=1 // pred_check
      _
    $region11: #{mynet4_forward.5} parent=1 // pred_check_branch
      %20 = sbr.rel (0) target = $region13
    $region12: #{mynet4_forward.5} parent=1 // pred_region
      _
    $region13: #{mynet4_forward.5} parent=1 // pred_fallthru
      _
    // Predicated region
    $region14: #{mynet4_forward.5} parent=1 // pred_check
      _
    $region15: #{mynet4_forward.5} parent=1 // pred_check_branch
      %22 = sbr.rel (0) target = $region17
    $region16: #{mynet4_forward.5} parent=1 // pred_region
      _
    $region17: #{mynet4_forward.5} parent=1 // pred_fallthru
      _
    // Predicated region
    $region18: #{mynet4_forward.5} parent=1 // pred_check
      _
    $region19: #{mynet4_forward.5} parent=1 // pred_check_branch
      %24 = sbr.rel (0) target = $region21
    $region20: #{mynet4_forward.5} parent=1 // pred_region
      _
    $region21: #{mynet4_forward.5} parent=1 // pred_fallthru
      _
    // Predicated region
    $region22: #{mynet4_forward.5} parent=1 // pred_check
      _
    $region23: #{mynet4_forward.5} parent=1 // pred_check_branch
      %26 = sbr.rel (0) target = $region25
    $region24: #{mynet4_forward.5} parent=1 // pred_region
      _
    $region25: #{mynet4_forward.5} parent=1 // pred_fallthru
      _
    // Predicated region
    $region26: #{mynet4_forward.5} parent=1 // pred_check
      _
    $region27: #{mynet4_forward.5} parent=1 // pred_check_branch
      %28 = sbr.rel (0) target = $region29
    $region28: #{mynet4_forward.5} parent=1 // pred_region
      _
    $region29: #{mynet4_forward.5} parent=1 // pred_fallthru
      _
    // Predicated region
    $region30: #{mynet4_forward.5} parent=1 // pred_check
      _
    $region31: #{mynet4_forward.5} parent=1 // pred_check_branch
      %30 = sbr.rel (0) target = $region33
    $region32: #{mynet4_forward.5} parent=1 // pred_region
      _
    $region33: #{mynet4_forward.5} parent=1 // pred_fallthru
      _
    // Predicated region
    $region34: #{mynet4_forward.5} parent=1 // pred_check
      _
    $region35: #{mynet4_forward.5} parent=1 // pred_check_branch
      %32 = sbr.rel (0) target = $region37
    $region36: #{mynet4_forward.5} parent=1 // pred_region
      _
    $region37: #{mynet4_forward.5} parent=1 // pred_fallthru
      _
    %v33 = vld [vmem:[%s0] sm:$0xf]
    %v34 = vld [vmem:[%s1] sm:$0xff]
    %v35 = vld [vmem:[%s1 + $0x8] sm:$0xff]
    %v36 = vld [vmem:[%s1 + $0x10] sm:$0xff]
    %v37 = vld [vmem:[%s1 + $0x18] sm:$0xff]
    %v38 = vld [vmem:[%s1 + $0x20] sm:$0xff]
    %v39 = vld [vmem:[%s1 + $0x28] sm:$0xff]
    %v40 = vld [vmem:[%s1 + $0x30] sm:$0xff]
    %v41 = vld [vmem:[%s1 + $0x38] sm:$0xff]
    %v42 = vld [vmem:[%s1 + $0x40] sm:$0xff]
    %v43 = vld [vmem:[%s1 + $0x48] sm:$0xff]
    %v44 = vld [vmem:[%s1 + $0x50] sm:$0xff]
    %v45 = vld [vmem:[%s1 + $0x58] sm:$0xff]
    %v46 = vld [vmem:[%s1 + $0x60] sm:$0xff]
    %v47 = vld [vmem:[%s1 + $0x68] sm:$0xff]
    %v48 = vld [vmem:[%s1 + $0x70] sm:$0xff]
    %v49 = vld [vmem:[%s1 + $0x78] sm:$0xff]
    %v50 = vld [vmem:[%s1 + $0x80] sm:$0xff]
    %v51 = vld [vmem:[%s1 + $0x88] sm:$0xff]
    %v52 = vld [vmem:[%s2] sm:$0x1]
    %v54 = vlaneseq
    %v55 = vshrl.u32 %v54, 7
    %v56 = vsub.s32 0, %v55
    %v57 = vrot.slane %v52, %v56
    %v61 = vunpack.c.l.s4 1983009808
    %v62 = vunpack.c.0.s8 %v61
    %v63 = vlaneseq
    %v64 = vshrl.u32 %v63, 7
    %v65 = vsub.s32 %v62, %v64
    %v66 = vrot.slane %v33, %v65
    %v67 = vcombine.high %v66, %v66
    %vm69 = vcmask 130048
    %v70 = vsel %vm69, %v67, 0
    %72 = vmatprep.subr.mxu0 0.0
    %73 = vmatpush1.msra.mxu0 %v34
    %74 = vmatprep.subr.mxu0 0.0
    %75 = vmatpush1.msra.mxu0 %v35
    %76 = vmatprep.subr.mxu0 0.0
    %77 = vmatpush1.msra.mxu0 %v36
    %78 = vmatprep.subr.mxu0 0.0
    %79 = vmatpush1.msra.mxu0 %v37
    %80 = vmatprep.subr.mxu0 0.0
    %81 = vmatpush1.msra.mxu0 %v38
    %82 = vmatprep.subr.mxu0 0.0
    %83 = vmatpush1.msra.mxu0 %v39
    %84 = vmatprep.subr.mxu0 0.0
    %85 = vmatpush1.msra.mxu0 %v40
    %86 = vmatprep.subr.mxu0 0.0
    %87 = vmatpush1.msra.mxu0 %v41
    %88 = vmatprep.subr.mxu0 0.0
    %89 = vmatpush1.msra.mxu0 %v42
    %90 = vmatprep.subr.mxu0 0.0
    %91 = vmatpush1.msra.mxu0 %v43
    %92 = vmatprep.subr.mxu0 0.0
    %93 = vmatpush1.msra.mxu0 %v44
    %94 = vmatprep.subr.mxu0 0.0
    %95 = vmatpush1.msra.mxu0 %v45
    %96 = vmatprep.subr.mxu0 0.0
    %97 = vmatpush1.msra.mxu0 %v46
    %98 = vmatprep.subr.mxu0 0.0
    %99 = vmatpush1.msra.mxu0 %v47
    %100 = vmatprep.subr.mxu0 0.0
    %101 = vmatpush1.msra.mxu0 %v48
    %102 = vmatprep.subr.mxu0 0.0
    %103 = vmatpush1.msra.mxu0 %v49
    %104 = vmatprep.subr.mxu0 0.0
    %105 = vmatpush1.msra.mxu0 %v50
    %106 = vmatprep.subr.mxu0 0.0
    %107 = vmatpush1.msra.mxu0 %v51
    %108 = vmatprep.subr.mxu0 0.0
    %109 = vmatpush1.msra.mxu0 0.0
    %110 = vmatprep.subr.mxu0 0.0
    %111 = vmatpush1.msra.mxu0 0.0
    %112 = vmatprep.subr.mxu0 0.0
    %113 = vmatpush1.msra.mxu0 0.0
    %114 = vmatprep.subr.mxu0 0.0
    %115 = vmatpush1.msra.mxu0 0.0
    %116 = vmatprep.subr.mxu0 0.0
    %117 = vmatpush1.msra.mxu0 0.0
    %118 = vmatprep.subr.mxu0 0.0
    %119 = vmatpush1.msra.mxu0 0.0
    %120 = vmatprep.subr.mxu0 0.0
    %121 = vmatpush1.msra.mxu0 0.0
    %122 = vmatprep.subr.mxu0 0.0
    %123 = vmatpush1.msra.mxu0 0.0
    %124 = vmatprep.subr.mxu0 0.0
    %125 = vmatpush1.msra.mxu0 0.0
    %126 = vmatprep.subr.mxu0 0.0
    %127 = vmatpush1.msra.mxu0 0.0
    %128 = vmatprep.subr.mxu0 0.0
    %129 = vmatpush1.msra.mxu0 0.0
    %130 = vmatprep.subr.mxu0 0.0
    %131 = vmatpush1.msra.mxu0 0.0
    %132 = vmatprep.subr.mxu0 0.0
    %133 = vmatpush1.msra.mxu0 0.0
    %134 = vmatprep.subr.mxu0 0.0
    %135 = vmatpush1.msra.mxu0 0.0
    %136 = vmatprep.mubr.f32.mxu0 %v70
    %137 = vmatmul.mubr.f32.gmra.mrb[0].mxu0 %v66
    %v138 = vpop.f32.mrb[0].mxu0
    %v139 = vadd.f32 %v57, %v138
    %v140 = vpop.f32.mrb[0].mxu0
    %141 = vdwg.mxu0
    %v142 = vmax.f32 %v139, 0.0
    %v143 = vld [vmem:[%s3] sm:$0xff]
    %v144 = vld [vmem:[%s3 + $0x8] sm:$0xff]
    %v145 = vld [vmem:[%s3 + $0x10] sm:$0xff]
    %v146 = vld [vmem:[%s3 + $0x18] sm:$0xff]
    %v147 = vld [vmem:[%s3 + $0x20] sm:$0xff]
    %v148 = vld [vmem:[%s3 + $0x28] sm:$0xff]
    %v149 = vld [vmem:[%s3 + $0x30] sm:$0xff]
    %v150 = vld [vmem:[%s3 + $0x38] sm:$0xff]
    %v151 = vld [vmem:[%s3 + $0x40] sm:$0xff]
    %v152 = vld [vmem:[%s3 + $0x48] sm:$0xff]
    %v153 = vld [vmem:[%s3 + $0x50] sm:$0xff]
    %v154 = vld [vmem:[%s3 + $0x58] sm:$0xff]
    %v155 = vld [vmem:[%s3 + $0x60] sm:$0xff]
    %v156 = vld [vmem:[%s3 + $0x68] sm:$0xff]
    %v157 = vld [vmem:[%s3 + $0x70] sm:$0xff]
    %v158 = vld [vmem:[%s4] sm:$0x1]
    %v160 = vlaneseq
    %v161 = vshrl.u32 %v160, 7
    %v162 = vsub.s32 0, %v161
    %v163 = vrot.slane %v158, %v162
    %vm165 = vcmask 982016
    %v167 = vsel %vm165, %v142, 0
    %169 = vmatprep.subr.mxu0 0.0
    %170 = vmatpush1.msra.mxu0 %v143
    %171 = vmatprep.subr.mxu0 0.0
    %172 = vmatpush1.msra.mxu0 %v144
    %173 = vmatprep.subr.mxu0 0.0
    %174 = vmatpush1.msra.mxu0 %v145
    %175 = vmatprep.subr.mxu0 0.0
    %176 = vmatpush1.msra.mxu0 %v146
    %177 = vmatprep.subr.mxu0 0.0
    %178 = vmatpush1.msra.mxu0 %v147
    %179 = vmatprep.subr.mxu0 0.0
    %180 = vmatpush1.msra.mxu0 %v148
    %181 = vmatprep.subr.mxu0 0.0
    %182 = vmatpush1.msra.mxu0 %v149
    %183 = vmatprep.subr.mxu0 0.0
    %184 = vmatpush1.msra.mxu0 %v150
    %185 = vmatprep.subr.mxu0 0.0
    %186 = vmatpush1.msra.mxu0 %v151
    %187 = vmatprep.subr.mxu0 0.0
    %188 = vmatpush1.msra.mxu0 %v152
    %189 = vmatprep.subr.mxu0 0.0
    %190 = vmatpush1.msra.mxu0 %v153
    %191 = vmatprep.subr.mxu0 0.0
    %192 = vmatpush1.msra.mxu0 %v154
    %193 = vmatprep.subr.mxu0 0.0
    %194 = vmatpush1.msra.mxu0 %v155
    %195 = vmatprep.subr.mxu0 0.0
    %196 = vmatpush1.msra.mxu0 %v156
    %197 = vmatprep.subr.mxu0 0.0
    %198 = vmatpush1.msra.mxu0 %v157
    %199 = vmatprep.subr.mxu0 0.0
    %200 = vmatpush1.msra.mxu0 0.0
    %201 = vmatprep.subr.mxu0 0.0
    %202 = vmatpush1.msra.mxu0 0.0
    %203 = vmatprep.subr.mxu0 0.0
    %204 = vmatpush1.msra.mxu0 0.0
    %205 = vmatprep.subr.mxu0 0.0
    %206 = vmatpush1.msra.mxu0 0.0
    %207 = vmatprep.subr.mxu0 0.0
    %208 = vmatpush1.msra.mxu0 0.0
    %209 = vmatprep.subr.mxu0 0.0
    %210 = vmatpush1.msra.mxu0 0.0
    %211 = vmatprep.subr.mxu0 0.0
    %212 = vmatpush1.msra.mxu0 0.0
    %213 = vmatprep.subr.mxu0 0.0
    %214 = vmatpush1.msra.mxu0 0.0
    %215 = vmatprep.subr.mxu0 0.0
    %216 = vmatpush1.msra.mxu0 0.0
    %217 = vmatprep.subr.mxu0 0.0
    %218 = vmatpush1.msra.mxu0 0.0
    %219 = vmatprep.subr.mxu0 0.0
    %220 = vmatpush1.msra.mxu0 0.0
    %221 = vmatprep.subr.mxu0 0.0
    %222 = vmatpush1.msra.mxu0 0.0
    %223 = vmatprep.subr.mxu0 0.0
    %224 = vmatpush1.msra.mxu0 0.0
    %225 = vmatprep.subr.mxu0 0.0
    %226 = vmatpush1.msra.mxu0 0.0
    %227 = vmatprep.subr.mxu0 0.0
    %228 = vmatpush1.msra.mxu0 0.0
    %229 = vmatprep.subr.mxu0 0.0
    %230 = vmatpush1.msra.mxu0 0.0
    %231 = vmatprep.subr.mxu0 0.0
    %232 = vmatpush1.msra.mxu0 0.0
    %233 = vmatprep.mubr.f32.mxu0 0.0
    %234 = vmatmul.mubr.f32.gmra.mrb[0].mxu0 %v167
    %v235 = vpop.f32.mrb[0].mxu0
    %v236 = vadd.f32 %v163, %v235
    %v237 = vpop.f32.mrb[0].mxu0
    %238 = vdwg.mxu0
    %v239 = vmax.f32 %v236, 0.0
    %v240 = vld [vmem:[%s5] sm:$0xff]
    %v241 = vld [vmem:[%s5 + $0x8] sm:$0xff]
    %v242 = vld [vmem:[%s5 + $0x10] sm:$0xff]
    %v243 = vld [vmem:[%s5 + $0x18] sm:$0xff]
    %v244 = vld [vmem:[%s5 + $0x20] sm:$0xff]
    %v245 = vld [vmem:[%s5 + $0x28] sm:$0xff]
    %v246 = vld [vmem:[%s5 + $0x30] sm:$0xff]
    %v247 = vld [vmem:[%s5 + $0x38] sm:$0xff]
    %v248 = vld [vmem:[%s5 + $0x40] sm:$0xff]
    %v249 = vld [vmem:[%s5 + $0x48] sm:$0xff]
    %v250 = vld [vmem:[%s5 + $0x50] sm:$0xf]
    %v251 = vld [vmem:[%s6] sm:$0x1]
    %v253 = vlaneseq
    %v254 = vshrl.u32 %v253, 7
    %v255 = vsub.s32 0, %v254
    %v256 = vrot.slane %v251, %v255
    %vm258 = vcmask 687104
    %v260 = vsel %vm258, %v239, 0
    %vm262 = vcmask 1043456
    %v264 = vsel %vm262, %v250, 0
    %266 = vmatprep.subr.mxu0 0.0
    %267 = vmatpush1.msra.mxu0 %v240
    %268 = vmatprep.subr.mxu0 0.0
    %269 = vmatpush1.msra.mxu0 %v241
    %270 = vmatprep.subr.mxu0 0.0
    %271 = vmatpush1.msra.mxu0 %v242
    %272 = vmatprep.subr.mxu0 0.0
    %273 = vmatpush1.msra.mxu0 %v243
    %274 = vmatprep.subr.mxu0 0.0
    %275 = vmatpush1.msra.mxu0 %v244
    %276 = vmatprep.subr.mxu0 0.0
    %277 = vmatpush1.msra.mxu0 %v245
    %278 = vmatprep.subr.mxu0 0.0
    %279 = vmatpush1.msra.mxu0 %v246
    %280 = vmatprep.subr.mxu0 0.0
    %281 = vmatpush1.msra.mxu0 %v247
    %282 = vmatprep.subr.mxu0 0.0
    %283 = vmatpush1.msra.mxu0 %v248
    %284 = vmatprep.subr.mxu0 0.0
    %285 = vmatpush1.msra.mxu0 %v249
    %286 = vmatprep.subr.mxu0 0.0
    %287 = vmatpush1.msra.mxu0 %v264
    %288 = vmatprep.subr.mxu0 0.0
    %289 = vmatpush1.msra.mxu0 0.0
    %290 = vmatprep.subr.mxu0 0.0
    %291 = vmatpush1.msra.mxu0 0.0
    %292 = vmatprep.subr.mxu0 0.0
    %293 = vmatpush1.msra.mxu0 0.0
    %294 = vmatprep.subr.mxu0 0.0
    %295 = vmatpush1.msra.mxu0 0.0
    %296 = vmatprep.subr.mxu0 0.0
    %297 = vmatpush1.msra.mxu0 0.0
    %298 = vmatprep.subr.mxu0 0.0
    %299 = vmatpush1.msra.mxu0 0.0
    %300 = vmatprep.subr.mxu0 0.0
    %301 = vmatpush1.msra.mxu0 0.0
    %302 = vmatprep.subr.mxu0 0.0
    %303 = vmatpush1.msra.mxu0 0.0
    %304 = vmatprep.subr.mxu0 0.0
    %305 = vmatpush1.msra.mxu0 0.0
    %306 = vmatprep.subr.mxu0 0.0
    %307 = vmatpush1.msra.mxu0 0.0
    %308 = vmatprep.subr.mxu0 0.0
    %309 = vmatpush1.msra.mxu0 0.0
    %310 = vmatprep.subr.mxu0 0.0
    %311 = vmatpush1.msra.mxu0 0.0
    %312 = vmatprep.subr.mxu0 0.0
    %313 = vmatpush1.msra.mxu0 0.0
    %314 = vmatprep.subr.mxu0 0.0
    %315 = vmatpush1.msra.mxu0 0.0
    %316 = vmatprep.subr.mxu0 0.0
    %317 = vmatpush1.msra.mxu0 0.0
    %318 = vmatprep.subr.mxu0 0.0
    %319 = vmatpush1.msra.mxu0 0.0
    %320 = vmatprep.subr.mxu0 0.0
    %321 = vmatpush1.msra.mxu0 0.0
    %322 = vmatprep.subr.mxu0 0.0
    %323 = vmatpush1.msra.mxu0 0.0
    %324 = vmatprep.subr.mxu0 0.0
    %325 = vmatpush1.msra.mxu0 0.0
    %326 = vmatprep.subr.mxu0 0.0
    %327 = vmatpush1.msra.mxu0 0.0
    %328 = vmatprep.subr.mxu0 0.0
    %329 = vmatpush1.msra.mxu0 0.0
    %330 = vmatprep.mubr.f32.mxu0 0.0
    %331 = vmatmul.mubr.f32.gmra.mrb[0].mxu0 %v260
    %v332 = vpop.f32.mrb[0].mxu0
    %v333 = vadd.f32 %v256, %v332
    %v334 = vpop.f32.mrb[0].mxu0
    %335 = vdwg.mxu0
    %v336 = vmax.f32 %v333, 0.0
    %v337 = vld [vmem:[%s7] sm:$0xff]
    %v338 = vld [vmem:[%s7 + $0x8] sm:$0xff]
    %v339 = vld [vmem:[%s7 + $0x10] sm:$0xff]
    %v340 = vld [vmem:[%s7 + $0x18] sm:$0xff]
    %v341 = vld [vmem:[%s8] sm:$0x1]
    %v343 = vlaneseq
    %v344 = vshrl.u32 %v343, 7
    %v345 = vsub.s32 0, %v344
    %v346 = vrot.slane %v341, %v345
    %vm348 = vcmask 261120
    %v350 = vsel %vm348, %v336, 0
    %352 = vmatprep.subr.mxu0 0.0
    %353 = vmatpush1.msra.mxu0 %v337
    %354 = vmatprep.subr.mxu0 0.0
    %355 = vmatpush1.msra.mxu0 %v338
    %356 = vmatprep.subr.mxu0 0.0
    %357 = vmatpush1.msra.mxu0 %v339
    %358 = vmatprep.subr.mxu0 0.0
    %359 = vmatpush1.msra.mxu0 %v340
    %360 = vmatprep.subr.mxu0 0.0
    %361 = vmatpush1.msra.mxu0 0.0
    %362 = vmatprep.subr.mxu0 0.0
    %363 = vmatpush1.msra.mxu0 0.0
    %364 = vmatprep.subr.mxu0 0.0
    %365 = vmatpush1.msra.mxu0 0.0
    %366 = vmatprep.subr.mxu0 0.0
    %367 = vmatpush1.msra.mxu0 0.0
    %368 = vmatprep.subr.mxu0 0.0
    %369 = vmatpush1.msra.mxu0 0.0
    %370 = vmatprep.subr.mxu0 0.0
    %371 = vmatpush1.msra.mxu0 0.0
    %372 = vmatprep.subr.mxu0 0.0
    %373 = vmatpush1.msra.mxu0 0.0
    %374 = vmatprep.subr.mxu0 0.0
    %375 = vmatpush1.msra.mxu0 0.0
    %376 = vmatprep.subr.mxu0 0.0
    %377 = vmatpush1.msra.mxu0 0.0
    %378 = vmatprep.subr.mxu0 0.0
    %379 = vmatpush1.msra.mxu0 0.0
    %380 = vmatprep.subr.mxu0 0.0
    %381 = vmatpush1.msra.mxu0 0.0
    %382 = vmatprep.subr.mxu0 0.0
    %383 = vmatpush1.msra.mxu0 0.0
    %384 = vmatprep.subr.mxu0 0.0
    %385 = vmatpush1.msra.mxu0 0.0
    %386 = vmatprep.subr.mxu0 0.0
    %387 = vmatpush1.msra.mxu0 0.0
    %388 = vmatprep.subr.mxu0 0.0
    %389 = vmatpush1.msra.mxu0 0.0
    %390 = vmatprep.subr.mxu0 0.0
    %391 = vmatpush1.msra.mxu0 0.0
    %392 = vmatprep.subr.mxu0 0.0
    %393 = vmatpush1.msra.mxu0 0.0
    %394 = vmatprep.subr.mxu0 0.0
    %395 = vmatpush1.msra.mxu0 0.0
    %396 = vmatprep.subr.mxu0 0.0
    %397 = vmatpush1.msra.mxu0 0.0
    %398 = vmatprep.subr.mxu0 0.0
    %399 = vmatpush1.msra.mxu0 0.0
    %400 = vmatprep.subr.mxu0 0.0
    %401 = vmatpush1.msra.mxu0 0.0
    %402 = vmatprep.subr.mxu0 0.0
    %403 = vmatpush1.msra.mxu0 0.0
    %404 = vmatprep.subr.mxu0 0.0
    %405 = vmatpush1.msra.mxu0 0.0
    %406 = vmatprep.subr.mxu0 0.0
    %407 = vmatpush1.msra.mxu0 0.0
    %408 = vmatprep.subr.mxu0 0.0
    %409 = vmatpush1.msra.mxu0 0.0
    %410 = vmatprep.subr.mxu0 0.0
    %411 = vmatpush1.msra.mxu0 0.0
    %412 = vmatprep.subr.mxu0 0.0
    %413 = vmatpush1.msra.mxu0 0.0
    %414 = vmatprep.subr.mxu0 0.0
    %415 = vmatpush1.msra.mxu0 0.0
    %416 = vmatprep.mubr.f32.mxu0 0.0
    %417 = vmatmul.mubr.f32.gmra.mrb[0].mxu0 %v350
    %v418 = vpop.f32.mrb[0].mxu0
    %v419 = vadd.f32 %v346, %v418
    %v420 = vpop.f32.mrb[0].mxu0
    %421 = vdwg.mxu0
    %vm422 = vcmask 74752
    %423 = vst.msk [vmem:[#allocation2] sm:$0x3] %vm422, %v419
    // Predicated region
    $region38: #{mynet4_forward.5} parent=1 // pred_check
      _
    $region39: #{mynet4_forward.5} parent=1 // pred_check_branch
      %425 = sbr.rel (0) target = $region41
    $region40: #{mynet4_forward.5} parent=1 // pred_region
      %s427 = ssub.s32 32, 32
      %428 = vsyncadd [#allocation3], %s427
      %s430 = sshll.u32 [#allocation2], 4
      %s431 = int_to_ptr.vmem [resolvable:$true] %s430
      %433 = dma.vmem_to_hbm [thread:$0]  %s431, 32, %s9, [#allocation3]
    $region41: #{mynet4_forward.5} parent=1 // pred_fallthru
      _
    // Predicated region
    $region42: #{mynet4_forward.5} parent=1 // pred_check
      _
    $region43: #{mynet4_forward.5} parent=1 // pred_check_branch
      %435 = sbr.rel (0) target = $region45
    $region44: #{mynet4_forward.5} parent=1 // pred_region
      %436 = dma.done [#allocation3], 32
    $region45: #{mynet4_forward.5} parent=1 // pred_fallthru
      _
    %437 = vsyncpa [#allocation3], 1

</llo_original>
